<compile_context>
chip_gen: v5e
topology: v5e:2x2
jax: 0.10.0
libtpu: 0.0.40
codegen_flags: <defaults>
</compile_context>

<pallas_src>
import functools

import jax
import jax.numpy as jnp
from jax.experimental import pallas as pl
from jax.experimental.pallas import tpu as pltpu

NEG_SLOPE = 0.01  # PyTorch leaky_relu default negative_slope


def _pixel_pred_kernel(*refs, nlayers, mm_dtype):
    """refs = (x_ref, w0, b0, w1, b1, ..., w_{L-1}, b_{L-1}, out_ref).

    Weights are (in, out) (PyTorch weight transposed) in mm_dtype; biases are
    (1, out) in f32.  All epilogue math is f32; only MXU operands are mm_dtype.
    """
    x_ref = refs[0]
    out_ref = refs[-1]
    params = refs[1:-1]

    # Single in-register cast of the input tile to the MXU operand dtype
    # (no-op if the producer already emits bf16; no wrapper-side cast pass).
    h = x_ref[...].astype(mm_dtype)

    # Hidden layers: MXU dot with f32 accumulation + bias + leaky_relu(0.01) in f32.
    for kl in range(nlayers - 1):
        w = params[2 * kl][...]                               # (in, out), mm_dtype
        b = params[2 * kl + 1][...]                           # (1, out), f32
        z = jnp.dot(h, w, preferred_element_type=jnp.float32) + b
        h = jnp.where(z >= 0.0, z, NEG_SLOPE * z).astype(mm_dtype)

    # Last layer: exactly ONE dot (no per-group matmul chain), bias + clamp in f32.
    w_last = params[2 * (nlayers - 1)][...]                   # (in, co), mm_dtype
    b_last = params[2 * (nlayers - 1) + 1][...]               # (1, co), f32
    z = jnp.dot(h, w_last, preferred_element_type=jnp.float32) + b_last
    out_ref[...] = jnp.clip(z, -1.0, 1.0).astype(out_ref.dtype)


def _tile_rows(B, tb_req):
    """Pick (tb, padded_B) such that:
       * tb is a multiple of 16 (valid sublane tiling for f32 and bf16 blocks),
       * the grid is even and >= 2 whenever B allows it (keeps both v7x
         TensorCores busy through the single 'parallel' axis),
       * each step moves a large tile (default 2048 rows) so the ~0.35 us fixed
         per-step pipeline cost is amortized."""
    tb_req = max(16, (tb_req // 16) * 16)
    if B <= 16:
        ntiles = 1
    else:
        ntiles = max(2, -(-B // tb_req))
        if ntiles % 2:
            ntiles += 1
    tb = (-(-B // ntiles) + 15) // 16 * 16
    return tb, ntiles * tb


@functools.partial(jax.jit, static_argnames=("tb", "bf16_matmul"))
def pixel_pred(x, weights, biases, *, tb=2048, bf16_matmul=True):
    """Run the PixelPred MLP on x of shape (B, ci).

    weights[kl]: (in_kl, out_kl) (PyTorch weight transposed); biases[kl]: (1, out_kl).
    x may be float32 or bfloat16 (bf16 input halves the dominant HBM stream and
    is numerically identical to the f32-input bf16-matmul path).
    """
    nlayers = len(weights)
    B, ci = x.shape
    co = weights[-1].shape[1]

    mm_dtype = jnp.bfloat16 if bf16_matmul else jnp.float32

    # Tile/grid shaping + padding guard for arbitrary B (only pads for awkward B).
    tb_eff, Bp = _tile_rows(B, tb)
    if Bp != B:
        x = jnp.pad(x, ((0, Bp - B), (0, 0)))
    grid = (Bp // tb_eff,)

    # Pre-cast weights for the MXU (tiny, one-off); biases stay f32 for the VPU.
    ws = [w.astype(mm_dtype) for w in weights]
    bs = [b.astype(jnp.float32) for b in biases]

    # x tiles stream; weights/biases have constant index_maps so Pallas DMAs
    # them exactly once (no re-fetch across grid steps).  They total ~13 KB, so
    # single- vs double-buffering (pl.Buffered(1)) would save nothing; omitted.
    in_specs = [pl.BlockSpec((tb_eff, ci), lambda i: (i, 0))]
    for w, b in zip(ws, bs):
        in_specs.append(pl.BlockSpec(tuple(w.shape), lambda i: (0, 0)))
        in_specs.append(pl.BlockSpec(tuple(b.shape), lambda i: (0, 0)))

    # Plain (tb, co) output: co spans the full output width, so the HBM
    # writeback is one contiguous DMA per tile; no packed slab, no wrapper-side
    # unpack transpose (no extra HBM pass).
    out_spec = pl.BlockSpec((tb_eff, co), lambda i: (i, 0))
    out_shape = jax.ShapeDtypeStruct((Bp, co), x.dtype)

    kernel = functools.partial(_pixel_pred_kernel, nlayers=nlayers, mm_dtype=mm_dtype)

    args = [x]
    for w, b in zip(ws, bs):
        args += [w, b]

    out = pl.pallas_call(
        kernel,
        out_shape=out_shape,
        grid_spec=pltpu.PrefetchScalarGridSpec(
            num_scalar_prefetch=0,
            grid=grid,
            in_specs=in_specs,
            out_specs=out_spec,
        ),
        compiler_params=pltpu.CompilerParams(
            dimension_semantics=("parallel",)),
    )(*args)

    if Bp != B:
        out = out[:B]
    return out


def _init_params(key, nlayers, ci, nch, co):
    """Deterministic init mimicking nn.Linear default (uniform +/- 1/sqrt(fan_in))."""
    dims = []
    nin = ci
    for _ in range(nlayers - 1):
        dims.append((nin, nch))
        nin = nch
    dims.append((nin, co))

    weights, biases = [], []
    for (fan_in, fan_out) in dims:
        key, kw, kb = jax.random.split(key, 3)
        bound = 1.0 / (fan_in ** 0.5)
        w = jax.random.uniform(kw, (fan_in, fan_out), jnp.float32, -bound, bound)
        b = jax.random.uniform(kb, (1, fan_out), jnp.float32, -bound, bound)
        weights.append(w)
        biases.append(b)
    return weights, biases


def _reference(x, weights, biases, *, bf16_matmul=True):
    """Pure-JAX reference mirroring the kernel math (optionally bf16 dot operands)."""
    mm = jnp.bfloat16 if bf16_matmul else jnp.float32
    h = x.astype(mm)
    n = len(weights)
    for kl in range(n):
        w = weights[kl].astype(mm)
        b = biases[kl].astype(jnp.float32)
        z = jnp.dot(h, w, preferred_element_type=jnp.float32) + b
        if kl < n - 1:
            h = jnp.where(z >= 0.0, z, NEG_SLOPE * z).astype(mm)
        else:
            h = jnp.clip(z, -1.0, 1.0)
    return h.astype(x.dtype)


if __name__ == "__main__":
    # Shapes consistent with the module: PixelPred(nlayers=3, ci=32, nch=64, co=8).
    nlayers, ci, nch, co = 3, 32, 64, 8
    # 16 images of 16x16 pixels flattened per-pixel -> B=4096 -> tb=2048, grid=(2,)
    # (even and >= 2 so both v7x TensorCores each get one tile).
    B = 16 * 16 * 16

    key = jax.random.PRNGKey(0)
    key, kx = jax.random.split(key)
    x = jax.random.normal(kx, (B, ci), dtype=jnp.float32)
    weights, biases = _init_params(key, nlayers, ci, nch, co)

    # f32-input path.
    out = jax.block_until_ready(pixel_pred(x, weights, biases))
    assert out.shape == (B, co)
    ref_same = _reference(x, weights, biases, bf16_matmul=True)
    assert jnp.allclose(out, ref_same, atol=1e-3, rtol=1e-3), \
        "mismatch vs bf16-matmul reference"
    ref_f32 = _reference(x, weights, biases, bf16_matmul=False)
    assert jnp.allclose(out, ref_f32, atol=6e-2), "mismatch vs f32 reference"

    # bf16-input path (stands in for a producer that emits bf16; no wrapper cast).
    x_bf16 = x.astype(jnp.bfloat16)
    out_bf16 = jax.block_until_ready(pixel_pred(x_bf16, weights, biases))
    assert out_bf16.dtype == jnp.bfloat16
    ref_bf16 = _reference(x_bf16, weights, biases, bf16_matmul=True)
    assert jnp.allclose(out_bf16.astype(jnp.float32), ref_bf16.astype(jnp.float32),
                        atol=2e-2), "mismatch on bf16-input path"

    # Odd batch size exercises the padding guard (tb rounds to 512, grid=(2,)).
    B2 = 1000
    key, kx2 = jax.random.split(key)
    x2 = jax.random.normal(kx2, (B2, ci), dtype=jnp.float32)
    out2 = jax.block_until_ready(pixel_pred(x2, weights, biases))
    assert out2.shape == (B2, co)
    ref2 = _reference(x2, weights, biases, bf16_matmul=True)
    assert jnp.allclose(out2, ref2, atol=1e-3, rtol=1e-3), "mismatch on padded-B path"

    print("KERNEL_OK")
</pallas_src>

<mosaic_0001>
module attributes {stable_mosaic.version = 11 : i64} {
  func.func @_pixel_pred_kernel(%arg0: i32, %arg1: memref<2048x32xf32, #tpu.memory_space<vmem>>, %arg2: memref<32x64xbf16, #tpu.memory_space<vmem>>, %arg3: memref<1x64xf32, #tpu.memory_space<vmem>>, %arg4: memref<64x64xbf16, #tpu.memory_space<vmem>>, %arg5: memref<1x64xf32, #tpu.memory_space<vmem>>, %arg6: memref<64x8xbf16, #tpu.memory_space<vmem>>, %arg7: memref<1x8xf32, #tpu.memory_space<vmem>>, %arg8: memref<2048x8xf32, #tpu.memory_space<vmem>>) attributes {dimension_semantics = [#tpu.dimension_semantics<parallel>], iteration_bounds = array<i64: 2>, scalar_prefetch = 0 : i64, scratch_operands = 0 : i64, tpu.core_type = #tpu.core_type<tc>, window_params = [{transform_indices = @transform_0, window_bounds = array<i64: 2048, 32>}, {pipeline_mode = #tpu.pipeline_mode<synchronous>, transform_indices = @transform_1, window_bounds = array<i64: 32, 64>}, {pipeline_mode = #tpu.pipeline_mode<synchronous>, transform_indices = @transform_2, window_bounds = array<i64: 1, 64>}, {pipeline_mode = #tpu.pipeline_mode<synchronous>, transform_indices = @transform_3, window_bounds = array<i64: 64, 64>}, {pipeline_mode = #tpu.pipeline_mode<synchronous>, transform_indices = @transform_4, window_bounds = array<i64: 1, 64>}, {pipeline_mode = #tpu.pipeline_mode<synchronous>, transform_indices = @transform_5, window_bounds = array<i64: 64, 8>}, {pipeline_mode = #tpu.pipeline_mode<synchronous>, transform_indices = @transform_6, window_bounds = array<i64: 1, 8>}, {transform_indices = @transform_7, window_bounds = array<i64: 2048, 8>}]} {
    %c0 = arith.constant 0 : index
    %c0_0 = arith.constant 0 : index
    %0 = vector.load %arg1[%c0, %c0_0] : memref<2048x32xf32, #tpu.memory_space<vmem>>, vector<2048x32xf32>
    %1 = arith.truncf %0 : vector<2048x32xf32> to vector<2048x32xbf16>
    %c0_1 = arith.constant 0 : index
    %c0_2 = arith.constant 0 : index
    %2 = vector.load %arg2[%c0_1, %c0_2] : memref<32x64xbf16, #tpu.memory_space<vmem>>, vector<32x64xbf16>
    %c0_3 = arith.constant 0 : index
    %c0_4 = arith.constant 0 : index
    %3 = vector.load %arg3[%c0_3, %c0_4] : memref<1x64xf32, #tpu.memory_space<vmem>>, vector<1x64xf32>
    %cst = arith.constant dense<0.000000e+00> : vector<2048x64xf32>
    %4 = tpu.matmul %1, %2, %cst {dimension_numbers = #tpu.dot_dimension_numbers<[1], [0], [0], [1], [0, 0, 1, 1], [], []>} : vector<2048x32xbf16>, vector<32x64xbf16>, vector<2048x64xf32> -> vector<2048x64xf32>
    %5 = vector.broadcast %3 : vector<1x64xf32> to vector<2048x64xf32>
    %6 = arith.addf %4, %5 : vector<2048x64xf32>
    %cst_5 = arith.constant 0.000000e+00 : f32
    %7 = vector.broadcast %cst_5 : f32 to vector<2048x64xf32>
    %8 = arith.cmpf oge, %6, %7 : vector<2048x64xf32>
    %cst_6 = arith.constant 0.00999999977 : f32
    %9 = vector.broadcast %cst_6 : f32 to vector<2048x64xf32>
    %10 = arith.mulf %9, %6 : vector<2048x64xf32>
    %11 = arith.select %8, %6, %10 : vector<2048x64xi1>, vector<2048x64xf32>
    %12 = arith.truncf %11 : vector<2048x64xf32> to vector<2048x64xbf16>
    %c0_7 = arith.constant 0 : index
    %c0_8 = arith.constant 0 : index
    %13 = vector.load %arg4[%c0_7, %c0_8] : memref<64x64xbf16, #tpu.memory_space<vmem>>, vector<64x64xbf16>
    %c0_9 = arith.constant 0 : index
    %c0_10 = arith.constant 0 : index
    %14 = vector.load %arg5[%c0_9, %c0_10] : memref<1x64xf32, #tpu.memory_space<vmem>>, vector<1x64xf32>
    %cst_11 = arith.constant dense<0.000000e+00> : vector<2048x64xf32>
    %15 = tpu.matmul %12, %13, %cst_11 {dimension_numbers = #tpu.dot_dimension_numbers<[1], [0], [0], [1], [0, 0, 1, 1], [], []>} : vector<2048x64xbf16>, vector<64x64xbf16>, vector<2048x64xf32> -> vector<2048x64xf32>
    %16 = vector.broadcast %14 : vector<1x64xf32> to vector<2048x64xf32>
    %17 = arith.addf %15, %16 : vector<2048x64xf32>
    %cst_12 = arith.constant 0.000000e+00 : f32
    %18 = vector.broadcast %cst_12 : f32 to vector<2048x64xf32>
    %19 = arith.cmpf oge, %17, %18 : vector<2048x64xf32>
    %cst_13 = arith.constant 0.00999999977 : f32
    %20 = vector.broadcast %cst_13 : f32 to vector<2048x64xf32>
    %21 = arith.mulf %20, %17 : vector<2048x64xf32>
    %22 = arith.select %19, %17, %21 : vector<2048x64xi1>, vector<2048x64xf32>
    %23 = arith.truncf %22 : vector<2048x64xf32> to vector<2048x64xbf16>
    %c0_14 = arith.constant 0 : index
    %c0_15 = arith.constant 0 : index
    %24 = vector.load %arg6[%c0_14, %c0_15] : memref<64x8xbf16, #tpu.memory_space<vmem>>, vector<64x8xbf16>
    %c0_16 = arith.constant 0 : index
    %c0_17 = arith.constant 0 : index
    %25 = vector.load %arg7[%c0_16, %c0_17] : memref<1x8xf32, #tpu.memory_space<vmem>>, vector<1x8xf32>
    %cst_18 = arith.constant dense<0.000000e+00> : vector<2048x8xf32>
    %26 = tpu.matmul %23, %24, %cst_18 {dimension_numbers = #tpu.dot_dimension_numbers<[1], [0], [0], [1], [0, 0, 1, 1], [], []>} : vector<2048x64xbf16>, vector<64x8xbf16>, vector<2048x8xf32> -> vector<2048x8xf32>
    %27 = vector.broadcast %25 : vector<1x8xf32> to vector<2048x8xf32>
    %28 = arith.addf %26, %27 : vector<2048x8xf32>
    %cst_19 = arith.constant -1.000000e+00 : f32
    %cst_20 = arith.constant 1.000000e+00 : f32
    %29 = vector.broadcast %cst_19 : f32 to vector<2048x8xf32>
    %30 = arith.maximumf %29, %28 : vector<2048x8xf32>
    %31 = vector.broadcast %cst_20 : f32 to vector<2048x8xf32>
    %32 = arith.minimumf %31, %30 : vector<2048x8xf32>
    %c0_21 = arith.constant 0 : index
    %c0_22 = arith.constant 0 : index
    %33 = vector.load %arg8[%c0_21, %c0_22] : memref<2048x8xf32, #tpu.memory_space<vmem>>, vector<2048x8xf32>
    tpu.vector_store %arg8[%c0_21, %c0_22], %32 {strides = array<i32>} : memref<2048x8xf32, #tpu.memory_space<vmem>>, vector<2048x8xf32>,
    return
  }
  func.func @transform_0(%arg0: i32) -> (i32, i32) {
    %c0_i32 = arith.constant 0 : i32
    %c0_i32_0 = arith.constant 0 : i32
    return %arg0, %c0_i32 : i32, i32
  }
  func.func @transform_1(%arg0: i32) -> (i32, i32) {
    %c0_i32 = arith.constant 0 : i32
    %c0_i32_0 = arith.constant 0 : i32
    %c0_i32_1 = arith.constant 0 : i32
    return %c0_i32, %c0_i32_0 : i32, i32
  }
  func.func @transform_2(%arg0: i32) -> (i32, i32) {
    %c0_i32 = arith.constant 0 : i32
    %c0_i32_0 = arith.constant 0 : i32
    %c0_i32_1 = arith.constant 0 : i32
    return %c0_i32, %c0_i32_0 : i32, i32
  }
  func.func @transform_3(%arg0: i32) -> (i32, i32) {
    %c0_i32 = arith.constant 0 : i32
    %c0_i32_0 = arith.constant 0 : i32
    %c0_i32_1 = arith.constant 0 : i32
    return %c0_i32, %c0_i32_0 : i32, i32
  }
  func.func @transform_4(%arg0: i32) -> (i32, i32) {
    %c0_i32 = arith.constant 0 : i32
    %c0_i32_0 = arith.constant 0 : i32
    %c0_i32_1 = arith.constant 0 : i32
    return %c0_i32, %c0_i32_0 : i32, i32
  }
  func.func @transform_5(%arg0: i32) -> (i32, i32) {
    %c0_i32 = arith.constant 0 : i32
    %c0_i32_0 = arith.constant 0 : i32
    %c0_i32_1 = arith.constant 0 : i32
    return %c0_i32, %c0_i32_0 : i32, i32
  }
  func.func @transform_6(%arg0: i32) -> (i32, i32) {
    %c0_i32 = arith.constant 0 : i32
    %c0_i32_0 = arith.constant 0 : i32
    %c0_i32_1 = arith.constant 0 : i32
    return %c0_i32, %c0_i32_0 : i32, i32
  }
  func.func @transform_7(%arg0: i32) -> (i32, i32) {
    %c0_i32 = arith.constant 0 : i32
    %c0_i32_0 = arith.constant 0 : i32
    return %arg0, %c0_i32 : i32, i32
  }
}

</mosaic_0001>

<llo_original>
// kernel: pixel_pred.1
$region0: #{pixel_pred.1}
  #allocation0 [shape = 'u32[]', space=smem, size = 0x4, offset = 0x4, fixed_abs, tag = 'smem constant byte address 0x4 - core index']
  #allocation1 [shape = 'u32[72,128]{1,0:T(1,128)}', space=vmem, size = 0x9000, scoped, tag = 'internal scratch']
  %s0 = inlined_call_operand.vmem [shape: f32[4096,32], index: 0, kind: input, shape index: {}]
  %s1 = inlined_call_operand.vmem [shape: bf16[32,64], index: 1, kind: input, shape index: {}]
  %s2 = inlined_call_operand.vmem [shape: f32[1,64], index: 2, kind: input, shape index: {}]
  %s3 = inlined_call_operand.vmem [shape: bf16[64,64], index: 3, kind: input, shape index: {}]
  %s4 = inlined_call_operand.vmem [shape: f32[1,64], index: 4, kind: input, shape index: {}]
  %s5 = inlined_call_operand.vmem [shape: bf16[64,8], index: 5, kind: input, shape index: {}]
  %s6 = inlined_call_operand.vmem [shape: f32[1,8], index: 6, kind: input, shape index: {}]
  %s7 = inlined_call_operand.vmem [shape: f32[4096,8], index: 7, kind: output, shape index: {}]
  %s8 = sld [smem:[#allocation0]]
  $region61: #{pixel_pred.1} parent=0
    _
  %s10 = ssub.s32 1, %s8
  %s11 = scalar_select 0, %s10, %s8
  loop: start=0, step=1, limit=4
  $region2: #{pixel_pred.1} parent=0 // loop_pre_header
    _
  $region3: #{pixel_pred.1} parent=0 // loop_header
    %s13 = sphi 0, %s17
    %p14 = scmp.ge.s32.totalorder %s13, 4
    %s23 = sphi 0, %s25
    %s26 = sphi 0, %s23
    %s27 = sphi 0, %s26
    %s43 = sphi 0, %s27
    %s47 = sphi 0, %s47
    %s49 = sphi 0, %s47
    %s50 = sphi 0, %s49
    %s64 = sphi 0, %s50
    %s68 = sphi 0, %s68
    %s70 = sphi 0, %s68
    %s71 = sphi 0, %s70
    %s85 = sphi 0, %s71
    %s89 = sphi 0, %s89
    %s91 = sphi 0, %s89
    %s92 = sphi 0, %s91
    %s106 = sphi 0, %s92
    %s110 = sphi 0, %s110
    %s112 = sphi 0, %s110
    %s113 = sphi 0, %s112
    %s127 = sphi 0, %s113
    %s131 = sphi 0, %s131
    %s133 = sphi 0, %s131
    %s134 = sphi 0, %s133
    %s148 = sphi 0, %s134
    %s152 = sphi 0, %s152
    %s154 = sphi 0, %s152
    %s155 = sphi 0, %s154
    %s169 = sphi 0, %s155
    %s175 = sphi 0, %s177
    %s178 = sphi 0, %s175
    %s179 = sphi 0, %s178
    %s195 = sphi 0, %s179
  $region4: #{pixel_pred.1} parent=0 // loop_header_branch
    %16 = sbr.rel (%p14) target = $region8
  $region5: #{pixel_pred.1} parent=0 // loop_body
    %s18 = ssub.s32 %s13, 1
    %s19 = ssub.s32 %s13, 2
    %s20 = sadd.s32 %s13, 1
    %s21 = ssub.s32 %s13, %s20
    %p22 = scmp.eq.s32.totalorder %s21, 0
    %s24 = sadd.s32 %s23, 1
    %s25 = scalar_select %p22, %s23, %s24
    %p28 = pneg %p22
    %p29 = scmp.eq.s32.totalorder %s13, 1
    %p30 = por %p28, %p29
    %p31 = scmp.ne.s32.totalorder %s23, %s26
    %p32 = scmp.eq.s32.totalorder %s13, 0
    %p33 = por %p31, %p32
    %p34 = scmp.ne.s32.totalorder %s23, %s26
    %p35 = scmp.eq.s32.totalorder %s18, 1
    %p36 = por %p34, %p35
    %p37 = scmp.ne.s32.totalorder %s26, %s27
    %p38 = scmp.eq.s32.totalorder %s18, 0
    %p39 = por %p37, %p38
    %p40 = scmp.ne.s32.totalorder %s26, %s27
    %p41 = scmp.eq.s32.totalorder %s19, 1
    %p42 = por %p40, %p41
    %p44 = scmp.ne.s32.totalorder %s27, %s43
    %p45 = scmp.eq.s32.totalorder %s19, 0
    %p46 = por %p44, %p45
    %s48 = sadd.s32 %s47, 1
    %p51 = scmp.eq.s32.totalorder %s13, 1
    %p52 = scmp.ne.s32.totalorder %s47, %s49
    %p53 = scmp.eq.s32.totalorder %s13, 0
    %p54 = por %p52, %p53
    %p55 = scmp.ne.s32.totalorder %s47, %s49
    %p56 = scmp.eq.s32.totalorder %s18, 1
    %p57 = por %p55, %p56
    %p58 = scmp.ne.s32.totalorder %s49, %s50
    %p59 = scmp.eq.s32.totalorder %s18, 0
    %p60 = por %p58, %p59
    %p61 = scmp.ne.s32.totalorder %s49, %s50
    %p62 = scmp.eq.s32.totalorder %s19, 1
    %p63 = por %p61, %p62
    %p65 = scmp.ne.s32.totalorder %s50, %s64
    %p66 = scmp.eq.s32.totalorder %s19, 0
    %p67 = por %p65, %p66
    %s69 = sadd.s32 %s68, 1
    %p72 = scmp.eq.s32.totalorder %s13, 1
    %p73 = scmp.ne.s32.totalorder %s68, %s70
    %p74 = scmp.eq.s32.totalorder %s13, 0
    %p75 = por %p73, %p74
    %p76 = scmp.ne.s32.totalorder %s68, %s70
    %p77 = scmp.eq.s32.totalorder %s18, 1
    %p78 = por %p76, %p77
    %p79 = scmp.ne.s32.totalorder %s70, %s71
    %p80 = scmp.eq.s32.totalorder %s18, 0
    %p81 = por %p79, %p80
    %p82 = scmp.ne.s32.totalorder %s70, %s71
    %p83 = scmp.eq.s32.totalorder %s19, 1
    %p84 = por %p82, %p83
    %p86 = scmp.ne.s32.totalorder %s71, %s85
    %p87 = scmp.eq.s32.totalorder %s19, 0
    %p88 = por %p86, %p87
    %s90 = sadd.s32 %s89, 1
    %p93 = scmp.eq.s32.totalorder %s13, 1
    %p94 = scmp.ne.s32.totalorder %s89, %s91
    %p95 = scmp.eq.s32.totalorder %s13, 0
    %p96 = por %p94, %p95
    %p97 = scmp.ne.s32.totalorder %s89, %s91
    %p98 = scmp.eq.s32.totalorder %s18, 1
    %p99 = por %p97, %p98
    %p100 = scmp.ne.s32.totalorder %s91, %s92
    %p101 = scmp.eq.s32.totalorder %s18, 0
    %p102 = por %p100, %p101
    %p103 = scmp.ne.s32.totalorder %s91, %s92
    %p104 = scmp.eq.s32.totalorder %s19, 1
    %p105 = por %p103, %p104
    %p107 = scmp.ne.s32.totalorder %s92, %s106
    %p108 = scmp.eq.s32.totalorder %s19, 0
    %p109 = por %p107, %p108
    %s111 = sadd.s32 %s110, 1
    %p114 = scmp.eq.s32.totalorder %s13, 1
    %p115 = scmp.ne.s32.totalorder %s110, %s112
    %p116 = scmp.eq.s32.totalorder %s13, 0
    %p117 = por %p115, %p116
    %p118 = scmp.ne.s32.totalorder %s110, %s112
    %p119 = scmp.eq.s32.totalorder %s18, 1
    %p120 = por %p118, %p119
    %p121 = scmp.ne.s32.totalorder %s112, %s113
    %p122 = scmp.eq.s32.totalorder %s18, 0
    %p123 = por %p121, %p122
    %p124 = scmp.ne.s32.totalorder %s112, %s113
    %p125 = scmp.eq.s32.totalorder %s19, 1
    %p126 = por %p124, %p125
    %p128 = scmp.ne.s32.totalorder %s113, %s127
    %p129 = scmp.eq.s32.totalorder %s19, 0
    %p130 = por %p128, %p129
    %s132 = sadd.s32 %s131, 1
    %p135 = scmp.eq.s32.totalorder %s13, 1
    %p136 = scmp.ne.s32.totalorder %s131, %s133
    %p137 = scmp.eq.s32.totalorder %s13, 0
    %p138 = por %p136, %p137
    %p139 = scmp.ne.s32.totalorder %s131, %s133
    %p140 = scmp.eq.s32.totalorder %s18, 1
    %p141 = por %p139, %p140
    %p142 = scmp.ne.s32.totalorder %s133, %s134
    %p143 = scmp.eq.s32.totalorder %s18, 0
    %p144 = por %p142, %p143
    %p145 = scmp.ne.s32.totalorder %s133, %s134
    %p146 = scmp.eq.s32.totalorder %s19, 1
    %p147 = por %p145, %p146
    %p149 = scmp.ne.s32.totalorder %s134, %s148
    %p150 = scmp.eq.s32.totalorder %s19, 0
    %p151 = por %p149, %p150
    %s153 = sadd.s32 %s152, 1
    %p156 = scmp.eq.s32.totalorder %s13, 1
    %p157 = scmp.ne.s32.totalorder %s152, %s154
    %p158 = scmp.eq.s32.totalorder %s13, 0
    %p159 = por %p157, %p158
    %p160 = scmp.ne.s32.totalorder %s152, %s154
    %p161 = scmp.eq.s32.totalorder %s18, 1
    %p162 = por %p160, %p161
    %p163 = scmp.ne.s32.totalorder %s154, %s155
    %p164 = scmp.eq.s32.totalorder %s18, 0
    %p165 = por %p163, %p164
    %p166 = scmp.ne.s32.totalorder %s154, %s155
    %p167 = scmp.eq.s32.totalorder %s19, 1
    %p168 = por %p166, %p167
    %p170 = scmp.ne.s32.totalorder %s155, %s169
    %p171 = scmp.eq.s32.totalorder %s19, 0
    %p172 = por %p170, %p171
    %s173 = ssub.s32 %s13, %s20
    %p174 = scmp.eq.s32.totalorder %s173, 0
    %s176 = sadd.s32 %s175, 1
    %s177 = scalar_select %p174, %s175, %s176
    %p180 = pneg %p174
    %p181 = scmp.eq.s32.totalorder %s13, 1
    %p182 = por %p180, %p181
    %p183 = scmp.ne.s32.totalorder %s175, %s178
    %p184 = scmp.eq.s32.totalorder %s13, 0
    %p185 = por %p183, %p184
    %p186 = scmp.ne.s32.totalorder %s175, %s178
    %p187 = scmp.eq.s32.totalorder %s18, 1
    %p188 = por %p186, %p187
    %p189 = scmp.ne.s32.totalorder %s178, %s179
    %p190 = scmp.eq.s32.totalorder %s18, 0
    %p191 = por %p189, %p190
    %p192 = scmp.ne.s32.totalorder %s178, %s179
    %p193 = scmp.eq.s32.totalorder %s19, 1
    %p194 = por %p192, %p193
    %p196 = scmp.ne.s32.totalorder %s179, %s195
    %p197 = scmp.eq.s32.totalorder %s19, 0
    %p198 = por %p196, %p197
    %p199 = scmp.le.s32.totalorder 1, %s13
    %p200 = scmp.lt.s32.totalorder %s13, 3
    %p201 = pnand %p199, %p200
    %p202 = pneg %p201
    // Predicated region
    $region9: #{pixel_pred.1} parent=5 // pred_check
      _
    $region10: #{pixel_pred.1} parent=5 // pred_check_branch
      %204 = sbr.rel (%p201) target = $region12
    $region11: #{pixel_pred.1} parent=5 // pred_region
      %s205 = ssub.s32 %s13, 1
      // Predicated region
      $region13: #{pixel_pred.1} parent=11 // pred_check
        %p206 = pneg %p60
      $region14: #{pixel_pred.1} parent=11 // pred_check_branch
        %208 = sbr.rel (%p206) target = $region16
      $region15: #{pixel_pred.1} parent=11 // pred_region
        _
      $region16: #{pixel_pred.1} parent=11 // pred_fallthru
        _
      // Predicated region
      $region17: #{pixel_pred.1} parent=11 // pred_check
        %p209 = pneg %p81
      $region18: #{pixel_pred.1} parent=11 // pred_check_branch
        %211 = sbr.rel (%p209) target = $region20
      $region19: #{pixel_pred.1} parent=11 // pred_region
        _
      $region20: #{pixel_pred.1} parent=11 // pred_fallthru
        _
      // Predicated region
      $region21: #{pixel_pred.1} parent=11 // pred_check
        %p212 = pneg %p102
      $region22: #{pixel_pred.1} parent=11 // pred_check_branch
        %214 = sbr.rel (%p212) target = $region24
      $region23: #{pixel_pred.1} parent=11 // pred_region
        _
      $region24: #{pixel_pred.1} parent=11 // pred_fallthru
        _
      // Predicated region
      $region25: #{pixel_pred.1} parent=11 // pred_check
        %p215 = pneg %p123
      $region26: #{pixel_pred.1} parent=11 // pred_check_branch
        %217 = sbr.rel (%p215) target = $region28
      $region27: #{pixel_pred.1} parent=11 // pred_region
        _
      $region28: #{pixel_pred.1} parent=11 // pred_fallthru
        _
      // Predicated region
      $region29: #{pixel_pred.1} parent=11 // pred_check
        %p218 = pneg %p144
      $region30: #{pixel_pred.1} parent=11 // pred_check_branch
        %220 = sbr.rel (%p218) target = $region32
      $region31: #{pixel_pred.1} parent=11 // pred_region
        _
      $region32: #{pixel_pred.1} parent=11 // pred_fallthru
        _
      // Predicated region
      $region33: #{pixel_pred.1} parent=11 // pred_check
        %p221 = pneg %p165
      $region34: #{pixel_pred.1} parent=11 // pred_check_branch
        %223 = sbr.rel (%p221) target = $region36
      $region35: #{pixel_pred.1} parent=11 // pred_region
        _
      $region36: #{pixel_pred.1} parent=11 // pred_fallthru
        _
    $region12: #{pixel_pred.1} parent=5 // pred_fallthru
      _
    %p224 = scmp.lt.s32.totalorder %s13, 2
    // Predicated region
    $region37: #{pixel_pred.1} parent=5 // pred_check
      %p225 = pneg %p224
    $region38: #{pixel_pred.1} parent=5 // pred_check_branch
      %227 = sbr.rel (%p225) target = $region40
    $region39: #{pixel_pred.1} parent=5 // pred_region
      // Predicated region
      $region41: #{pixel_pred.1} parent=39 // pred_check
        %p228 = pneg %p33
      $region42: #{pixel_pred.1} parent=39 // pred_check_branch
        %230 = sbr.rel (%p228) target = $region44
      $region43: #{pixel_pred.1} parent=39 // pred_region
        %s231 = smul.u32 256, %s13
        %p232 = scmp.lt.s32.totalorder %s231, 511
        %s233 = scalar_select %p232, %s231, 511
        %s234 = smul.addr %s233, 8
        %s235 = scalar_lea.vmem %s0, %s234
        %s236 = smul.u32 256, %s13
      $region44: #{pixel_pred.1} parent=39 // pred_fallthru
        _
    $region40: #{pixel_pred.1} parent=5 // pred_fallthru
      _
    %p237 = scmp.le.s32.totalorder 1, %s13
    %p238 = scmp.lt.s32.totalorder %s13, 3
    %p239 = pnand %p237, %p238
    %p240 = pneg %p239
    // Predicated region
    $region45: #{pixel_pred.1} parent=5 // pred_check
      _
    $region46: #{pixel_pred.1} parent=5 // pred_check_branch
      %242 = sbr.rel (%p239) target = $region48
    $region47: #{pixel_pred.1} parent=5 // pred_region
      %s243 = ssub.s32 %s13, 1
      %s244 = smul.u32 256, %s18
      %p245 = scmp.lt.s32.totalorder %s244, 511
      %s246 = scalar_select %p245, %s244, 511
      %s247 = smul.addr %s246, 8
      %s248 = scalar_lea.vmem %s0, %s247
      %p249 = pneg %p39
      %p250 = pneg %p36
      %p251 = pneg %p60
      %p252 = pneg %p57
      %p253 = pneg %p81
      %p254 = pneg %p78
      %p255 = pneg %p102
      %p256 = pneg %p99
      %p257 = pneg %p123
      %p258 = pneg %p120
      %p259 = pneg %p144
      %p260 = pneg %p141
      %p261 = pneg %p165
      %p262 = pneg %p162
      %p263 = pneg %p191
      %p264 = pneg %p188
      %s265 = smul.u32 256, %s18
      %p266 = scmp.lt.s32.totalorder %s265, 511
      %s267 = scalar_select %p266, %s265, 511
      %s268 = smul.addr %s267, 8
      %s269 = scalar_lea.vmem %s7, %s268
      %s270 = smul.u32 256, %s18
      %p271 = scmp.lt.s32.totalorder %s270, 511
      %s272 = scalar_select %p271, %s270, 511
      %s273 = smul.addr %s272, 8
      %s274 = scalar_lea.vmem %s0, %s273
      %s275 = smul.u32 256, %s18
      %s276 = smul.u32 256, %s18
      %p277 = scmp.lt.s32.totalorder %s276, 511
      %s278 = scalar_select %p277, %s276, 511
      %s279 = smul.addr %s278, 8
      %s280 = scalar_lea.vmem %s7, %s279
      %s281 = smul.u32 256, %s18
      %v283 = vld [vmem:[%s274] sm:$0xff]
      %v284 = vld [vmem:[%s274 + $0x8] sm:$0xff]
      %v285 = vld [vmem:[%s274 + $0x10] sm:$0xff]
      %v286 = vld [vmem:[%s274 + $0x18] sm:$0xff]
      %v287 = vld [vmem:[%s274 + $0x20] sm:$0xff]
      %v288 = vld [vmem:[%s274 + $0x28] sm:$0xff]
      %v289 = vld [vmem:[%s274 + $0x30] sm:$0xff]
      %v290 = vld [vmem:[%s274 + $0x38] sm:$0xff]
      %v291 = vld [vmem:[%s274 + $0x40] sm:$0xff]
      %v292 = vld [vmem:[%s274 + $0x48] sm:$0xff]
      %v293 = vld [vmem:[%s274 + $0x50] sm:$0xff]
      %v294 = vld [vmem:[%s274 + $0x58] sm:$0xff]
      %v295 = vld [vmem:[%s274 + $0x60] sm:$0xff]
      %v296 = vld [vmem:[%s274 + $0x68] sm:$0xff]
      %v297 = vld [vmem:[%s274 + $0x70] sm:$0xff]
      %v298 = vld [vmem:[%s274 + $0x78] sm:$0xff]
      %v299 = vld [vmem:[%s274 + $0x80] sm:$0xff]
      %v300 = vld [vmem:[%s274 + $0x88] sm:$0xff]
      %v301 = vld [vmem:[%s274 + $0x90] sm:$0xff]
      %v302 = vld [vmem:[%s274 + $0x98] sm:$0xff]
      %v303 = vld [vmem:[%s274 + $0xa0] sm:$0xff]
      %v304 = vld [vmem:[%s274 + $0xa8] sm:$0xff]
      %v305 = vld [vmem:[%s274 + $0xb0] sm:$0xff]
      %v306 = vld [vmem:[%s274 + $0xb8] sm:$0xff]
      %v307 = vld [vmem:[%s274 + $0xc0] sm:$0xff]
      %v308 = vld [vmem:[%s274 + $0xc8] sm:$0xff]
      %v309 = vld [vmem:[%s274 + $0xd0] sm:$0xff]
      %v310 = vld [vmem:[%s274 + $0xd8] sm:$0xff]
      %v311 = vld [vmem:[%s274 + $0xe0] sm:$0xff]
      %v312 = vld [vmem:[%s274 + $0xe8] sm:$0xff]
      %v313 = vld [vmem:[%s274 + $0xf0] sm:$0xff]
      %v314 = vld [vmem:[%s274 + $0xf8] sm:$0xff]
      %v315 = vld [vmem:[%s274 + $0x100] sm:$0xff]
      %v316 = vld [vmem:[%s274 + $0x108] sm:$0xff]
      %v317 = vld [vmem:[%s274 + $0x110] sm:$0xff]
      %v318 = vld [vmem:[%s274 + $0x118] sm:$0xff]
      %v319 = vld [vmem:[%s274 + $0x120] sm:$0xff]
      %v320 = vld [vmem:[%s274 + $0x128] sm:$0xff]
      %v321 = vld [vmem:[%s274 + $0x130] sm:$0xff]
      %v322 = vld [vmem:[%s274 + $0x138] sm:$0xff]
      %v323 = vld [vmem:[%s274 + $0x140] sm:$0xff]
      %v324 = vld [vmem:[%s274 + $0x148] sm:$0xff]
      %v325 = vld [vmem:[%s274 + $0x150] sm:$0xff]
      %v326 = vld [vmem:[%s274 + $0x158] sm:$0xff]
      %v327 = vld [vmem:[%s274 + $0x160] sm:$0xff]
      %v328 = vld [vmem:[%s274 + $0x168] sm:$0xff]
      %v329 = vld [vmem:[%s274 + $0x170] sm:$0xff]
      %v330 = vld [vmem:[%s274 + $0x178] sm:$0xff]
      %v331 = vld [vmem:[%s274 + $0x180] sm:$0xff]
      %v332 = vld [vmem:[%s274 + $0x188] sm:$0xff]
      %v333 = vld [vmem:[%s274 + $0x190] sm:$0xff]
      %v334 = vld [vmem:[%s274 + $0x198] sm:$0xff]
      %v335 = vld [vmem:[%s274 + $0x1a0] sm:$0xff]
      %v336 = vld [vmem:[%s274 + $0x1a8] sm:$0xff]
      %v337 = vld [vmem:[%s274 + $0x1b0] sm:$0xff]
      %v338 = vld [vmem:[%s274 + $0x1b8] sm:$0xff]
      %v339 = vld [vmem:[%s274 + $0x1c0] sm:$0xff]
      %v340 = vld [vmem:[%s274 + $0x1c8] sm:$0xff]
      %v341 = vld [vmem:[%s274 + $0x1d0] sm:$0xff]
      %v342 = vld [vmem:[%s274 + $0x1d8] sm:$0xff]
      %v343 = vld [vmem:[%s274 + $0x1e0] sm:$0xff]
      %v344 = vld [vmem:[%s274 + $0x1e8] sm:$0xff]
      %v345 = vld [vmem:[%s274 + $0x1f0] sm:$0xff]
      %v346 = vld [vmem:[%s274 + $0x1f8] sm:$0xff]
      %v347 = vld [vmem:[%s274 + $0x200] sm:$0xff]
      %v348 = vld [vmem:[%s274 + $0x208] sm:$0xff]
      %v349 = vld [vmem:[%s274 + $0x210] sm:$0xff]
      %v350 = vld [vmem:[%s274 + $0x218] sm:$0xff]
      %v351 = vld [vmem:[%s274 + $0x220] sm:$0xff]
      %v352 = vld [vmem:[%s274 + $0x228] sm:$0xff]
      %v353 = vld [vmem:[%s274 + $0x230] sm:$0xff]
      %v354 = vld [vmem:[%s274 + $0x238] sm:$0xff]
      %v355 = vld [vmem:[%s274 + $0x240] sm:$0xff]
      %v356 = vld [vmem:[%s274 + $0x248] sm:$0xff]
      %v357 = vld [vmem:[%s274 + $0x250] sm:$0xff]
      %v358 = vld [vmem:[%s274 + $0x258] sm:$0xff]
      %v359 = vld [vmem:[%s274 + $0x260] sm:$0xff]
      %v360 = vld [vmem:[%s274 + $0x268] sm:$0xff]
      %v361 = vld [vmem:[%s274 + $0x270] sm:$0xff]
      %v362 = vld [vmem:[%s274 + $0x278] sm:$0xff]
      %v363 = vld [vmem:[%s274 + $0x280] sm:$0xff]
      %v364 = vld [vmem:[%s274 + $0x288] sm:$0xff]
      %v365 = vld [vmem:[%s274 + $0x290] sm:$0xff]
      %v366 = vld [vmem:[%s274 + $0x298] sm:$0xff]
      %v367 = vld [vmem:[%s274 + $0x2a0] sm:$0xff]
      %v368 = vld [vmem:[%s274 + $0x2a8] sm:$0xff]
      %v369 = vld [vmem:[%s274 + $0x2b0] sm:$0xff]
      %v370 = vld [vmem:[%s274 + $0x2b8] sm:$0xff]
      %v371 = vld [vmem:[%s274 + $0x2c0] sm:$0xff]
      %v372 = vld [vmem:[%s274 + $0x2c8] sm:$0xff]
      %v373 = vld [vmem:[%s274 + $0x2d0] sm:$0xff]
      %v374 = vld [vmem:[%s274 + $0x2d8] sm:$0xff]
      %v375 = vld [vmem:[%s274 + $0x2e0] sm:$0xff]
      %v376 = vld [vmem:[%s274 + $0x2e8] sm:$0xff]
      %v377 = vld [vmem:[%s274 + $0x2f0] sm:$0xff]
      %v378 = vld [vmem:[%s274 + $0x2f8] sm:$0xff]
      %v379 = vld [vmem:[%s274 + $0x300] sm:$0xff]
      %v380 = vld [vmem:[%s274 + $0x308] sm:$0xff]
      %v381 = vld [vmem:[%s274 + $0x310] sm:$0xff]
      %v382 = vld [vmem:[%s274 + $0x318] sm:$0xff]
      %v383 = vld [vmem:[%s274 + $0x320] sm:$0xff]
      %v384 = vld [vmem:[%s274 + $0x328] sm:$0xff]
      %v385 = vld [vmem:[%s274 + $0x330] sm:$0xff]
      %v386 = vld [vmem:[%s274 + $0x338] sm:$0xff]
      %v387 = vld [vmem:[%s274 + $0x340] sm:$0xff]
      %v388 = vld [vmem:[%s274 + $0x348] sm:$0xff]
      %v389 = vld [vmem:[%s274 + $0x350] sm:$0xff]
      %v390 = vld [vmem:[%s274 + $0x358] sm:$0xff]
      %v391 = vld [vmem:[%s274 + $0x360] sm:$0xff]
      %v392 = vld [vmem:[%s274 + $0x368] sm:$0xff]
      %v393 = vld [vmem:[%s274 + $0x370] sm:$0xff]
      %v394 = vld [vmem:[%s274 + $0x378] sm:$0xff]
      %v395 = vld [vmem:[%s274 + $0x380] sm:$0xff]
      %v396 = vld [vmem:[%s274 + $0x388] sm:$0xff]
      %v397 = vld [vmem:[%s274 + $0x390] sm:$0xff]
      %v398 = vld [vmem:[%s274 + $0x398] sm:$0xff]
      %v399 = vld [vmem:[%s274 + $0x3a0] sm:$0xff]
      %v400 = vld [vmem:[%s274 + $0x3a8] sm:$0xff]
      %v401 = vld [vmem:[%s274 + $0x3b0] sm:$0xff]
      %v402 = vld [vmem:[%s274 + $0x3b8] sm:$0xff]
      %v403 = vld [vmem:[%s274 + $0x3c0] sm:$0xff]
      %v404 = vld [vmem:[%s274 + $0x3c8] sm:$0xff]
      %v405 = vld [vmem:[%s274 + $0x3d0] sm:$0xff]
      %v406 = vld [vmem:[%s274 + $0x3d8] sm:$0xff]
      %v407 = vld [vmem:[%s274 + $0x3e0] sm:$0xff]
      %v408 = vld [vmem:[%s274 + $0x3e8] sm:$0xff]
      %v409 = vld [vmem:[%s274 + $0x3f0] sm:$0xff]
      %v410 = vld [vmem:[%s274 + $0x3f8] sm:$0xff]
      %v411 = vld [vmem:[%s274 + $0x400] sm:$0xff]
      %v412 = vld [vmem:[%s274 + $0x408] sm:$0xff]
      %v413 = vld [vmem:[%s274 + $0x410] sm:$0xff]
      %v414 = vld [vmem:[%s274 + $0x418] sm:$0xff]
      %v415 = vld [vmem:[%s274 + $0x420] sm:$0xff]
      %v416 = vld [vmem:[%s274 + $0x428] sm:$0xff]
      %v417 = vld [vmem:[%s274 + $0x430] sm:$0xff]
      %v418 = vld [vmem:[%s274 + $0x438] sm:$0xff]
      %v419 = vld [vmem:[%s274 + $0x440] sm:$0xff]
      %v420 = vld [vmem:[%s274 + $0x448] sm:$0xff]
      %v421 = vld [vmem:[%s274 + $0x450] sm:$0xff]
      %v422 = vld [vmem:[%s274 + $0x458] sm:$0xff]
      %v423 = vld [vmem:[%s274 + $0x460] sm:$0xff]
      %v424 = vld [vmem:[%s274 + $0x468] sm:$0xff]
      %v425 = vld [vmem:[%s274 + $0x470] sm:$0xff]
      %v426 = vld [vmem:[%s274 + $0x478] sm:$0xff]
      %v427 = vld [vmem:[%s274 + $0x480] sm:$0xff]
      %v428 = vld [vmem:[%s274 + $0x488] sm:$0xff]
      %v429 = vld [vmem:[%s274 + $0x490] sm:$0xff]
      %v430 = vld [vmem:[%s274 + $0x498] sm:$0xff]
      %v431 = vld [vmem:[%s274 + $0x4a0] sm:$0xff]
      %v432 = vld [vmem:[%s274 + $0x4a8] sm:$0xff]
      %v433 = vld [vmem:[%s274 + $0x4b0] sm:$0xff]
      %v434 = vld [vmem:[%s274 + $0x4b8] sm:$0xff]
      %v435 = vld [vmem:[%s274 + $0x4c0] sm:$0xff]
      %v436 = vld [vmem:[%s274 + $0x4c8] sm:$0xff]
      %v437 = vld [vmem:[%s274 + $0x4d0] sm:$0xff]
      %v438 = vld [vmem:[%s274 + $0x4d8] sm:$0xff]
      %v439 = vld [vmem:[%s274 + $0x4e0] sm:$0xff]
      %v440 = vld [vmem:[%s274 + $0x4e8] sm:$0xff]
      %v441 = vld [vmem:[%s274 + $0x4f0] sm:$0xff]
      %v442 = vld [vmem:[%s274 + $0x4f8] sm:$0xff]
      %v443 = vld [vmem:[%s274 + $0x500] sm:$0xff]
      %v444 = vld [vmem:[%s274 + $0x508] sm:$0xff]
      %v445 = vld [vmem:[%s274 + $0x510] sm:$0xff]
      %v446 = vld [vmem:[%s274 + $0x518] sm:$0xff]
      %v447 = vld [vmem:[%s274 + $0x520] sm:$0xff]
      %v448 = vld [vmem:[%s274 + $0x528] sm:$0xff]
      %v449 = vld [vmem:[%s274 + $0x530] sm:$0xff]
      %v450 = vld [vmem:[%s274 + $0x538] sm:$0xff]
      %v451 = vld [vmem:[%s274 + $0x540] sm:$0xff]
      %v452 = vld [vmem:[%s274 + $0x548] sm:$0xff]
      %v453 = vld [vmem:[%s274 + $0x550] sm:$0xff]
      %v454 = vld [vmem:[%s274 + $0x558] sm:$0xff]
      %v455 = vld [vmem:[%s274 + $0x560] sm:$0xff]
      %v456 = vld [vmem:[%s274 + $0x568] sm:$0xff]
      %v457 = vld [vmem:[%s274 + $0x570] sm:$0xff]
      %v458 = vld [vmem:[%s274 + $0x578] sm:$0xff]
      %v459 = vld [vmem:[%s274 + $0x580] sm:$0xff]
      %v460 = vld [vmem:[%s274 + $0x588] sm:$0xff]
      %v461 = vld [vmem:[%s274 + $0x590] sm:$0xff]
      %v462 = vld [vmem:[%s274 + $0x598] sm:$0xff]
      %v463 = vld [vmem:[%s274 + $0x5a0] sm:$0xff]
      %v464 = vld [vmem:[%s274 + $0x5a8] sm:$0xff]
      %v465 = vld [vmem:[%s274 + $0x5b0] sm:$0xff]
      %v466 = vld [vmem:[%s274 + $0x5b8] sm:$0xff]
      %v467 = vld [vmem:[%s274 + $0x5c0] sm:$0xff]
      %v468 = vld [vmem:[%s274 + $0x5c8] sm:$0xff]
      %v469 = vld [vmem:[%s274 + $0x5d0] sm:$0xff]
      %v470 = vld [vmem:[%s274 + $0x5d8] sm:$0xff]
      %v471 = vld [vmem:[%s274 + $0x5e0] sm:$0xff]
      %v472 = vld [vmem:[%s274 + $0x5e8] sm:$0xff]
      %v473 = vld [vmem:[%s274 + $0x5f0] sm:$0xff]
      %v474 = vld [vmem:[%s274 + $0x5f8] sm:$0xff]
      %v475 = vld [vmem:[%s274 + $0x600] sm:$0xff]
      %v476 = vld [vmem:[%s274 + $0x608] sm:$0xff]
      %v477 = vld [vmem:[%s274 + $0x610] sm:$0xff]
      %v478 = vld [vmem:[%s274 + $0x618] sm:$0xff]
      %v479 = vld [vmem:[%s274 + $0x620] sm:$0xff]
      %v480 = vld [vmem:[%s274 + $0x628] sm:$0xff]
      %v481 = vld [vmem:[%s274 + $0x630] sm:$0xff]
      %v482 = vld [vmem:[%s274 + $0x638] sm:$0xff]
      %v483 = vld [vmem:[%s274 + $0x640] sm:$0xff]
      %v484 = vld [vmem:[%s274 + $0x648] sm:$0xff]
      %v485 = vld [vmem:[%s274 + $0x650] sm:$0xff]
      %v486 = vld [vmem:[%s274 + $0x658] sm:$0xff]
      %v487 = vld [vmem:[%s274 + $0x660] sm:$0xff]
      %v488 = vld [vmem:[%s274 + $0x668] sm:$0xff]
      %v489 = vld [vmem:[%s274 + $0x670] sm:$0xff]
      %v490 = vld [vmem:[%s274 + $0x678] sm:$0xff]
      %v491 = vld [vmem:[%s274 + $0x680] sm:$0xff]
      %v492 = vld [vmem:[%s274 + $0x688] sm:$0xff]
      %v493 = vld [vmem:[%s274 + $0x690] sm:$0xff]
      %v494 = vld [vmem:[%s274 + $0x698] sm:$0xff]
      %v495 = vld [vmem:[%s274 + $0x6a0] sm:$0xff]
      %v496 = vld [vmem:[%s274 + $0x6a8] sm:$0xff]
      %v497 = vld [vmem:[%s274 + $0x6b0] sm:$0xff]
      %v498 = vld [vmem:[%s274 + $0x6b8] sm:$0xff]
      %v499 = vld [vmem:[%s274 + $0x6c0] sm:$0xff]
      %v500 = vld [vmem:[%s274 + $0x6c8] sm:$0xff]
      %v501 = vld [vmem:[%s274 + $0x6d0] sm:$0xff]
      %v502 = vld [vmem:[%s274 + $0x6d8] sm:$0xff]
      %v503 = vld [vmem:[%s274 + $0x6e0] sm:$0xff]
      %v504 = vld [vmem:[%s274 + $0x6e8] sm:$0xff]
      %v505 = vld [vmem:[%s274 + $0x6f0] sm:$0xff]
      %v506 = vld [vmem:[%s274 + $0x6f8] sm:$0xff]
      %v507 = vld [vmem:[%s274 + $0x700] sm:$0xff]
      %v508 = vld [vmem:[%s274 + $0x708] sm:$0xff]
      %v509 = vld [vmem:[%s274 + $0x710] sm:$0xff]
      %v510 = vld [vmem:[%s274 + $0x718] sm:$0xff]
      %v511 = vld [vmem:[%s274 + $0x720] sm:$0xff]
      %v512 = vld [vmem:[%s274 + $0x728] sm:$0xff]
      %v513 = vld [vmem:[%s274 + $0x730] sm:$0xff]
      %v514 = vld [vmem:[%s274 + $0x738] sm:$0xff]
      %v515 = vld [vmem:[%s274 + $0x740] sm:$0xff]
      %v516 = vld [vmem:[%s274 + $0x748] sm:$0xff]
      %v517 = vld [vmem:[%s274 + $0x750] sm:$0xff]
      %v518 = vld [vmem:[%s274 + $0x758] sm:$0xff]
      %v519 = vld [vmem:[%s274 + $0x760] sm:$0xff]
      %v520 = vld [vmem:[%s274 + $0x768] sm:$0xff]
      %v521 = vld [vmem:[%s274 + $0x770] sm:$0xff]
      %v522 = vld [vmem:[%s274 + $0x778] sm:$0xff]
      %v523 = vld [vmem:[%s274 + $0x780] sm:$0xff]
      %v524 = vld [vmem:[%s274 + $0x788] sm:$0xff]
      %v525 = vld [vmem:[%s274 + $0x790] sm:$0xff]
      %v526 = vld [vmem:[%s274 + $0x798] sm:$0xff]
      %v527 = vld [vmem:[%s274 + $0x7a0] sm:$0xff]
      %v528 = vld [vmem:[%s274 + $0x7a8] sm:$0xff]
      %v529 = vld [vmem:[%s274 + $0x7b0] sm:$0xff]
      %v530 = vld [vmem:[%s274 + $0x7b8] sm:$0xff]
      %v531 = vld [vmem:[%s274 + $0x7c0] sm:$0xff]
      %v532 = vld [vmem:[%s274 + $0x7c8] sm:$0xff]
      %v533 = vld [vmem:[%s274 + $0x7d0] sm:$0xff]
      %v534 = vld [vmem:[%s274 + $0x7d8] sm:$0xff]
      %v535 = vld [vmem:[%s274 + $0x7e0] sm:$0xff]
      %v536 = vld [vmem:[%s274 + $0x7e8] sm:$0xff]
      %v537 = vld [vmem:[%s274 + $0x7f0] sm:$0xff]
      %v538 = vld [vmem:[%s274 + $0x7f8] sm:$0xff]
      %v539 = vpack.c.bf16 %v284, %v283
      %v540 = vpack.c.bf16 %v286, %v285
      %v541 = vpack.c.bf16 %v288, %v287
      %v542 = vpack.c.bf16 %v290, %v289
      %v543 = vpack.c.bf16 %v292, %v291
      %v544 = vpack.c.bf16 %v294, %v293
      %v545 = vpack.c.bf16 %v296, %v295
      %v546 = vpack.c.bf16 %v298, %v297
      %v547 = vpack.c.bf16 %v300, %v299
      %v548 = vpack.c.bf16 %v302, %v301
      %v549 = vpack.c.bf16 %v304, %v303
      %v550 = vpack.c.bf16 %v306, %v305
      %v551 = vpack.c.bf16 %v308, %v307
      %v552 = vpack.c.bf16 %v310, %v309
      %v553 = vpack.c.bf16 %v312, %v311
      %v554 = vpack.c.bf16 %v314, %v313
      %v555 = vpack.c.bf16 %v316, %v315
      %v556 = vpack.c.bf16 %v318, %v317
      %v557 = vpack.c.bf16 %v320, %v319
      %v558 = vpack.c.bf16 %v322, %v321
      %v559 = vpack.c.bf16 %v324, %v323
      %v560 = vpack.c.bf16 %v326, %v325
      %v561 = vpack.c.bf16 %v328, %v327
      %v562 = vpack.c.bf16 %v330, %v329
      %v563 = vpack.c.bf16 %v332, %v331
      %v564 = vpack.c.bf16 %v334, %v333
      %v565 = vpack.c.bf16 %v336, %v335
      %v566 = vpack.c.bf16 %v338, %v337
      %v567 = vpack.c.bf16 %v340, %v339
      %v568 = vpack.c.bf16 %v342, %v341
      %v569 = vpack.c.bf16 %v344, %v343
      %v570 = vpack.c.bf16 %v346, %v345
      %v571 = vpack.c.bf16 %v348, %v347
      %v572 = vpack.c.bf16 %v350, %v349
      %v573 = vpack.c.bf16 %v352, %v351
      %v574 = vpack.c.bf16 %v354, %v353
      %v575 = vpack.c.bf16 %v356, %v355
      %v576 = vpack.c.bf16 %v358, %v357
      %v577 = vpack.c.bf16 %v360, %v359
      %v578 = vpack.c.bf16 %v362, %v361
      %v579 = vpack.c.bf16 %v364, %v363
      %v580 = vpack.c.bf16 %v366, %v365
      %v581 = vpack.c.bf16 %v368, %v367
      %v582 = vpack.c.bf16 %v370, %v369
      %v583 = vpack.c.bf16 %v372, %v371
      %v584 = vpack.c.bf16 %v374, %v373
      %v585 = vpack.c.bf16 %v376, %v375
      %v586 = vpack.c.bf16 %v378, %v377
      %v587 = vpack.c.bf16 %v380, %v379
      %v588 = vpack.c.bf16 %v382, %v381
      %v589 = vpack.c.bf16 %v384, %v383
      %v590 = vpack.c.bf16 %v386, %v385
      %v591 = vpack.c.bf16 %v388, %v387
      %v592 = vpack.c.bf16 %v390, %v389
      %v593 = vpack.c.bf16 %v392, %v391
      %v594 = vpack.c.bf16 %v394, %v393
      %v595 = vpack.c.bf16 %v396, %v395
      %v596 = vpack.c.bf16 %v398, %v397
      %v597 = vpack.c.bf16 %v400, %v399
      %v598 = vpack.c.bf16 %v402, %v401
      %v599 = vpack.c.bf16 %v404, %v403
      %v600 = vpack.c.bf16 %v406, %v405
      %v601 = vpack.c.bf16 %v408, %v407
      %v602 = vpack.c.bf16 %v410, %v409
      %v603 = vpack.c.bf16 %v412, %v411
      %v604 = vpack.c.bf16 %v414, %v413
      %v605 = vpack.c.bf16 %v416, %v415
      %v606 = vpack.c.bf16 %v418, %v417
      %v607 = vpack.c.bf16 %v420, %v419
      %v608 = vpack.c.bf16 %v422, %v421
      %v609 = vpack.c.bf16 %v424, %v423
      %v610 = vpack.c.bf16 %v426, %v425
      %v611 = vpack.c.bf16 %v428, %v427
      %v612 = vpack.c.bf16 %v430, %v429
      %v613 = vpack.c.bf16 %v432, %v431
      %v614 = vpack.c.bf16 %v434, %v433
      %v615 = vpack.c.bf16 %v436, %v435
      %v616 = vpack.c.bf16 %v438, %v437
      %v617 = vpack.c.bf16 %v440, %v439
      %v618 = vpack.c.bf16 %v442, %v441
      %v619 = vpack.c.bf16 %v444, %v443
      %v620 = vpack.c.bf16 %v446, %v445
      %v621 = vpack.c.bf16 %v448, %v447
      %v622 = vpack.c.bf16 %v450, %v449
      %v623 = vpack.c.bf16 %v452, %v451
      %v624 = vpack.c.bf16 %v454, %v453
      %v625 = vpack.c.bf16 %v456, %v455
      %v626 = vpack.c.bf16 %v458, %v457
      %v627 = vpack.c.bf16 %v460, %v459
      %v628 = vpack.c.bf16 %v462, %v461
      %v629 = vpack.c.bf16 %v464, %v463
      %v630 = vpack.c.bf16 %v466, %v465
      %v631 = vpack.c.bf16 %v468, %v467
      %v632 = vpack.c.bf16 %v470, %v469
      %v633 = vpack.c.bf16 %v472, %v471
      %v634 = vpack.c.bf16 %v474, %v473
      %v635 = vpack.c.bf16 %v476, %v475
      %v636 = vpack.c.bf16 %v478, %v477
      %v637 = vpack.c.bf16 %v480, %v479
      %v638 = vpack.c.bf16 %v482, %v481
      %v639 = vpack.c.bf16 %v484, %v483
      %v640 = vpack.c.bf16 %v486, %v485
      %v641 = vpack.c.bf16 %v488, %v487
      %v642 = vpack.c.bf16 %v490, %v489
      %v643 = vpack.c.bf16 %v492, %v491
      %v644 = vpack.c.bf16 %v494, %v493
      %v645 = vpack.c.bf16 %v496, %v495
      %v646 = vpack.c.bf16 %v498, %v497
      %v647 = vpack.c.bf16 %v500, %v499
      %v648 = vpack.c.bf16 %v502, %v501
      %v649 = vpack.c.bf16 %v504, %v503
      %v650 = vpack.c.bf16 %v506, %v505
      %v651 = vpack.c.bf16 %v508, %v507
      %v652 = vpack.c.bf16 %v510, %v509
      %v653 = vpack.c.bf16 %v512, %v511
      %v654 = vpack.c.bf16 %v514, %v513
      %v655 = vpack.c.bf16 %v516, %v515
      %v656 = vpack.c.bf16 %v518, %v517
      %v657 = vpack.c.bf16 %v520, %v519
      %v658 = vpack.c.bf16 %v522, %v521
      %v659 = vpack.c.bf16 %v524, %v523
      %v660 = vpack.c.bf16 %v526, %v525
      %v661 = vpack.c.bf16 %v528, %v527
      %v662 = vpack.c.bf16 %v530, %v529
      %v663 = vpack.c.bf16 %v532, %v531
      %v664 = vpack.c.bf16 %v534, %v533
      %v665 = vpack.c.bf16 %v536, %v535
      %v666 = vpack.c.bf16 %v538, %v537
      %v667 = vld [vmem:[%s1] sm:$0xf]
      %v668 = vld [vmem:[%s1 + $0x4] sm:$0xf]
      %v669 = vld [vmem:[%s1 + $0x8] sm:$0xf]
      %v670 = vld [vmem:[%s1 + $0xc] sm:$0xf]
      %v671 = vld [vmem:[%s2] sm:$0x1]
      %v673 = vperm.slane %v671, 0
      %v679 = vunpack.c.l.b16 %v667
      %v680 = vunpack.c.l.b16 %v668
      %v681 = vunpack.c.l.b16 %v669
      %v682 = vunpack.c.l.b16 %v670
      %v683 = vpack.c.b16 %v680, %v679
      %v684 = vpack.c.b16 %v682, %v681
      %vm687 = vcmask 261120
      %v689 = vsel %vm687, %v539, 0
      %v692 = vsel %vm687, %v540, 0
      %v695 = vsel %vm687, %v541, 0
      %v698 = vsel %vm687, %v542, 0
      %v701 = vsel %vm687, %v543, 0
      %v704 = vsel %vm687, %v544, 0
      %v707 = vsel %vm687, %v545, 0
      %v710 = vsel %vm687, %v546, 0
      %v713 = vsel %vm687, %v547, 0
      %v716 = vsel %vm687, %v548, 0
      %v719 = vsel %vm687, %v549, 0
      %v722 = vsel %vm687, %v550, 0
      %v725 = vsel %vm687, %v551, 0
      %v728 = vsel %vm687, %v552, 0
      %v731 = vsel %vm687, %v553, 0
      %v734 = vsel %vm687, %v554, 0
      %v737 = vsel %vm687, %v555, 0
      %v740 = vsel %vm687, %v556, 0
      %v743 = vsel %vm687, %v557, 0
      %v746 = vsel %vm687, %v558, 0
      %v749 = vsel %vm687, %v559, 0
      %v752 = vsel %vm687, %v560, 0
      %v755 = vsel %vm687, %v561, 0
      %v758 = vsel %vm687, %v562, 0
      %v761 = vsel %vm687, %v563, 0
      %v764 = vsel %vm687, %v564, 0
      %v767 = vsel %vm687, %v565, 0
      %v770 = vsel %vm687, %v566, 0
      %v773 = vsel %vm687, %v567, 0
      %v776 = vsel %vm687, %v568, 0
      %v779 = vsel %vm687, %v569, 0
      %v782 = vsel %vm687, %v570, 0
      %v785 = vsel %vm687, %v571, 0
      %v788 = vsel %vm687, %v572, 0
      %v791 = vsel %vm687, %v573, 0
      %v794 = vsel %vm687, %v574, 0
      %v797 = vsel %vm687, %v575, 0
      %v800 = vsel %vm687, %v576, 0
      %v803 = vsel %vm687, %v577, 0
      %v806 = vsel %vm687, %v578, 0
      %v809 = vsel %vm687, %v579, 0
      %v812 = vsel %vm687, %v580, 0
      %v815 = vsel %vm687, %v581, 0
      %v818 = vsel %vm687, %v582, 0
      %v821 = vsel %vm687, %v583, 0
      %v824 = vsel %vm687, %v584, 0
      %v827 = vsel %vm687, %v585, 0
      %v830 = vsel %vm687, %v586, 0
      %v833 = vsel %vm687, %v587, 0
      %v836 = vsel %vm687, %v588, 0
      %v839 = vsel %vm687, %v589, 0
      %v842 = vsel %vm687, %v590, 0
      %v845 = vsel %vm687, %v591, 0
      %v848 = vsel %vm687, %v592, 0
      %v851 = vsel %vm687, %v593, 0
      %v854 = vsel %vm687, %v594, 0
      %v857 = vsel %vm687, %v595, 0
      %v860 = vsel %vm687, %v596, 0
      %v863 = vsel %vm687, %v597, 0
      %v866 = vsel %vm687, %v598, 0
      %v869 = vsel %vm687, %v599, 0
      %v872 = vsel %vm687, %v600, 0
      %v875 = vsel %vm687, %v601, 0
      %v878 = vsel %vm687, %v602, 0
      %v881 = vsel %vm687, %v603, 0
      %v884 = vsel %vm687, %v604, 0
      %v887 = vsel %vm687, %v605, 0
      %v890 = vsel %vm687, %v606, 0
      %v893 = vsel %vm687, %v607, 0
      %v896 = vsel %vm687, %v608, 0
      %v899 = vsel %vm687, %v609, 0
      %v902 = vsel %vm687, %v610, 0
      %v905 = vsel %vm687, %v611, 0
      %v908 = vsel %vm687, %v612, 0
      %v911 = vsel %vm687, %v613, 0
      %v914 = vsel %vm687, %v614, 0
      %v917 = vsel %vm687, %v615, 0
      %v920 = vsel %vm687, %v616, 0
      %v923 = vsel %vm687, %v617, 0
      %v926 = vsel %vm687, %v618, 0
      %v929 = vsel %vm687, %v619, 0
      %v932 = vsel %vm687, %v620, 0
      %v935 = vsel %vm687, %v621, 0
      %v938 = vsel %vm687, %v622, 0
      %v941 = vsel %vm687, %v623, 0
      %v944 = vsel %vm687, %v624, 0
      %v947 = vsel %vm687, %v625, 0
      %v950 = vsel %vm687, %v626, 0
      %v953 = vsel %vm687, %v627, 0
      %v956 = vsel %vm687, %v628, 0
      %v959 = vsel %vm687, %v629, 0
      %v962 = vsel %vm687, %v630, 0
      %v965 = vsel %vm687, %v631, 0
      %v968 = vsel %vm687, %v632, 0
      %v971 = vsel %vm687, %v633, 0
      %v974 = vsel %vm687, %v634, 0
      %v977 = vsel %vm687, %v635, 0
      %v980 = vsel %vm687, %v636, 0
      %v983 = vsel %vm687, %v637, 0
      %v986 = vsel %vm687, %v638, 0
      %v989 = vsel %vm687, %v639, 0
      %v992 = vsel %vm687, %v640, 0
      %v995 = vsel %vm687, %v641, 0
      %v998 = vsel %vm687, %v642, 0
      %v1001 = vsel %vm687, %v643, 0
      %v1004 = vsel %vm687, %v644, 0
      %v1007 = vsel %vm687, %v645, 0
      %v1010 = vsel %vm687, %v646, 0
      %v1013 = vsel %vm687, %v647, 0
      %v1016 = vsel %vm687, %v648, 0
      %v1019 = vsel %vm687, %v649, 0
      %v1022 = vsel %vm687, %v650, 0
      %v1025 = vsel %vm687, %v651, 0
      %v1028 = vsel %vm687, %v652, 0
      %v1031 = vsel %vm687, %v653, 0
      %v1034 = vsel %vm687, %v654, 0
      %v1037 = vsel %vm687, %v655, 0
      %v1040 = vsel %vm687, %v656, 0
      %v1043 = vsel %vm687, %v657, 0
      %v1046 = vsel %vm687, %v658, 0
      %v1049 = vsel %vm687, %v659, 0
      %v1052 = vsel %vm687, %v660, 0
      %v1055 = vsel %vm687, %v661, 0
      %v1058 = vsel %vm687, %v662, 0
      %v1061 = vsel %vm687, %v663, 0
      %v1064 = vsel %vm687, %v664, 0
      %v1067 = vsel %vm687, %v665, 0
      %v1070 = vsel %vm687, %v666, 0
      %1072 = vmatpush.bf16.msra.mxu0 0
      %1073 = vmatpush.bf16.msra.mxu0 0
      %1074 = vmatpush.bf16.msra.mxu0 0
      %1075 = vmatpush.bf16.msra.mxu0 0
      %1076 = vmatpush.bf16.msra.mxu0 0
      %1077 = vmatpush.bf16.msra.mxu0 0
      %1078 = vmatpush.bf16.msra.mxu0 %v684
      %1079 = vmatpush.bf16.msra.mxu0 %v683
      %1080 = vmatmul.bf16.gmra.mxu0 %v689
      %v1081 = vpop.f32.mrf.mxu0
      %v1082 = vadd.f32 %v673, %v1081
      %v1083 = vpop.f32.mrf.mxu0
      %v1084 = vadd.f32 %v673, %v1083
      %1085 = vmatmul.bf16.gmra.mxu0 %v692
      %v1086 = vpop.f32.mrf.mxu0
      %v1087 = vadd.f32 %v673, %v1086
      %v1088 = vpop.f32.mrf.mxu0
      %v1089 = vadd.f32 %v673, %v1088
      %1090 = vmatmul.bf16.gmra.mxu0 %v695
      %v1091 = vpop.f32.mrf.mxu0
      %v1092 = vadd.f32 %v673, %v1091
      %v1093 = vpop.f32.mrf.mxu0
      %v1094 = vadd.f32 %v673, %v1093
      %1095 = vmatmul.bf16.gmra.mxu0 %v698
      %v1096 = vpop.f32.mrf.mxu0
      %v1097 = vadd.f32 %v673, %v1096
      %v1098 = vpop.f32.mrf.mxu0
      %v1099 = vadd.f32 %v673, %v1098
      %1100 = vmatmul.bf16.gmra.mxu0 %v701
      %v1101 = vpop.f32.mrf.mxu0
      %v1102 = vadd.f32 %v673, %v1101
      %v1103 = vpop.f32.mrf.mxu0
      %v1104 = vadd.f32 %v673, %v1103
      %1105 = vmatmul.bf16.gmra.mxu0 %v704
      %v1106 = vpop.f32.mrf.mxu0
      %v1107 = vadd.f32 %v673, %v1106
      %v1108 = vpop.f32.mrf.mxu0
      %v1109 = vadd.f32 %v673, %v1108
      %1110 = vmatmul.bf16.gmra.mxu0 %v707
      %v1111 = vpop.f32.mrf.mxu0
      %v1112 = vadd.f32 %v673, %v1111
      %v1113 = vpop.f32.mrf.mxu0
      %v1114 = vadd.f32 %v673, %v1113
      %1115 = vmatmul.bf16.gmra.mxu0 %v710
      %v1116 = vpop.f32.mrf.mxu0
      %v1117 = vadd.f32 %v673, %v1116
      %v1118 = vpop.f32.mrf.mxu0
      %v1119 = vadd.f32 %v673, %v1118
      %1120 = vmatmul.bf16.gmra.mxu0 %v713
      %v1121 = vpop.f32.mrf.mxu0
      %v1122 = vadd.f32 %v673, %v1121
      %v1123 = vpop.f32.mrf.mxu0
      %v1124 = vadd.f32 %v673, %v1123
      %1125 = vmatmul.bf16.gmra.mxu0 %v716
      %v1126 = vpop.f32.mrf.mxu0
      %v1127 = vadd.f32 %v673, %v1126
      %v1128 = vpop.f32.mrf.mxu0
      %v1129 = vadd.f32 %v673, %v1128
      %1130 = vmatmul.bf16.gmra.mxu0 %v719
      %v1131 = vpop.f32.mrf.mxu0
      %v1132 = vadd.f32 %v673, %v1131
      %v1133 = vpop.f32.mrf.mxu0
      %v1134 = vadd.f32 %v673, %v1133
      %1135 = vmatmul.bf16.gmra.mxu0 %v722
      %v1136 = vpop.f32.mrf.mxu0
      %v1137 = vadd.f32 %v673, %v1136
      %v1138 = vpop.f32.mrf.mxu0
      %v1139 = vadd.f32 %v673, %v1138
      %1140 = vmatmul.bf16.gmra.mxu0 %v725
      %v1141 = vpop.f32.mrf.mxu0
      %v1142 = vadd.f32 %v673, %v1141
      %v1143 = vpop.f32.mrf.mxu0
      %v1144 = vadd.f32 %v673, %v1143
      %1145 = vmatmul.bf16.gmra.mxu0 %v728
      %v1146 = vpop.f32.mrf.mxu0
      %v1147 = vadd.f32 %v673, %v1146
      %v1148 = vpop.f32.mrf.mxu0
      %v1149 = vadd.f32 %v673, %v1148
      %1150 = vmatmul.bf16.gmra.mxu0 %v731
      %v1151 = vpop.f32.mrf.mxu0
      %v1152 = vadd.f32 %v673, %v1151
      %v1153 = vpop.f32.mrf.mxu0
      %v1154 = vadd.f32 %v673, %v1153
      %1155 = vmatmul.bf16.gmra.mxu0 %v734
      %v1156 = vpop.f32.mrf.mxu0
      %v1157 = vadd.f32 %v673, %v1156
      %v1158 = vpop.f32.mrf.mxu0
      %v1159 = vadd.f32 %v673, %v1158
      %1160 = vmatmul.bf16.gmra.mxu0 %v737
      %v1161 = vpop.f32.mrf.mxu0
      %v1162 = vadd.f32 %v673, %v1161
      %v1163 = vpop.f32.mrf.mxu0
      %v1164 = vadd.f32 %v673, %v1163
      %1165 = vmatmul.bf16.gmra.mxu0 %v740
      %v1166 = vpop.f32.mrf.mxu0
      %v1167 = vadd.f32 %v673, %v1166
      %v1168 = vpop.f32.mrf.mxu0
      %v1169 = vadd.f32 %v673, %v1168
      %1170 = vmatmul.bf16.gmra.mxu0 %v743
      %v1171 = vpop.f32.mrf.mxu0
      %v1172 = vadd.f32 %v673, %v1171
      %v1173 = vpop.f32.mrf.mxu0
      %v1174 = vadd.f32 %v673, %v1173
      %1175 = vmatmul.bf16.gmra.mxu0 %v746
      %v1176 = vpop.f32.mrf.mxu0
      %v1177 = vadd.f32 %v673, %v1176
      %v1178 = vpop.f32.mrf.mxu0
      %v1179 = vadd.f32 %v673, %v1178
      %1180 = vmatmul.bf16.gmra.mxu0 %v749
      %v1181 = vpop.f32.mrf.mxu0
      %v1182 = vadd.f32 %v673, %v1181
      %v1183 = vpop.f32.mrf.mxu0
      %v1184 = vadd.f32 %v673, %v1183
      %1185 = vmatmul.bf16.gmra.mxu0 %v752
      %v1186 = vpop.f32.mrf.mxu0
      %v1187 = vadd.f32 %v673, %v1186
      %v1188 = vpop.f32.mrf.mxu0
      %v1189 = vadd.f32 %v673, %v1188
      %1190 = vmatmul.bf16.gmra.mxu0 %v755
      %v1191 = vpop.f32.mrf.mxu0
      %v1192 = vadd.f32 %v673, %v1191
      %v1193 = vpop.f32.mrf.mxu0
      %v1194 = vadd.f32 %v673, %v1193
      %1195 = vmatmul.bf16.gmra.mxu0 %v758
      %v1196 = vpop.f32.mrf.mxu0
      %v1197 = vadd.f32 %v673, %v1196
      %v1198 = vpop.f32.mrf.mxu0
      %v1199 = vadd.f32 %v673, %v1198
      %1200 = vmatmul.bf16.gmra.mxu0 %v761
      %v1201 = vpop.f32.mrf.mxu0
      %v1202 = vadd.f32 %v673, %v1201
      %v1203 = vpop.f32.mrf.mxu0
      %v1204 = vadd.f32 %v673, %v1203
      %1205 = vmatmul.bf16.gmra.mxu0 %v764
      %v1206 = vpop.f32.mrf.mxu0
      %v1207 = vadd.f32 %v673, %v1206
      %v1208 = vpop.f32.mrf.mxu0
      %v1209 = vadd.f32 %v673, %v1208
      %1210 = vmatmul.bf16.gmra.mxu0 %v767
      %v1211 = vpop.f32.mrf.mxu0
      %v1212 = vadd.f32 %v673, %v1211
      %v1213 = vpop.f32.mrf.mxu0
      %v1214 = vadd.f32 %v673, %v1213
      %1215 = vmatmul.bf16.gmra.mxu0 %v770
      %v1216 = vpop.f32.mrf.mxu0
      %v1217 = vadd.f32 %v673, %v1216
      %v1218 = vpop.f32.mrf.mxu0
      %v1219 = vadd.f32 %v673, %v1218
      %1220 = vmatmul.bf16.gmra.mxu0 %v773
      %v1221 = vpop.f32.mrf.mxu0
      %v1222 = vadd.f32 %v673, %v1221
      %v1223 = vpop.f32.mrf.mxu0
      %v1224 = vadd.f32 %v673, %v1223
      %1225 = vmatmul.bf16.gmra.mxu0 %v776
      %v1226 = vpop.f32.mrf.mxu0
      %v1227 = vadd.f32 %v673, %v1226
      %v1228 = vpop.f32.mrf.mxu0
      %v1229 = vadd.f32 %v673, %v1228
      %1230 = vmatmul.bf16.gmra.mxu0 %v779
      %v1231 = vpop.f32.mrf.mxu0
      %v1232 = vadd.f32 %v673, %v1231
      %v1233 = vpop.f32.mrf.mxu0
      %v1234 = vadd.f32 %v673, %v1233
      %1235 = vmatmul.bf16.gmra.mxu0 %v782
      %v1236 = vpop.f32.mrf.mxu0
      %v1237 = vadd.f32 %v673, %v1236
      %v1238 = vpop.f32.mrf.mxu0
      %v1239 = vadd.f32 %v673, %v1238
      %1240 = vmatmul.bf16.gmra.mxu0 %v785
      %v1241 = vpop.f32.mrf.mxu0
      %v1242 = vadd.f32 %v673, %v1241
      %v1243 = vpop.f32.mrf.mxu0
      %v1244 = vadd.f32 %v673, %v1243
      %1245 = vmatmul.bf16.gmra.mxu0 %v788
      %v1246 = vpop.f32.mrf.mxu0
      %v1247 = vadd.f32 %v673, %v1246
      %v1248 = vpop.f32.mrf.mxu0
      %v1249 = vadd.f32 %v673, %v1248
      %1250 = vmatmul.bf16.gmra.mxu0 %v791
      %v1251 = vpop.f32.mrf.mxu0
      %v1252 = vadd.f32 %v673, %v1251
      %v1253 = vpop.f32.mrf.mxu0
      %v1254 = vadd.f32 %v673, %v1253
      %1255 = vmatmul.bf16.gmra.mxu0 %v794
      %v1256 = vpop.f32.mrf.mxu0
      %v1257 = vadd.f32 %v673, %v1256
      %v1258 = vpop.f32.mrf.mxu0
      %v1259 = vadd.f32 %v673, %v1258
      %1260 = vmatmul.bf16.gmra.mxu0 %v797
      %v1261 = vpop.f32.mrf.mxu0
      %v1262 = vadd.f32 %v673, %v1261
      %v1263 = vpop.f32.mrf.mxu0
      %v1264 = vadd.f32 %v673, %v1263
      %1265 = vmatmul.bf16.gmra.mxu0 %v800
      %v1266 = vpop.f32.mrf.mxu0
      %v1267 = vadd.f32 %v673, %v1266
      %v1268 = vpop.f32.mrf.mxu0
      %v1269 = vadd.f32 %v673, %v1268
      %1270 = vmatmul.bf16.gmra.mxu0 %v803
      %v1271 = vpop.f32.mrf.mxu0
      %v1272 = vadd.f32 %v673, %v1271
      %v1273 = vpop.f32.mrf.mxu0
      %v1274 = vadd.f32 %v673, %v1273
      %1275 = vmatmul.bf16.gmra.mxu0 %v806
      %v1276 = vpop.f32.mrf.mxu0
      %v1277 = vadd.f32 %v673, %v1276
      %v1278 = vpop.f32.mrf.mxu0
      %v1279 = vadd.f32 %v673, %v1278
      %1280 = vmatmul.bf16.gmra.mxu0 %v809
      %v1281 = vpop.f32.mrf.mxu0
      %v1282 = vadd.f32 %v673, %v1281
      %v1283 = vpop.f32.mrf.mxu0
      %v1284 = vadd.f32 %v673, %v1283
      %1285 = vmatmul.bf16.gmra.mxu0 %v812
      %v1286 = vpop.f32.mrf.mxu0
      %v1287 = vadd.f32 %v673, %v1286
      %v1288 = vpop.f32.mrf.mxu0
      %v1289 = vadd.f32 %v673, %v1288
      %1290 = vmatmul.bf16.gmra.mxu0 %v815
      %v1291 = vpop.f32.mrf.mxu0
      %v1292 = vadd.f32 %v673, %v1291
      %v1293 = vpop.f32.mrf.mxu0
      %v1294 = vadd.f32 %v673, %v1293
      %1295 = vmatmul.bf16.gmra.mxu0 %v818
      %v1296 = vpop.f32.mrf.mxu0
      %v1297 = vadd.f32 %v673, %v1296
      %v1298 = vpop.f32.mrf.mxu0
      %v1299 = vadd.f32 %v673, %v1298
      %1300 = vmatmul.bf16.gmra.mxu0 %v821
      %v1301 = vpop.f32.mrf.mxu0
      %v1302 = vadd.f32 %v673, %v1301
      %v1303 = vpop.f32.mrf.mxu0
      %v1304 = vadd.f32 %v673, %v1303
      %1305 = vmatmul.bf16.gmra.mxu0 %v824
      %v1306 = vpop.f32.mrf.mxu0
      %v1307 = vadd.f32 %v673, %v1306
      %v1308 = vpop.f32.mrf.mxu0
      %v1309 = vadd.f32 %v673, %v1308
      %1310 = vmatmul.bf16.gmra.mxu0 %v827
      %v1311 = vpop.f32.mrf.mxu0
      %v1312 = vadd.f32 %v673, %v1311
      %v1313 = vpop.f32.mrf.mxu0
      %v1314 = vadd.f32 %v673, %v1313
      %1315 = vmatmul.bf16.gmra.mxu0 %v830
      %v1316 = vpop.f32.mrf.mxu0
      %v1317 = vadd.f32 %v673, %v1316
      %v1318 = vpop.f32.mrf.mxu0
      %v1319 = vadd.f32 %v673, %v1318
      %1320 = vmatmul.bf16.gmra.mxu0 %v833
      %v1321 = vpop.f32.mrf.mxu0
      %v1322 = vadd.f32 %v673, %v1321
      %v1323 = vpop.f32.mrf.mxu0
      %v1324 = vadd.f32 %v673, %v1323
      %1325 = vmatmul.bf16.gmra.mxu0 %v836
      %v1326 = vpop.f32.mrf.mxu0
      %v1327 = vadd.f32 %v673, %v1326
      %v1328 = vpop.f32.mrf.mxu0
      %v1329 = vadd.f32 %v673, %v1328
      %1330 = vmatmul.bf16.gmra.mxu0 %v839
      %v1331 = vpop.f32.mrf.mxu0
      %v1332 = vadd.f32 %v673, %v1331
      %v1333 = vpop.f32.mrf.mxu0
      %v1334 = vadd.f32 %v673, %v1333
      %1335 = vmatmul.bf16.gmra.mxu0 %v842
      %v1336 = vpop.f32.mrf.mxu0
      %v1337 = vadd.f32 %v673, %v1336
      %v1338 = vpop.f32.mrf.mxu0
      %v1339 = vadd.f32 %v673, %v1338
      %1340 = vmatmul.bf16.gmra.mxu0 %v845
      %v1341 = vpop.f32.mrf.mxu0
      %v1342 = vadd.f32 %v673, %v1341
      %v1343 = vpop.f32.mrf.mxu0
      %v1344 = vadd.f32 %v673, %v1343
      %1345 = vmatmul.bf16.gmra.mxu0 %v848
      %v1346 = vpop.f32.mrf.mxu0
      %v1347 = vadd.f32 %v673, %v1346
      %v1348 = vpop.f32.mrf.mxu0
      %v1349 = vadd.f32 %v673, %v1348
      %1350 = vmatmul.bf16.gmra.mxu0 %v851
      %v1351 = vpop.f32.mrf.mxu0
      %v1352 = vadd.f32 %v673, %v1351
      %v1353 = vpop.f32.mrf.mxu0
      %v1354 = vadd.f32 %v673, %v1353
      %1355 = vmatmul.bf16.gmra.mxu0 %v854
      %v1356 = vpop.f32.mrf.mxu0
      %v1357 = vadd.f32 %v673, %v1356
      %v1358 = vpop.f32.mrf.mxu0
      %v1359 = vadd.f32 %v673, %v1358
      %1360 = vmatmul.bf16.gmra.mxu0 %v857
      %v1361 = vpop.f32.mrf.mxu0
      %v1362 = vadd.f32 %v673, %v1361
      %v1363 = vpop.f32.mrf.mxu0
      %v1364 = vadd.f32 %v673, %v1363
      %1365 = vmatmul.bf16.gmra.mxu0 %v860
      %v1366 = vpop.f32.mrf.mxu0
      %v1367 = vadd.f32 %v673, %v1366
      %v1368 = vpop.f32.mrf.mxu0
      %v1369 = vadd.f32 %v673, %v1368
      %1370 = vmatmul.bf16.gmra.mxu0 %v863
      %v1371 = vpop.f32.mrf.mxu0
      %v1372 = vadd.f32 %v673, %v1371
      %v1373 = vpop.f32.mrf.mxu0
      %v1374 = vadd.f32 %v673, %v1373
      %1375 = vmatmul.bf16.gmra.mxu0 %v866
      %v1376 = vpop.f32.mrf.mxu0
      %v1377 = vadd.f32 %v673, %v1376
      %v1378 = vpop.f32.mrf.mxu0
      %v1379 = vadd.f32 %v673, %v1378
      %1380 = vmatmul.bf16.gmra.mxu0 %v869
      %v1381 = vpop.f32.mrf.mxu0
      %v1382 = vadd.f32 %v673, %v1381
      %v1383 = vpop.f32.mrf.mxu0
      %v1384 = vadd.f32 %v673, %v1383
      %1385 = vmatmul.bf16.gmra.mxu0 %v872
      %v1386 = vpop.f32.mrf.mxu0
      %v1387 = vadd.f32 %v673, %v1386
      %v1388 = vpop.f32.mrf.mxu0
      %v1389 = vadd.f32 %v673, %v1388
      %1390 = vmatmul.bf16.gmra.mxu0 %v875
      %v1391 = vpop.f32.mrf.mxu0
      %v1392 = vadd.f32 %v673, %v1391
      %v1393 = vpop.f32.mrf.mxu0
      %v1394 = vadd.f32 %v673, %v1393
      %1395 = vmatmul.bf16.gmra.mxu0 %v878
      %v1396 = vpop.f32.mrf.mxu0
      %v1397 = vadd.f32 %v673, %v1396
      %v1398 = vpop.f32.mrf.mxu0
      %v1399 = vadd.f32 %v673, %v1398
      %1400 = vmatmul.bf16.gmra.mxu0 %v881
      %v1401 = vpop.f32.mrf.mxu0
      %v1402 = vadd.f32 %v673, %v1401
      %v1403 = vpop.f32.mrf.mxu0
      %v1404 = vadd.f32 %v673, %v1403
      %1405 = vmatmul.bf16.gmra.mxu0 %v884
      %v1406 = vpop.f32.mrf.mxu0
      %v1407 = vadd.f32 %v673, %v1406
      %v1408 = vpop.f32.mrf.mxu0
      %v1409 = vadd.f32 %v673, %v1408
      %1410 = vmatmul.bf16.gmra.mxu0 %v887
      %v1411 = vpop.f32.mrf.mxu0
      %v1412 = vadd.f32 %v673, %v1411
      %v1413 = vpop.f32.mrf.mxu0
      %v1414 = vadd.f32 %v673, %v1413
      %1415 = vmatmul.bf16.gmra.mxu0 %v890
      %v1416 = vpop.f32.mrf.mxu0
      %v1417 = vadd.f32 %v673, %v1416
      %v1418 = vpop.f32.mrf.mxu0
      %v1419 = vadd.f32 %v673, %v1418
      %1420 = vmatmul.bf16.gmra.mxu0 %v893
      %v1421 = vpop.f32.mrf.mxu0
      %v1422 = vadd.f32 %v673, %v1421
      %v1423 = vpop.f32.mrf.mxu0
      %v1424 = vadd.f32 %v673, %v1423
      %1425 = vmatmul.bf16.gmra.mxu0 %v896
      %v1426 = vpop.f32.mrf.mxu0
      %v1427 = vadd.f32 %v673, %v1426
      %v1428 = vpop.f32.mrf.mxu0
      %v1429 = vadd.f32 %v673, %v1428
      %1430 = vmatmul.bf16.gmra.mxu0 %v899
      %v1431 = vpop.f32.mrf.mxu0
      %v1432 = vadd.f32 %v673, %v1431
      %v1433 = vpop.f32.mrf.mxu0
      %v1434 = vadd.f32 %v673, %v1433
      %1435 = vmatmul.bf16.gmra.mxu0 %v902
      %v1436 = vpop.f32.mrf.mxu0
      %v1437 = vadd.f32 %v673, %v1436
      %v1438 = vpop.f32.mrf.mxu0
      %v1439 = vadd.f32 %v673, %v1438
      %1440 = vmatmul.bf16.gmra.mxu0 %v905
      %v1441 = vpop.f32.mrf.mxu0
      %v1442 = vadd.f32 %v673, %v1441
      %v1443 = vpop.f32.mrf.mxu0
      %v1444 = vadd.f32 %v673, %v1443
      %1445 = vmatmul.bf16.gmra.mxu0 %v908
      %v1446 = vpop.f32.mrf.mxu0
      %v1447 = vadd.f32 %v673, %v1446
      %v1448 = vpop.f32.mrf.mxu0
      %v1449 = vadd.f32 %v673, %v1448
      %1450 = vmatmul.bf16.gmra.mxu0 %v911
      %v1451 = vpop.f32.mrf.mxu0
      %v1452 = vadd.f32 %v673, %v1451
      %v1453 = vpop.f32.mrf.mxu0
      %v1454 = vadd.f32 %v673, %v1453
      %1455 = vmatmul.bf16.gmra.mxu0 %v914
      %v1456 = vpop.f32.mrf.mxu0
      %v1457 = vadd.f32 %v673, %v1456
      %v1458 = vpop.f32.mrf.mxu0
      %v1459 = vadd.f32 %v673, %v1458
      %1460 = vmatmul.bf16.gmra.mxu0 %v917
      %v1461 = vpop.f32.mrf.mxu0
      %v1462 = vadd.f32 %v673, %v1461
      %v1463 = vpop.f32.mrf.mxu0
      %v1464 = vadd.f32 %v673, %v1463
      %1465 = vmatmul.bf16.gmra.mxu0 %v920
      %v1466 = vpop.f32.mrf.mxu0
      %v1467 = vadd.f32 %v673, %v1466
      %v1468 = vpop.f32.mrf.mxu0
      %v1469 = vadd.f32 %v673, %v1468
      %1470 = vmatmul.bf16.gmra.mxu0 %v923
      %v1471 = vpop.f32.mrf.mxu0
      %v1472 = vadd.f32 %v673, %v1471
      %v1473 = vpop.f32.mrf.mxu0
      %v1474 = vadd.f32 %v673, %v1473
      %1475 = vmatmul.bf16.gmra.mxu0 %v926
      %v1476 = vpop.f32.mrf.mxu0
      %v1477 = vadd.f32 %v673, %v1476
      %v1478 = vpop.f32.mrf.mxu0
      %v1479 = vadd.f32 %v673, %v1478
      %1480 = vmatmul.bf16.gmra.mxu0 %v929
      %v1481 = vpop.f32.mrf.mxu0
      %v1482 = vadd.f32 %v673, %v1481
      %v1483 = vpop.f32.mrf.mxu0
      %v1484 = vadd.f32 %v673, %v1483
      %1485 = vmatmul.bf16.gmra.mxu0 %v932
      %v1486 = vpop.f32.mrf.mxu0
      %v1487 = vadd.f32 %v673, %v1486
      %v1488 = vpop.f32.mrf.mxu0
      %v1489 = vadd.f32 %v673, %v1488
      %1490 = vmatmul.bf16.gmra.mxu0 %v935
      %v1491 = vpop.f32.mrf.mxu0
      %v1492 = vadd.f32 %v673, %v1491
      %v1493 = vpop.f32.mrf.mxu0
      %v1494 = vadd.f32 %v673, %v1493
      %1495 = vmatmul.bf16.gmra.mxu0 %v938
      %v1496 = vpop.f32.mrf.mxu0
      %v1497 = vadd.f32 %v673, %v1496
      %v1498 = vpop.f32.mrf.mxu0
      %v1499 = vadd.f32 %v673, %v1498
      %1500 = vmatmul.bf16.gmra.mxu0 %v941
      %v1501 = vpop.f32.mrf.mxu0
      %v1502 = vadd.f32 %v673, %v1501
      %v1503 = vpop.f32.mrf.mxu0
      %v1504 = vadd.f32 %v673, %v1503
      %1505 = vmatmul.bf16.gmra.mxu0 %v944
      %v1506 = vpop.f32.mrf.mxu0
      %v1507 = vadd.f32 %v673, %v1506
      %v1508 = vpop.f32.mrf.mxu0
      %v1509 = vadd.f32 %v673, %v1508
      %1510 = vmatmul.bf16.gmra.mxu0 %v947
      %v1511 = vpop.f32.mrf.mxu0
      %v1512 = vadd.f32 %v673, %v1511
      %v1513 = vpop.f32.mrf.mxu0
      %v1514 = vadd.f32 %v673, %v1513
      %1515 = vmatmul.bf16.gmra.mxu0 %v950
      %v1516 = vpop.f32.mrf.mxu0
      %v1517 = vadd.f32 %v673, %v1516
      %v1518 = vpop.f32.mrf.mxu0
      %v1519 = vadd.f32 %v673, %v1518
      %1520 = vmatmul.bf16.gmra.mxu0 %v953
      %v1521 = vpop.f32.mrf.mxu0
      %v1522 = vadd.f32 %v673, %v1521
      %v1523 = vpop.f32.mrf.mxu0
      %v1524 = vadd.f32 %v673, %v1523
      %1525 = vmatmul.bf16.gmra.mxu0 %v956
      %v1526 = vpop.f32.mrf.mxu0
      %v1527 = vadd.f32 %v673, %v1526
      %v1528 = vpop.f32.mrf.mxu0
      %v1529 = vadd.f32 %v673, %v1528
      %1530 = vmatmul.bf16.gmra.mxu0 %v959
      %v1531 = vpop.f32.mrf.mxu0
      %v1532 = vadd.f32 %v673, %v1531
      %v1533 = vpop.f32.mrf.mxu0
      %v1534 = vadd.f32 %v673, %v1533
      %1535 = vmatmul.bf16.gmra.mxu0 %v962
      %v1536 = vpop.f32.mrf.mxu0
      %v1537 = vadd.f32 %v673, %v1536
      %v1538 = vpop.f32.mrf.mxu0
      %v1539 = vadd.f32 %v673, %v1538
      %1540 = vmatmul.bf16.gmra.mxu0 %v965
      %v1541 = vpop.f32.mrf.mxu0
      %v1542 = vadd.f32 %v673, %v1541
      %v1543 = vpop.f32.mrf.mxu0
      %v1544 = vadd.f32 %v673, %v1543
      %1545 = vmatmul.bf16.gmra.mxu0 %v968
      %v1546 = vpop.f32.mrf.mxu0
      %v1547 = vadd.f32 %v673, %v1546
      %v1548 = vpop.f32.mrf.mxu0
      %v1549 = vadd.f32 %v673, %v1548
      %1550 = vmatmul.bf16.gmra.mxu0 %v971
      %v1551 = vpop.f32.mrf.mxu0
      %v1552 = vadd.f32 %v673, %v1551
      %v1553 = vpop.f32.mrf.mxu0
      %v1554 = vadd.f32 %v673, %v1553
      %1555 = vmatmul.bf16.gmra.mxu0 %v974
      %v1556 = vpop.f32.mrf.mxu0
      %v1557 = vadd.f32 %v673, %v1556
      %v1558 = vpop.f32.mrf.mxu0
      %v1559 = vadd.f32 %v673, %v1558
      %1560 = vmatmul.bf16.gmra.mxu0 %v977
      %v1561 = vpop.f32.mrf.mxu0
      %v1562 = vadd.f32 %v673, %v1561
      %v1563 = vpop.f32.mrf.mxu0
      %v1564 = vadd.f32 %v673, %v1563
      %1565 = vmatmul.bf16.gmra.mxu0 %v980
      %v1566 = vpop.f32.mrf.mxu0
      %v1567 = vadd.f32 %v673, %v1566
      %v1568 = vpop.f32.mrf.mxu0
      %v1569 = vadd.f32 %v673, %v1568
      %1570 = vmatmul.bf16.gmra.mxu0 %v983
      %v1571 = vpop.f32.mrf.mxu0
      %v1572 = vadd.f32 %v673, %v1571
      %v1573 = vpop.f32.mrf.mxu0
      %v1574 = vadd.f32 %v673, %v1573
      %1575 = vmatmul.bf16.gmra.mxu0 %v986
      %v1576 = vpop.f32.mrf.mxu0
      %v1577 = vadd.f32 %v673, %v1576
      %v1578 = vpop.f32.mrf.mxu0
      %v1579 = vadd.f32 %v673, %v1578
      %1580 = vmatmul.bf16.gmra.mxu0 %v989
      %v1581 = vpop.f32.mrf.mxu0
      %v1582 = vadd.f32 %v673, %v1581
      %v1583 = vpop.f32.mrf.mxu0
      %v1584 = vadd.f32 %v673, %v1583
      %1585 = vmatmul.bf16.gmra.mxu0 %v992
      %v1586 = vpop.f32.mrf.mxu0
      %v1587 = vadd.f32 %v673, %v1586
      %v1588 = vpop.f32.mrf.mxu0
      %v1589 = vadd.f32 %v673, %v1588
      %1590 = vmatmul.bf16.gmra.mxu0 %v995
      %v1591 = vpop.f32.mrf.mxu0
      %v1592 = vadd.f32 %v673, %v1591
      %v1593 = vpop.f32.mrf.mxu0
      %v1594 = vadd.f32 %v673, %v1593
      %1595 = vmatmul.bf16.gmra.mxu0 %v998
      %v1596 = vpop.f32.mrf.mxu0
      %v1597 = vadd.f32 %v673, %v1596
      %v1598 = vpop.f32.mrf.mxu0
      %v1599 = vadd.f32 %v673, %v1598
      %1600 = vmatmul.bf16.gmra.mxu0 %v1001
      %v1601 = vpop.f32.mrf.mxu0
      %v1602 = vadd.f32 %v673, %v1601
      %v1603 = vpop.f32.mrf.mxu0
      %v1604 = vadd.f32 %v673, %v1603
      %1605 = vmatmul.bf16.gmra.mxu0 %v1004
      %v1606 = vpop.f32.mrf.mxu0
      %v1607 = vadd.f32 %v673, %v1606
      %v1608 = vpop.f32.mrf.mxu0
      %v1609 = vadd.f32 %v673, %v1608
      %1610 = vmatmul.bf16.gmra.mxu0 %v1007
      %v1611 = vpop.f32.mrf.mxu0
      %v1612 = vadd.f32 %v673, %v1611
      %v1613 = vpop.f32.mrf.mxu0
      %v1614 = vadd.f32 %v673, %v1613
      %1615 = vmatmul.bf16.gmra.mxu0 %v1010
      %v1616 = vpop.f32.mrf.mxu0
      %v1617 = vadd.f32 %v673, %v1616
      %v1618 = vpop.f32.mrf.mxu0
      %v1619 = vadd.f32 %v673, %v1618
      %1620 = vmatmul.bf16.gmra.mxu0 %v1013
      %v1621 = vpop.f32.mrf.mxu0
      %v1622 = vadd.f32 %v673, %v1621
      %v1623 = vpop.f32.mrf.mxu0
      %v1624 = vadd.f32 %v673, %v1623
      %1625 = vmatmul.bf16.gmra.mxu0 %v1016
      %v1626 = vpop.f32.mrf.mxu0
      %v1627 = vadd.f32 %v673, %v1626
      %v1628 = vpop.f32.mrf.mxu0
      %v1629 = vadd.f32 %v673, %v1628
      %1630 = vmatmul.bf16.gmra.mxu0 %v1019
      %v1631 = vpop.f32.mrf.mxu0
      %v1632 = vadd.f32 %v673, %v1631
      %v1633 = vpop.f32.mrf.mxu0
      %v1634 = vadd.f32 %v673, %v1633
      %1635 = vmatmul.bf16.gmra.mxu0 %v1022
      %v1636 = vpop.f32.mrf.mxu0
      %v1637 = vadd.f32 %v673, %v1636
      %v1638 = vpop.f32.mrf.mxu0
      %v1639 = vadd.f32 %v673, %v1638
      %1640 = vmatmul.bf16.gmra.mxu0 %v1025
      %v1641 = vpop.f32.mrf.mxu0
      %v1642 = vadd.f32 %v673, %v1641
      %v1643 = vpop.f32.mrf.mxu0
      %v1644 = vadd.f32 %v673, %v1643
      %1645 = vmatmul.bf16.gmra.mxu0 %v1028
      %v1646 = vpop.f32.mrf.mxu0
      %v1647 = vadd.f32 %v673, %v1646
      %v1648 = vpop.f32.mrf.mxu0
      %v1649 = vadd.f32 %v673, %v1648
      %1650 = vmatmul.bf16.gmra.mxu0 %v1031
      %v1651 = vpop.f32.mrf.mxu0
      %v1652 = vadd.f32 %v673, %v1651
      %v1653 = vpop.f32.mrf.mxu0
      %v1654 = vadd.f32 %v673, %v1653
      %1655 = vmatmul.bf16.gmra.mxu0 %v1034
      %v1656 = vpop.f32.mrf.mxu0
      %v1657 = vadd.f32 %v673, %v1656
      %v1658 = vpop.f32.mrf.mxu0
      %v1659 = vadd.f32 %v673, %v1658
      %1660 = vmatmul.bf16.gmra.mxu0 %v1037
      %v1661 = vpop.f32.mrf.mxu0
      %v1662 = vadd.f32 %v673, %v1661
      %v1663 = vpop.f32.mrf.mxu0
      %v1664 = vadd.f32 %v673, %v1663
      %1665 = vmatmul.bf16.gmra.mxu0 %v1040
      %v1666 = vpop.f32.mrf.mxu0
      %v1667 = vadd.f32 %v673, %v1666
      %v1668 = vpop.f32.mrf.mxu0
      %v1669 = vadd.f32 %v673, %v1668
      %1670 = vmatmul.bf16.gmra.mxu0 %v1043
      %v1671 = vpop.f32.mrf.mxu0
      %v1672 = vadd.f32 %v673, %v1671
      %v1673 = vpop.f32.mrf.mxu0
      %v1674 = vadd.f32 %v673, %v1673
      %1675 = vmatmul.bf16.gmra.mxu0 %v1046
      %v1676 = vpop.f32.mrf.mxu0
      %v1677 = vadd.f32 %v673, %v1676
      %v1678 = vpop.f32.mrf.mxu0
      %v1679 = vadd.f32 %v673, %v1678
      %1680 = vmatmul.bf16.gmra.mxu0 %v1049
      %v1681 = vpop.f32.mrf.mxu0
      %v1682 = vadd.f32 %v673, %v1681
      %v1683 = vpop.f32.mrf.mxu0
      %v1684 = vadd.f32 %v673, %v1683
      %1685 = vmatmul.bf16.gmra.mxu0 %v1052
      %v1686 = vpop.f32.mrf.mxu0
      %v1687 = vadd.f32 %v673, %v1686
      %v1688 = vpop.f32.mrf.mxu0
      %v1689 = vadd.f32 %v673, %v1688
      %1690 = vmatmul.bf16.gmra.mxu0 %v1055
      %v1691 = vpop.f32.mrf.mxu0
      %v1692 = vadd.f32 %v673, %v1691
      %v1693 = vpop.f32.mrf.mxu0
      %v1694 = vadd.f32 %v673, %v1693
      %1695 = vmatmul.bf16.gmra.mxu0 %v1058
      %v1696 = vpop.f32.mrf.mxu0
      %v1697 = vadd.f32 %v673, %v1696
      %v1698 = vpop.f32.mrf.mxu0
      %v1699 = vadd.f32 %v673, %v1698
      %1700 = vmatmul.bf16.gmra.mxu0 %v1061
      %v1701 = vpop.f32.mrf.mxu0
      %v1702 = vadd.f32 %v673, %v1701
      %v1703 = vpop.f32.mrf.mxu0
      %v1704 = vadd.f32 %v673, %v1703
      %1705 = vmatmul.bf16.gmra.mxu0 %v1064
      %v1706 = vpop.f32.mrf.mxu0
      %v1707 = vadd.f32 %v673, %v1706
      %v1708 = vpop.f32.mrf.mxu0
      %v1709 = vadd.f32 %v673, %v1708
      %1710 = vmatmul.bf16.gmra.mxu0 %v1067
      %v1711 = vpop.f32.mrf.mxu0
      %v1712 = vadd.f32 %v673, %v1711
      %v1713 = vpop.f32.mrf.mxu0
      %v1714 = vadd.f32 %v673, %v1713
      %1715 = vmatmul.bf16.gmra.mxu0 %v1070
      %v1716 = vpop.f32.mrf.mxu0
      %v1717 = vadd.f32 %v673, %v1716
      %v1718 = vpop.f32.mrf.mxu0
      %v1719 = vadd.f32 %v673, %v1718
      %1720 = vdwg.mxu0
      %vm1721 = vcmp.ge.f32.partialorder %v1082, 0.0
      %vm1722 = vcmp.ge.f32.partialorder %v1084, 0.0
      %vm1723 = vcmp.ge.f32.partialorder %v1087, 0.0
      %vm1724 = vcmp.ge.f32.partialorder %v1089, 0.0
      %vm1725 = vcmp.ge.f32.partialorder %v1092, 0.0
      %vm1726 = vcmp.ge.f32.partialorder %v1094, 0.0
      %vm1727 = vcmp.ge.f32.partialorder %v1097, 0.0
      %vm1728 = vcmp.ge.f32.partialorder %v1099, 0.0
      %vm1729 = vcmp.ge.f32.partialorder %v1102, 0.0
      %vm1730 = vcmp.ge.f32.partialorder %v1104, 0.0
      %vm1731 = vcmp.ge.f32.partialorder %v1107, 0.0
      %vm1732 = vcmp.ge.f32.partialorder %v1109, 0.0
      %vm1733 = vcmp.ge.f32.partialorder %v1112, 0.0
      %vm1734 = vcmp.ge.f32.partialorder %v1114, 0.0
      %vm1735 = vcmp.ge.f32.partialorder %v1117, 0.0
      %vm1736 = vcmp.ge.f32.partialorder %v1119, 0.0
      %vm1737 = vcmp.ge.f32.partialorder %v1122, 0.0
      %vm1738 = vcmp.ge.f32.partialorder %v1124, 0.0
      %vm1739 = vcmp.ge.f32.partialorder %v1127, 0.0
      %vm1740 = vcmp.ge.f32.partialorder %v1129, 0.0
      %vm1741 = vcmp.ge.f32.partialorder %v1132, 0.0
      %vm1742 = vcmp.ge.f32.partialorder %v1134, 0.0
      %vm1743 = vcmp.ge.f32.partialorder %v1137, 0.0
      %vm1744 = vcmp.ge.f32.partialorder %v1139, 0.0
      %vm1745 = vcmp.ge.f32.partialorder %v1142, 0.0
      %vm1746 = vcmp.ge.f32.partialorder %v1144, 0.0
      %vm1747 = vcmp.ge.f32.partialorder %v1147, 0.0
      %vm1748 = vcmp.ge.f32.partialorder %v1149, 0.0
      %vm1749 = vcmp.ge.f32.partialorder %v1152, 0.0
      %vm1750 = vcmp.ge.f32.partialorder %v1154, 0.0
      %vm1751 = vcmp.ge.f32.partialorder %v1157, 0.0
      %vm1752 = vcmp.ge.f32.partialorder %v1159, 0.0
      %vm1753 = vcmp.ge.f32.partialorder %v1162, 0.0
      %vm1754 = vcmp.ge.f32.partialorder %v1164, 0.0
      %vm1755 = vcmp.ge.f32.partialorder %v1167, 0.0
      %vm1756 = vcmp.ge.f32.partialorder %v1169, 0.0
      %vm1757 = vcmp.ge.f32.partialorder %v1172, 0.0
      %vm1758 = vcmp.ge.f32.partialorder %v1174, 0.0
      %vm1759 = vcmp.ge.f32.partialorder %v1177, 0.0
      %vm1760 = vcmp.ge.f32.partialorder %v1179, 0.0
      %vm1761 = vcmp.ge.f32.partialorder %v1182, 0.0
      %vm1762 = vcmp.ge.f32.partialorder %v1184, 0.0
      %vm1763 = vcmp.ge.f32.partialorder %v1187, 0.0
      %vm1764 = vcmp.ge.f32.partialorder %v1189, 0.0
      %vm1765 = vcmp.ge.f32.partialorder %v1192, 0.0
      %vm1766 = vcmp.ge.f32.partialorder %v1194, 0.0
      %vm1767 = vcmp.ge.f32.partialorder %v1197, 0.0
      %vm1768 = vcmp.ge.f32.partialorder %v1199, 0.0
      %vm1769 = vcmp.ge.f32.partialorder %v1202, 0.0
      %vm1770 = vcmp.ge.f32.partialorder %v1204, 0.0
      %vm1771 = vcmp.ge.f32.partialorder %v1207, 0.0
      %vm1772 = vcmp.ge.f32.partialorder %v1209, 0.0
      %vm1773 = vcmp.ge.f32.partialorder %v1212, 0.0
      %vm1774 = vcmp.ge.f32.partialorder %v1214, 0.0
      %vm1775 = vcmp.ge.f32.partialorder %v1217, 0.0
      %vm1776 = vcmp.ge.f32.partialorder %v1219, 0.0
      %vm1777 = vcmp.ge.f32.partialorder %v1222, 0.0
      %vm1778 = vcmp.ge.f32.partialorder %v1224, 0.0
      %vm1779 = vcmp.ge.f32.partialorder %v1227, 0.0
      %vm1780 = vcmp.ge.f32.partialorder %v1229, 0.0
      %vm1781 = vcmp.ge.f32.partialorder %v1232, 0.0
      %vm1782 = vcmp.ge.f32.partialorder %v1234, 0.0
      %vm1783 = vcmp.ge.f32.partialorder %v1237, 0.0
      %vm1784 = vcmp.ge.f32.partialorder %v1239, 0.0
      %vm1785 = vcmp.ge.f32.partialorder %v1242, 0.0
      %vm1786 = vcmp.ge.f32.partialorder %v1244, 0.0
      %vm1787 = vcmp.ge.f32.partialorder %v1247, 0.0
      %vm1788 = vcmp.ge.f32.partialorder %v1249, 0.0
      %vm1789 = vcmp.ge.f32.partialorder %v1252, 0.0
      %vm1790 = vcmp.ge.f32.partialorder %v1254, 0.0
      %vm1791 = vcmp.ge.f32.partialorder %v1257, 0.0
      %vm1792 = vcmp.ge.f32.partialorder %v1259, 0.0
      %vm1793 = vcmp.ge.f32.partialorder %v1262, 0.0
      %vm1794 = vcmp.ge.f32.partialorder %v1264, 0.0
      %vm1795 = vcmp.ge.f32.partialorder %v1267, 0.0
      %vm1796 = vcmp.ge.f32.partialorder %v1269, 0.0
      %vm1797 = vcmp.ge.f32.partialorder %v1272, 0.0
      %vm1798 = vcmp.ge.f32.partialorder %v1274, 0.0
      %vm1799 = vcmp.ge.f32.partialorder %v1277, 0.0
      %vm1800 = vcmp.ge.f32.partialorder %v1279, 0.0
      %vm1801 = vcmp.ge.f32.partialorder %v1282, 0.0
      %vm1802 = vcmp.ge.f32.partialorder %v1284, 0.0
      %vm1803 = vcmp.ge.f32.partialorder %v1287, 0.0
      %vm1804 = vcmp.ge.f32.partialorder %v1289, 0.0
      %vm1805 = vcmp.ge.f32.partialorder %v1292, 0.0
      %vm1806 = vcmp.ge.f32.partialorder %v1294, 0.0
      %vm1807 = vcmp.ge.f32.partialorder %v1297, 0.0
      %vm1808 = vcmp.ge.f32.partialorder %v1299, 0.0
      %vm1809 = vcmp.ge.f32.partialorder %v1302, 0.0
      %vm1810 = vcmp.ge.f32.partialorder %v1304, 0.0
      %vm1811 = vcmp.ge.f32.partialorder %v1307, 0.0
      %vm1812 = vcmp.ge.f32.partialorder %v1309, 0.0
      %vm1813 = vcmp.ge.f32.partialorder %v1312, 0.0
      %vm1814 = vcmp.ge.f32.partialorder %v1314, 0.0
      %vm1815 = vcmp.ge.f32.partialorder %v1317, 0.0
      %vm1816 = vcmp.ge.f32.partialorder %v1319, 0.0
      %vm1817 = vcmp.ge.f32.partialorder %v1322, 0.0
      %vm1818 = vcmp.ge.f32.partialorder %v1324, 0.0
      %vm1819 = vcmp.ge.f32.partialorder %v1327, 0.0
      %vm1820 = vcmp.ge.f32.partialorder %v1329, 0.0
      %vm1821 = vcmp.ge.f32.partialorder %v1332, 0.0
      %vm1822 = vcmp.ge.f32.partialorder %v1334, 0.0
      %vm1823 = vcmp.ge.f32.partialorder %v1337, 0.0
      %vm1824 = vcmp.ge.f32.partialorder %v1339, 0.0
      %vm1825 = vcmp.ge.f32.partialorder %v1342, 0.0
      %vm1826 = vcmp.ge.f32.partialorder %v1344, 0.0
      %vm1827 = vcmp.ge.f32.partialorder %v1347, 0.0
      %vm1828 = vcmp.ge.f32.partialorder %v1349, 0.0
      %vm1829 = vcmp.ge.f32.partialorder %v1352, 0.0
      %vm1830 = vcmp.ge.f32.partialorder %v1354, 0.0
      %vm1831 = vcmp.ge.f32.partialorder %v1357, 0.0
      %vm1832 = vcmp.ge.f32.partialorder %v1359, 0.0
      %vm1833 = vcmp.ge.f32.partialorder %v1362, 0.0
      %vm1834 = vcmp.ge.f32.partialorder %v1364, 0.0
      %vm1835 = vcmp.ge.f32.partialorder %v1367, 0.0
      %vm1836 = vcmp.ge.f32.partialorder %v1369, 0.0
      %vm1837 = vcmp.ge.f32.partialorder %v1372, 0.0
      %vm1838 = vcmp.ge.f32.partialorder %v1374, 0.0
      %vm1839 = vcmp.ge.f32.partialorder %v1377, 0.0
      %vm1840 = vcmp.ge.f32.partialorder %v1379, 0.0
      %vm1841 = vcmp.ge.f32.partialorder %v1382, 0.0
      %vm1842 = vcmp.ge.f32.partialorder %v1384, 0.0
      %vm1843 = vcmp.ge.f32.partialorder %v1387, 0.0
      %vm1844 = vcmp.ge.f32.partialorder %v1389, 0.0
      %vm1845 = vcmp.ge.f32.partialorder %v1392, 0.0
      %vm1846 = vcmp.ge.f32.partialorder %v1394, 0.0
      %vm1847 = vcmp.ge.f32.partialorder %v1397, 0.0
      %vm1848 = vcmp.ge.f32.partialorder %v1399, 0.0
      %vm1849 = vcmp.ge.f32.partialorder %v1402, 0.0
      %vm1850 = vcmp.ge.f32.partialorder %v1404, 0.0
      %vm1851 = vcmp.ge.f32.partialorder %v1407, 0.0
      %vm1852 = vcmp.ge.f32.partialorder %v1409, 0.0
      %vm1853 = vcmp.ge.f32.partialorder %v1412, 0.0
      %vm1854 = vcmp.ge.f32.partialorder %v1414, 0.0
      %vm1855 = vcmp.ge.f32.partialorder %v1417, 0.0
      %vm1856 = vcmp.ge.f32.partialorder %v1419, 0.0
      %vm1857 = vcmp.ge.f32.partialorder %v1422, 0.0
      %vm1858 = vcmp.ge.f32.partialorder %v1424, 0.0
      %vm1859 = vcmp.ge.f32.partialorder %v1427, 0.0
      %vm1860 = vcmp.ge.f32.partialorder %v1429, 0.0
      %vm1861 = vcmp.ge.f32.partialorder %v1432, 0.0
      %vm1862 = vcmp.ge.f32.partialorder %v1434, 0.0
      %vm1863 = vcmp.ge.f32.partialorder %v1437, 0.0
      %vm1864 = vcmp.ge.f32.partialorder %v1439, 0.0
      %vm1865 = vcmp.ge.f32.partialorder %v1442, 0.0
      %vm1866 = vcmp.ge.f32.partialorder %v1444, 0.0
      %vm1867 = vcmp.ge.f32.partialorder %v1447, 0.0
      %vm1868 = vcmp.ge.f32.partialorder %v1449, 0.0
      %vm1869 = vcmp.ge.f32.partialorder %v1452, 0.0
      %vm1870 = vcmp.ge.f32.partialorder %v1454, 0.0
      %vm1871 = vcmp.ge.f32.partialorder %v1457, 0.0
      %vm1872 = vcmp.ge.f32.partialorder %v1459, 0.0
      %vm1873 = vcmp.ge.f32.partialorder %v1462, 0.0
      %vm1874 = vcmp.ge.f32.partialorder %v1464, 0.0
      %vm1875 = vcmp.ge.f32.partialorder %v1467, 0.0
      %vm1876 = vcmp.ge.f32.partialorder %v1469, 0.0
      %vm1877 = vcmp.ge.f32.partialorder %v1472, 0.0
      %vm1878 = vcmp.ge.f32.partialorder %v1474, 0.0
      %vm1879 = vcmp.ge.f32.partialorder %v1477, 0.0
      %vm1880 = vcmp.ge.f32.partialorder %v1479, 0.0
      %vm1881 = vcmp.ge.f32.partialorder %v1482, 0.0
      %vm1882 = vcmp.ge.f32.partialorder %v1484, 0.0
      %vm1883 = vcmp.ge.f32.partialorder %v1487, 0.0
      %vm1884 = vcmp.ge.f32.partialorder %v1489, 0.0
      %vm1885 = vcmp.ge.f32.partialorder %v1492, 0.0
      %vm1886 = vcmp.ge.f32.partialorder %v1494, 0.0
      %vm1887 = vcmp.ge.f32.partialorder %v1497, 0.0
      %vm1888 = vcmp.ge.f32.partialorder %v1499, 0.0
      %vm1889 = vcmp.ge.f32.partialorder %v1502, 0.0
      %vm1890 = vcmp.ge.f32.partialorder %v1504, 0.0
      %vm1891 = vcmp.ge.f32.partialorder %v1507, 0.0
      %vm1892 = vcmp.ge.f32.partialorder %v1509, 0.0
      %vm1893 = vcmp.ge.f32.partialorder %v1512, 0.0
      %vm1894 = vcmp.ge.f32.partialorder %v1514, 0.0
      %vm1895 = vcmp.ge.f32.partialorder %v1517, 0.0
      %vm1896 = vcmp.ge.f32.partialorder %v1519, 0.0
      %vm1897 = vcmp.ge.f32.partialorder %v1522, 0.0
      %vm1898 = vcmp.ge.f32.partialorder %v1524, 0.0
      %vm1899 = vcmp.ge.f32.partialorder %v1527, 0.0
      %vm1900 = vcmp.ge.f32.partialorder %v1529, 0.0
      %vm1901 = vcmp.ge.f32.partialorder %v1532, 0.0
      %vm1902 = vcmp.ge.f32.partialorder %v1534, 0.0
      %vm1903 = vcmp.ge.f32.partialorder %v1537, 0.0
      %vm1904 = vcmp.ge.f32.partialorder %v1539, 0.0
      %vm1905 = vcmp.ge.f32.partialorder %v1542, 0.0
      %vm1906 = vcmp.ge.f32.partialorder %v1544, 0.0
      %vm1907 = vcmp.ge.f32.partialorder %v1547, 0.0
      %vm1908 = vcmp.ge.f32.partialorder %v1549, 0.0
      %vm1909 = vcmp.ge.f32.partialorder %v1552, 0.0
      %vm1910 = vcmp.ge.f32.partialorder %v1554, 0.0
      %vm1911 = vcmp.ge.f32.partialorder %v1557, 0.0
      %vm1912 = vcmp.ge.f32.partialorder %v1559, 0.0
      %vm1913 = vcmp.ge.f32.partialorder %v1562, 0.0
      %vm1914 = vcmp.ge.f32.partialorder %v1564, 0.0
      %vm1915 = vcmp.ge.f32.partialorder %v1567, 0.0
      %vm1916 = vcmp.ge.f32.partialorder %v1569, 0.0
      %vm1917 = vcmp.ge.f32.partialorder %v1572, 0.0
      %vm1918 = vcmp.ge.f32.partialorder %v1574, 0.0
      %vm1919 = vcmp.ge.f32.partialorder %v1577, 0.0
      %vm1920 = vcmp.ge.f32.partialorder %v1579, 0.0
      %vm1921 = vcmp.ge.f32.partialorder %v1582, 0.0
      %vm1922 = vcmp.ge.f32.partialorder %v1584, 0.0
      %vm1923 = vcmp.ge.f32.partialorder %v1587, 0.0
      %vm1924 = vcmp.ge.f32.partialorder %v1589, 0.0
      %vm1925 = vcmp.ge.f32.partialorder %v1592, 0.0
      %vm1926 = vcmp.ge.f32.partialorder %v1594, 0.0
      %vm1927 = vcmp.ge.f32.partialorder %v1597, 0.0
      %vm1928 = vcmp.ge.f32.partialorder %v1599, 0.0
      %vm1929 = vcmp.ge.f32.partialorder %v1602, 0.0
      %vm1930 = vcmp.ge.f32.partialorder %v1604, 0.0
      %vm1931 = vcmp.ge.f32.partialorder %v1607, 0.0
      %vm1932 = vcmp.ge.f32.partialorder %v1609, 0.0
      %vm1933 = vcmp.ge.f32.partialorder %v1612, 0.0
      %vm1934 = vcmp.ge.f32.partialorder %v1614, 0.0
      %vm1935 = vcmp.ge.f32.partialorder %v1617, 0.0
      %vm1936 = vcmp.ge.f32.partialorder %v1619, 0.0
      %vm1937 = vcmp.ge.f32.partialorder %v1622, 0.0
      %vm1938 = vcmp.ge.f32.partialorder %v1624, 0.0
      %vm1939 = vcmp.ge.f32.partialorder %v1627, 0.0
      %vm1940 = vcmp.ge.f32.partialorder %v1629, 0.0
      %vm1941 = vcmp.ge.f32.partialorder %v1632, 0.0
      %vm1942 = vcmp.ge.f32.partialorder %v1634, 0.0
      %vm1943 = vcmp.ge.f32.partialorder %v1637, 0.0
      %vm1944 = vcmp.ge.f32.partialorder %v1639, 0.0
      %vm1945 = vcmp.ge.f32.partialorder %v1642, 0.0
      %vm1946 = vcmp.ge.f32.partialorder %v1644, 0.0
      %vm1947 = vcmp.ge.f32.partialorder %v1647, 0.0
      %vm1948 = vcmp.ge.f32.partialorder %v1649, 0.0
      %vm1949 = vcmp.ge.f32.partialorder %v1652, 0.0
      %vm1950 = vcmp.ge.f32.partialorder %v1654, 0.0
      %vm1951 = vcmp.ge.f32.partialorder %v1657, 0.0
      %vm1952 = vcmp.ge.f32.partialorder %v1659, 0.0
      %vm1953 = vcmp.ge.f32.partialorder %v1662, 0.0
      %vm1954 = vcmp.ge.f32.partialorder %v1664, 0.0
      %vm1955 = vcmp.ge.f32.partialorder %v1667, 0.0
      %vm1956 = vcmp.ge.f32.partialorder %v1669, 0.0
      %vm1957 = vcmp.ge.f32.partialorder %v1672, 0.0
      %vm1958 = vcmp.ge.f32.partialorder %v1674, 0.0
      %vm1959 = vcmp.ge.f32.partialorder %v1677, 0.0
      %vm1960 = vcmp.ge.f32.partialorder %v1679, 0.0
      %vm1961 = vcmp.ge.f32.partialorder %v1682, 0.0
      %vm1962 = vcmp.ge.f32.partialorder %v1684, 0.0
      %vm1963 = vcmp.ge.f32.partialorder %v1687, 0.0
      %vm1964 = vcmp.ge.f32.partialorder %v1689, 0.0
      %vm1965 = vcmp.ge.f32.partialorder %v1692, 0.0
      %vm1966 = vcmp.ge.f32.partialorder %v1694, 0.0
      %vm1967 = vcmp.ge.f32.partialorder %v1697, 0.0
      %vm1968 = vcmp.ge.f32.partialorder %v1699, 0.0
      %vm1969 = vcmp.ge.f32.partialorder %v1702, 0.0
      %vm1970 = vcmp.ge.f32.partialorder %v1704, 0.0
      %vm1971 = vcmp.ge.f32.partialorder %v1707, 0.0
      %vm1972 = vcmp.ge.f32.partialorder %v1709, 0.0
      %vm1973 = vcmp.ge.f32.partialorder %v1712, 0.0
      %vm1974 = vcmp.ge.f32.partialorder %v1714, 0.0
      %vm1975 = vcmp.ge.f32.partialorder %v1717, 0.0
      %vm1976 = vcmp.ge.f32.partialorder %v1719, 0.0
      %v1977 = vmul.f32 %v1082, 0.01
      %v1978 = vmul.f32 %v1084, 0.01
      %v1979 = vmul.f32 %v1087, 0.01
      %v1980 = vmul.f32 %v1089, 0.01
      %v1981 = vmul.f32 %v1092, 0.01
      %v1982 = vmul.f32 %v1094, 0.01
      %v1983 = vmul.f32 %v1097, 0.01
      %v1984 = vmul.f32 %v1099, 0.01
      %v1985 = vmul.f32 %v1102, 0.01
      %v1986 = vmul.f32 %v1104, 0.01
      %v1987 = vmul.f32 %v1107, 0.01
      %v1988 = vmul.f32 %v1109, 0.01
      %v1989 = vmul.f32 %v1112, 0.01
      %v1990 = vmul.f32 %v1114, 0.01
      %v1991 = vmul.f32 %v1117, 0.01
      %v1992 = vmul.f32 %v1119, 0.01
      %v1993 = vmul.f32 %v1122, 0.01
      %v1994 = vmul.f32 %v1124, 0.01
      %v1995 = vmul.f32 %v1127, 0.01
      %v1996 = vmul.f32 %v1129, 0.01
      %v1997 = vmul.f32 %v1132, 0.01
      %v1998 = vmul.f32 %v1134, 0.01
      %v1999 = vmul.f32 %v1137, 0.01
      %v2000 = vmul.f32 %v1139, 0.01
      %v2001 = vmul.f32 %v1142, 0.01
      %v2002 = vmul.f32 %v1144, 0.01
      %v2003 = vmul.f32 %v1147, 0.01
      %v2004 = vmul.f32 %v1149, 0.01
      %v2005 = vmul.f32 %v1152, 0.01
      %v2006 = vmul.f32 %v1154, 0.01
      %v2007 = vmul.f32 %v1157, 0.01
      %v2008 = vmul.f32 %v1159, 0.01
      %v2009 = vmul.f32 %v1162, 0.01
      %v2010 = vmul.f32 %v1164, 0.01
      %v2011 = vmul.f32 %v1167, 0.01
      %v2012 = vmul.f32 %v1169, 0.01
      %v2013 = vmul.f32 %v1172, 0.01
      %v2014 = vmul.f32 %v1174, 0.01
      %v2015 = vmul.f32 %v1177, 0.01
      %v2016 = vmul.f32 %v1179, 0.01
      %v2017 = vmul.f32 %v1182, 0.01
      %v2018 = vmul.f32 %v1184, 0.01
      %v2019 = vmul.f32 %v1187, 0.01
      %v2020 = vmul.f32 %v1189, 0.01
      %v2021 = vmul.f32 %v1192, 0.01
      %v2022 = vmul.f32 %v1194, 0.01
      %v2023 = vmul.f32 %v1197, 0.01
      %v2024 = vmul.f32 %v1199, 0.01
      %v2025 = vmul.f32 %v1202, 0.01
      %v2026 = vmul.f32 %v1204, 0.01
      %v2027 = vmul.f32 %v1207, 0.01
      %v2028 = vmul.f32 %v1209, 0.01
      %v2029 = vmul.f32 %v1212, 0.01
      %v2030 = vmul.f32 %v1214, 0.01
      %v2031 = vmul.f32 %v1217, 0.01
      %v2032 = vmul.f32 %v1219, 0.01
      %v2033 = vmul.f32 %v1222, 0.01
      %v2034 = vmul.f32 %v1224, 0.01
      %v2035 = vmul.f32 %v1227, 0.01
      %v2036 = vmul.f32 %v1229, 0.01
      %v2037 = vmul.f32 %v1232, 0.01
      %v2038 = vmul.f32 %v1234, 0.01
      %v2039 = vmul.f32 %v1237, 0.01
      %v2040 = vmul.f32 %v1239, 0.01
      %v2041 = vmul.f32 %v1242, 0.01
      %v2042 = vmul.f32 %v1244, 0.01
      %v2043 = vmul.f32 %v1247, 0.01
      %v2044 = vmul.f32 %v1249, 0.01
      %v2045 = vmul.f32 %v1252, 0.01
      %v2046 = vmul.f32 %v1254, 0.01
      %v2047 = vmul.f32 %v1257, 0.01
      %v2048 = vmul.f32 %v1259, 0.01
      %v2049 = vmul.f32 %v1262, 0.01
      %v2050 = vmul.f32 %v1264, 0.01
      %v2051 = vmul.f32 %v1267, 0.01
      %v2052 = vmul.f32 %v1269, 0.01
      %v2053 = vmul.f32 %v1272, 0.01
      %v2054 = vmul.f32 %v1274, 0.01
      %v2055 = vmul.f32 %v1277, 0.01
      %v2056 = vmul.f32 %v1279, 0.01
      %v2057 = vmul.f32 %v1282, 0.01
      %v2058 = vmul.f32 %v1284, 0.01
      %v2059 = vmul.f32 %v1287, 0.01
      %v2060 = vmul.f32 %v1289, 0.01
      %v2061 = vmul.f32 %v1292, 0.01
      %v2062 = vmul.f32 %v1294, 0.01
      %v2063 = vmul.f32 %v1297, 0.01
      %v2064 = vmul.f32 %v1299, 0.01
      %v2065 = vmul.f32 %v1302, 0.01
      %v2066 = vmul.f32 %v1304, 0.01
      %v2067 = vmul.f32 %v1307, 0.01
      %v2068 = vmul.f32 %v1309, 0.01
      %v2069 = vmul.f32 %v1312, 0.01
      %v2070 = vmul.f32 %v1314, 0.01
      %v2071 = vmul.f32 %v1317, 0.01
      %v2072 = vmul.f32 %v1319, 0.01
      %v2073 = vmul.f32 %v1322, 0.01
      %v2074 = vmul.f32 %v1324, 0.01
      %v2075 = vmul.f32 %v1327, 0.01
      %v2076 = vmul.f32 %v1329, 0.01
      %v2077 = vmul.f32 %v1332, 0.01
      %v2078 = vmul.f32 %v1334, 0.01
      %v2079 = vmul.f32 %v1337, 0.01
      %v2080 = vmul.f32 %v1339, 0.01
      %v2081 = vmul.f32 %v1342, 0.01
      %v2082 = vmul.f32 %v1344, 0.01
      %v2083 = vmul.f32 %v1347, 0.01
      %v2084 = vmul.f32 %v1349, 0.01
      %v2085 = vmul.f32 %v1352, 0.01
      %v2086 = vmul.f32 %v1354, 0.01
      %v2087 = vmul.f32 %v1357, 0.01
      %v2088 = vmul.f32 %v1359, 0.01
      %v2089 = vmul.f32 %v1362, 0.01
      %v2090 = vmul.f32 %v1364, 0.01
      %v2091 = vmul.f32 %v1367, 0.01
      %v2092 = vmul.f32 %v1369, 0.01
      %v2093 = vmul.f32 %v1372, 0.01
      %v2094 = vmul.f32 %v1374, 0.01
      %v2095 = vmul.f32 %v1377, 0.01
      %v2096 = vmul.f32 %v1379, 0.01
      %v2097 = vmul.f32 %v1382, 0.01
      %v2098 = vmul.f32 %v1384, 0.01
      %v2099 = vmul.f32 %v1387, 0.01
      %v2100 = vmul.f32 %v1389, 0.01
      %v2101 = vmul.f32 %v1392, 0.01
      %v2102 = vmul.f32 %v1394, 0.01
      %v2103 = vmul.f32 %v1397, 0.01
      %v2104 = vmul.f32 %v1399, 0.01
      %v2105 = vmul.f32 %v1402, 0.01
      %v2106 = vmul.f32 %v1404, 0.01
      %v2107 = vmul.f32 %v1407, 0.01
      %v2108 = vmul.f32 %v1409, 0.01
      %v2109 = vmul.f32 %v1412, 0.01
      %v2110 = vmul.f32 %v1414, 0.01
      %v2111 = vmul.f32 %v1417, 0.01
      %v2112 = vmul.f32 %v1419, 0.01
      %v2113 = vmul.f32 %v1422, 0.01
      %v2114 = vmul.f32 %v1424, 0.01
      %v2115 = vmul.f32 %v1427, 0.01
      %v2116 = vmul.f32 %v1429, 0.01
      %v2117 = vmul.f32 %v1432, 0.01
      %v2118 = vmul.f32 %v1434, 0.01
      %v2119 = vmul.f32 %v1437, 0.01
      %v2120 = vmul.f32 %v1439, 0.01
      %v2121 = vmul.f32 %v1442, 0.01
      %v2122 = vmul.f32 %v1444, 0.01
      %v2123 = vmul.f32 %v1447, 0.01
      %v2124 = vmul.f32 %v1449, 0.01
      %v2125 = vmul.f32 %v1452, 0.01
      %v2126 = vmul.f32 %v1454, 0.01
      %v2127 = vmul.f32 %v1457, 0.01
      %v2128 = vmul.f32 %v1459, 0.01
      %v2129 = vmul.f32 %v1462, 0.01
      %v2130 = vmul.f32 %v1464, 0.01
      %v2131 = vmul.f32 %v1467, 0.01
      %v2132 = vmul.f32 %v1469, 0.01
      %v2133 = vmul.f32 %v1472, 0.01
      %v2134 = vmul.f32 %v1474, 0.01
      %v2135 = vmul.f32 %v1477, 0.01
      %v2136 = vmul.f32 %v1479, 0.01
      %v2137 = vmul.f32 %v1482, 0.01
      %v2138 = vmul.f32 %v1484, 0.01
      %v2139 = vmul.f32 %v1487, 0.01
      %v2140 = vmul.f32 %v1489, 0.01
      %v2141 = vmul.f32 %v1492, 0.01
      %v2142 = vmul.f32 %v1494, 0.01
      %v2143 = vmul.f32 %v1497, 0.01
      %v2144 = vmul.f32 %v1499, 0.01
      %v2145 = vmul.f32 %v1502, 0.01
      %v2146 = vmul.f32 %v1504, 0.01
      %v2147 = vmul.f32 %v1507, 0.01
      %v2148 = vmul.f32 %v1509, 0.01
      %v2149 = vmul.f32 %v1512, 0.01
      %v2150 = vmul.f32 %v1514, 0.01
      %v2151 = vmul.f32 %v1517, 0.01
      %v2152 = vmul.f32 %v1519, 0.01
      %v2153 = vmul.f32 %v1522, 0.01
      %v2154 = vmul.f32 %v1524, 0.01
      %v2155 = vmul.f32 %v1527, 0.01
      %v2156 = vmul.f32 %v1529, 0.01
      %v2157 = vmul.f32 %v1532, 0.01
      %v2158 = vmul.f32 %v1534, 0.01
      %v2159 = vmul.f32 %v1537, 0.01
      %v2160 = vmul.f32 %v1539, 0.01
      %v2161 = vmul.f32 %v1542, 0.01
      %v2162 = vmul.f32 %v1544, 0.01
      %v2163 = vmul.f32 %v1547, 0.01
      %v2164 = vmul.f32 %v1549, 0.01
      %v2165 = vmul.f32 %v1552, 0.01
      %v2166 = vmul.f32 %v1554, 0.01
      %v2167 = vmul.f32 %v1557, 0.01
      %v2168 = vmul.f32 %v1559, 0.01
      %v2169 = vmul.f32 %v1562, 0.01
      %v2170 = vmul.f32 %v1564, 0.01
      %v2171 = vmul.f32 %v1567, 0.01
      %v2172 = vmul.f32 %v1569, 0.01
      %v2173 = vmul.f32 %v1572, 0.01
      %v2174 = vmul.f32 %v1574, 0.01
      %v2175 = vmul.f32 %v1577, 0.01
      %v2176 = vmul.f32 %v1579, 0.01
      %v2177 = vmul.f32 %v1582, 0.01
      %v2178 = vmul.f32 %v1584, 0.01
      %v2179 = vmul.f32 %v1587, 0.01
      %v2180 = vmul.f32 %v1589, 0.01
      %v2181 = vmul.f32 %v1592, 0.01
      %v2182 = vmul.f32 %v1594, 0.01
      %v2183 = vmul.f32 %v1597, 0.01
      %v2184 = vmul.f32 %v1599, 0.01
      %v2185 = vmul.f32 %v1602, 0.01
      %v2186 = vmul.f32 %v1604, 0.01
      %v2187 = vmul.f32 %v1607, 0.01
      %v2188 = vmul.f32 %v1609, 0.01
      %v2189 = vmul.f32 %v1612, 0.01
      %v2190 = vmul.f32 %v1614, 0.01
      %v2191 = vmul.f32 %v1617, 0.01
      %v2192 = vmul.f32 %v1619, 0.01
      %v2193 = vmul.f32 %v1622, 0.01
      %v2194 = vmul.f32 %v1624, 0.01
      %v2195 = vmul.f32 %v1627, 0.01
      %v2196 = vmul.f32 %v1629, 0.01
      %v2197 = vmul.f32 %v1632, 0.01
      %v2198 = vmul.f32 %v1634, 0.01
      %v2199 = vmul.f32 %v1637, 0.01
      %v2200 = vmul.f32 %v1639, 0.01
      %v2201 = vmul.f32 %v1642, 0.01
      %v2202 = vmul.f32 %v1644, 0.01
      %v2203 = vmul.f32 %v1647, 0.01
      %v2204 = vmul.f32 %v1649, 0.01
      %v2205 = vmul.f32 %v1652, 0.01
      %v2206 = vmul.f32 %v1654, 0.01
      %v2207 = vmul.f32 %v1657, 0.01
      %v2208 = vmul.f32 %v1659, 0.01
      %v2209 = vmul.f32 %v1662, 0.01
      %v2210 = vmul.f32 %v1664, 0.01
      %v2211 = vmul.f32 %v1667, 0.01
      %v2212 = vmul.f32 %v1669, 0.01
      %v2213 = vmul.f32 %v1672, 0.01
      %v2214 = vmul.f32 %v1674, 0.01
      %v2215 = vmul.f32 %v1677, 0.01
      %v2216 = vmul.f32 %v1679, 0.01
      %v2217 = vmul.f32 %v1682, 0.01
      %v2218 = vmul.f32 %v1684, 0.01
      %v2219 = vmul.f32 %v1687, 0.01
      %v2220 = vmul.f32 %v1689, 0.01
      %v2221 = vmul.f32 %v1692, 0.01
      %v2222 = vmul.f32 %v1694, 0.01
      %v2223 = vmul.f32 %v1697, 0.01
      %v2224 = vmul.f32 %v1699, 0.01
      %v2225 = vmul.f32 %v1702, 0.01
      %v2226 = vmul.f32 %v1704, 0.01
      %v2227 = vmul.f32 %v1707, 0.01
      %v2228 = vmul.f32 %v1709, 0.01
      %v2229 = vmul.f32 %v1712, 0.01
      %v2230 = vmul.f32 %v1714, 0.01
      %v2231 = vmul.f32 %v1717, 0.01
      %v2232 = vmul.f32 %v1719, 0.01
      %v2233 = vsel %vm1721, %v1082, %v1977
      %v2234 = vsel %vm1722, %v1084, %v1978
      %v2235 = vsel %vm1723, %v1087, %v1979
      %v2236 = vsel %vm1724, %v1089, %v1980
      %v2237 = vsel %vm1725, %v1092, %v1981
      %v2238 = vsel %vm1726, %v1094, %v1982
      %v2239 = vsel %vm1727, %v1097, %v1983
      %v2240 = vsel %vm1728, %v1099, %v1984
      %v2241 = vsel %vm1729, %v1102, %v1985
      %v2242 = vsel %vm1730, %v1104, %v1986
      %v2243 = vsel %vm1731, %v1107, %v1987
      %v2244 = vsel %vm1732, %v1109, %v1988
      %v2245 = vsel %vm1733, %v1112, %v1989
      %v2246 = vsel %vm1734, %v1114, %v1990
      %v2247 = vsel %vm1735, %v1117, %v1991
      %v2248 = vsel %vm1736, %v1119, %v1992
      %v2249 = vsel %vm1737, %v1122, %v1993
      %v2250 = vsel %vm1738, %v1124, %v1994
      %v2251 = vsel %vm1739, %v1127, %v1995
      %v2252 = vsel %vm1740, %v1129, %v1996
      %v2253 = vsel %vm1741, %v1132, %v1997
      %v2254 = vsel %vm1742, %v1134, %v1998
      %v2255 = vsel %vm1743, %v1137, %v1999
      %v2256 = vsel %vm1744, %v1139, %v2000
      %v2257 = vsel %vm1745, %v1142, %v2001
      %v2258 = vsel %vm1746, %v1144, %v2002
      %v2259 = vsel %vm1747, %v1147, %v2003
      %v2260 = vsel %vm1748, %v1149, %v2004
      %v2261 = vsel %vm1749, %v1152, %v2005
      %v2262 = vsel %vm1750, %v1154, %v2006
      %v2263 = vsel %vm1751, %v1157, %v2007
      %v2264 = vsel %vm1752, %v1159, %v2008
      %v2265 = vsel %vm1753, %v1162, %v2009
      %v2266 = vsel %vm1754, %v1164, %v2010
      %v2267 = vsel %vm1755, %v1167, %v2011
      %v2268 = vsel %vm1756, %v1169, %v2012
      %v2269 = vsel %vm1757, %v1172, %v2013
      %v2270 = vsel %vm1758, %v1174, %v2014
      %v2271 = vsel %vm1759, %v1177, %v2015
      %v2272 = vsel %vm1760, %v1179, %v2016
      %v2273 = vsel %vm1761, %v1182, %v2017
      %v2274 = vsel %vm1762, %v1184, %v2018
      %v2275 = vsel %vm1763, %v1187, %v2019
      %v2276 = vsel %vm1764, %v1189, %v2020
      %v2277 = vsel %vm1765, %v1192, %v2021
      %v2278 = vsel %vm1766, %v1194, %v2022
      %v2279 = vsel %vm1767, %v1197, %v2023
      %v2280 = vsel %vm1768, %v1199, %v2024
      %v2281 = vsel %vm1769, %v1202, %v2025
      %v2282 = vsel %vm1770, %v1204, %v2026
      %v2283 = vsel %vm1771, %v1207, %v2027
      %v2284 = vsel %vm1772, %v1209, %v2028
      %v2285 = vsel %vm1773, %v1212, %v2029
      %v2286 = vsel %vm1774, %v1214, %v2030
      %v2287 = vsel %vm1775, %v1217, %v2031
      %v2288 = vsel %vm1776, %v1219, %v2032
      %v2289 = vsel %vm1777, %v1222, %v2033
      %v2290 = vsel %vm1778, %v1224, %v2034
      %v2291 = vsel %vm1779, %v1227, %v2035
      %v2292 = vsel %vm1780, %v1229, %v2036
      %v2293 = vsel %vm1781, %v1232, %v2037
      %v2294 = vsel %vm1782, %v1234, %v2038
      %v2295 = vsel %vm1783, %v1237, %v2039
      %v2296 = vsel %vm1784, %v1239, %v2040
      %v2297 = vsel %vm1785, %v1242, %v2041
      %v2298 = vsel %vm1786, %v1244, %v2042
      %v2299 = vsel %vm1787, %v1247, %v2043
      %v2300 = vsel %vm1788, %v1249, %v2044
      %v2301 = vsel %vm1789, %v1252, %v2045
      %v2302 = vsel %vm1790, %v1254, %v2046
      %v2303 = vsel %vm1791, %v1257, %v2047
      %v2304 = vsel %vm1792, %v1259, %v2048
      %v2305 = vsel %vm1793, %v1262, %v2049
      %v2306 = vsel %vm1794, %v1264, %v2050
      %v2307 = vsel %vm1795, %v1267, %v2051
      %v2308 = vsel %vm1796, %v1269, %v2052
      %v2309 = vsel %vm1797, %v1272, %v2053
      %v2310 = vsel %vm1798, %v1274, %v2054
      %v2311 = vsel %vm1799, %v1277, %v2055
      %v2312 = vsel %vm1800, %v1279, %v2056
      %v2313 = vsel %vm1801, %v1282, %v2057
      %v2314 = vsel %vm1802, %v1284, %v2058
      %v2315 = vsel %vm1803, %v1287, %v2059
      %v2316 = vsel %vm1804, %v1289, %v2060
      %v2317 = vsel %vm1805, %v1292, %v2061
      %v2318 = vsel %vm1806, %v1294, %v2062
      %v2319 = vsel %vm1807, %v1297, %v2063
      %v2320 = vsel %vm1808, %v1299, %v2064
      %v2321 = vsel %vm1809, %v1302, %v2065
      %v2322 = vsel %vm1810, %v1304, %v2066
      %v2323 = vsel %vm1811, %v1307, %v2067
      %v2324 = vsel %vm1812, %v1309, %v2068
      %v2325 = vsel %vm1813, %v1312, %v2069
      %v2326 = vsel %vm1814, %v1314, %v2070
      %v2327 = vsel %vm1815, %v1317, %v2071
      %v2328 = vsel %vm1816, %v1319, %v2072
      %v2329 = vsel %vm1817, %v1322, %v2073
      %v2330 = vsel %vm1818, %v1324, %v2074
      %v2331 = vsel %vm1819, %v1327, %v2075
      %v2332 = vsel %vm1820, %v1329, %v2076
      %v2333 = vsel %vm1821, %v1332, %v2077
      %v2334 = vsel %vm1822, %v1334, %v2078
      %v2335 = vsel %vm1823, %v1337, %v2079
      %v2336 = vsel %vm1824, %v1339, %v2080
      %v2337 = vsel %vm1825, %v1342, %v2081
      %v2338 = vsel %vm1826, %v1344, %v2082
      %v2339 = vsel %vm1827, %v1347, %v2083
      %v2340 = vsel %vm1828, %v1349, %v2084
      %v2341 = vsel %vm1829, %v1352, %v2085
      %v2342 = vsel %vm1830, %v1354, %v2086
      %v2343 = vsel %vm1831, %v1357, %v2087
      %v2344 = vsel %vm1832, %v1359, %v2088
      %v2345 = vsel %vm1833, %v1362, %v2089
      %v2346 = vsel %vm1834, %v1364, %v2090
      %v2347 = vsel %vm1835, %v1367, %v2091
      %v2348 = vsel %vm1836, %v1369, %v2092
      %v2349 = vsel %vm1837, %v1372, %v2093
      %v2350 = vsel %vm1838, %v1374, %v2094
      %v2351 = vsel %vm1839, %v1377, %v2095
      %v2352 = vsel %vm1840, %v1379, %v2096
      %v2353 = vsel %vm1841, %v1382, %v2097
      %v2354 = vsel %vm1842, %v1384, %v2098
      %v2355 = vsel %vm1843, %v1387, %v2099
      %v2356 = vsel %vm1844, %v1389, %v2100
      %v2357 = vsel %vm1845, %v1392, %v2101
      %v2358 = vsel %vm1846, %v1394, %v2102
      %v2359 = vsel %vm1847, %v1397, %v2103
      %v2360 = vsel %vm1848, %v1399, %v2104
      %v2361 = vsel %vm1849, %v1402, %v2105
      %v2362 = vsel %vm1850, %v1404, %v2106
      %v2363 = vsel %vm1851, %v1407, %v2107
      %v2364 = vsel %vm1852, %v1409, %v2108
      %v2365 = vsel %vm1853, %v1412, %v2109
      %v2366 = vsel %vm1854, %v1414, %v2110
      %v2367 = vsel %vm1855, %v1417, %v2111
      %v2368 = vsel %vm1856, %v1419, %v2112
      %v2369 = vsel %vm1857, %v1422, %v2113
      %v2370 = vsel %vm1858, %v1424, %v2114
      %v2371 = vsel %vm1859, %v1427, %v2115
      %v2372 = vsel %vm1860, %v1429, %v2116
      %v2373 = vsel %vm1861, %v1432, %v2117
      %v2374 = vsel %vm1862, %v1434, %v2118
      %v2375 = vsel %vm1863, %v1437, %v2119
      %v2376 = vsel %vm1864, %v1439, %v2120
      %v2377 = vsel %vm1865, %v1442, %v2121
      %v2378 = vsel %vm1866, %v1444, %v2122
      %v2379 = vsel %vm1867, %v1447, %v2123
      %v2380 = vsel %vm1868, %v1449, %v2124
      %v2381 = vsel %vm1869, %v1452, %v2125
      %v2382 = vsel %vm1870, %v1454, %v2126
      %v2383 = vsel %vm1871, %v1457, %v2127
      %v2384 = vsel %vm1872, %v1459, %v2128
      %v2385 = vsel %vm1873, %v1462, %v2129
      %v2386 = vsel %vm1874, %v1464, %v2130
      %v2387 = vsel %vm1875, %v1467, %v2131
      %v2388 = vsel %vm1876, %v1469, %v2132
      %v2389 = vsel %vm1877, %v1472, %v2133
      %v2390 = vsel %vm1878, %v1474, %v2134
      %v2391 = vsel %vm1879, %v1477, %v2135
      %v2392 = vsel %vm1880, %v1479, %v2136
      %v2393 = vsel %vm1881, %v1482, %v2137
      %v2394 = vsel %vm1882, %v1484, %v2138
      %v2395 = vsel %vm1883, %v1487, %v2139
      %v2396 = vsel %vm1884, %v1489, %v2140
      %v2397 = vsel %vm1885, %v1492, %v2141
      %v2398 = vsel %vm1886, %v1494, %v2142
      %v2399 = vsel %vm1887, %v1497, %v2143
      %v2400 = vsel %vm1888, %v1499, %v2144
      %v2401 = vsel %vm1889, %v1502, %v2145
      %v2402 = vsel %vm1890, %v1504, %v2146
      %v2403 = vsel %vm1891, %v1507, %v2147
      %v2404 = vsel %vm1892, %v1509, %v2148
      %v2405 = vsel %vm1893, %v1512, %v2149
      %v2406 = vsel %vm1894, %v1514, %v2150
      %v2407 = vsel %vm1895, %v1517, %v2151
      %v2408 = vsel %vm1896, %v1519, %v2152
      %v2409 = vsel %vm1897, %v1522, %v2153
      %v2410 = vsel %vm1898, %v1524, %v2154
      %v2411 = vsel %vm1899, %v1527, %v2155
      %v2412 = vsel %vm1900, %v1529, %v2156
      %v2413 = vsel %vm1901, %v1532, %v2157
      %v2414 = vsel %vm1902, %v1534, %v2158
      %v2415 = vsel %vm1903, %v1537, %v2159
      %v2416 = vsel %vm1904, %v1539, %v2160
      %v2417 = vsel %vm1905, %v1542, %v2161
      %v2418 = vsel %vm1906, %v1544, %v2162
      %v2419 = vsel %vm1907, %v1547, %v2163
      %v2420 = vsel %vm1908, %v1549, %v2164
      %v2421 = vsel %vm1909, %v1552, %v2165
      %v2422 = vsel %vm1910, %v1554, %v2166
      %v2423 = vsel %vm1911, %v1557, %v2167
      %v2424 = vsel %vm1912, %v1559, %v2168
      %v2425 = vsel %vm1913, %v1562, %v2169
      %v2426 = vsel %vm1914, %v1564, %v2170
      %v2427 = vsel %vm1915, %v1567, %v2171
      %v2428 = vsel %vm1916, %v1569, %v2172
      %v2429 = vsel %vm1917, %v1572, %v2173
      %v2430 = vsel %vm1918, %v1574, %v2174
      %v2431 = vsel %vm1919, %v1577, %v2175
      %v2432 = vsel %vm1920, %v1579, %v2176
      %v2433 = vsel %vm1921, %v1582, %v2177
      %v2434 = vsel %vm1922, %v1584, %v2178
      %v2435 = vsel %vm1923, %v1587, %v2179
      %v2436 = vsel %vm1924, %v1589, %v2180
      %v2437 = vsel %vm1925, %v1592, %v2181
      %v2438 = vsel %vm1926, %v1594, %v2182
      %v2439 = vsel %vm1927, %v1597, %v2183
      %v2440 = vsel %vm1928, %v1599, %v2184
      %v2441 = vsel %vm1929, %v1602, %v2185
      %v2442 = vsel %vm1930, %v1604, %v2186
      %v2443 = vsel %vm1931, %v1607, %v2187
      %v2444 = vsel %vm1932, %v1609, %v2188
      %v2445 = vsel %vm1933, %v1612, %v2189
      %v2446 = vsel %vm1934, %v1614, %v2190
      %v2447 = vsel %vm1935, %v1617, %v2191
      %v2448 = vsel %vm1936, %v1619, %v2192
      %v2449 = vsel %vm1937, %v1622, %v2193
      %v2450 = vsel %vm1938, %v1624, %v2194
      %v2451 = vsel %vm1939, %v1627, %v2195
      %v2452 = vsel %vm1940, %v1629, %v2196
      %v2453 = vsel %vm1941, %v1632, %v2197
      %v2454 = vsel %vm1942, %v1634, %v2198
      %v2455 = vsel %vm1943, %v1637, %v2199
      %v2456 = vsel %vm1944, %v1639, %v2200
      %v2457 = vsel %vm1945, %v1642, %v2201
      %v2458 = vsel %vm1946, %v1644, %v2202
      %v2459 = vsel %vm1947, %v1647, %v2203
      %v2460 = vsel %vm1948, %v1649, %v2204
      %v2461 = vsel %vm1949, %v1652, %v2205
      %v2462 = vsel %vm1950, %v1654, %v2206
      %v2463 = vsel %vm1951, %v1657, %v2207
      %v2464 = vsel %vm1952, %v1659, %v2208
      %v2465 = vsel %vm1953, %v1662, %v2209
      %v2466 = vsel %vm1954, %v1664, %v2210
      %v2467 = vsel %vm1955, %v1667, %v2211
      %v2468 = vsel %vm1956, %v1669, %v2212
      %v2469 = vsel %vm1957, %v1672, %v2213
      %v2470 = vsel %vm1958, %v1674, %v2214
      %v2471 = vsel %vm1959, %v1677, %v2215
      %v2472 = vsel %vm1960, %v1679, %v2216
      %v2473 = vsel %vm1961, %v1682, %v2217
      %v2474 = vsel %vm1962, %v1684, %v2218
      %v2475 = vsel %vm1963, %v1687, %v2219
      %v2476 = vsel %vm1964, %v1689, %v2220
      %v2477 = vsel %vm1965, %v1692, %v2221
      %v2478 = vsel %vm1966, %v1694, %v2222
      %v2479 = vsel %vm1967, %v1697, %v2223
      %v2480 = vsel %vm1968, %v1699, %v2224
      %v2481 = vsel %vm1969, %v1702, %v2225
      %v2482 = vsel %vm1970, %v1704, %v2226
      %v2483 = vsel %vm1971, %v1707, %v2227
      %v2484 = vsel %vm1972, %v1709, %v2228
      %v2485 = vsel %vm1973, %v1712, %v2229
      %v2486 = vsel %vm1974, %v1714, %v2230
      %v2487 = vsel %vm1975, %v1717, %v2231
      %v2488 = vsel %vm1976, %v1719, %v2232
      %v2489 = vpack.c.bf16 %v2234, %v2233
      %v2490 = vpack.c.bf16 %v2236, %v2235
      %v2491 = vpack.c.bf16 %v2238, %v2237
      %v2492 = vpack.c.bf16 %v2240, %v2239
      %v2493 = vpack.c.bf16 %v2242, %v2241
      %v2494 = vpack.c.bf16 %v2244, %v2243
      %v2495 = vpack.c.bf16 %v2246, %v2245
      %v2496 = vpack.c.bf16 %v2248, %v2247
      %v2497 = vpack.c.bf16 %v2250, %v2249
      %v2498 = vpack.c.bf16 %v2252, %v2251
      %v2499 = vpack.c.bf16 %v2254, %v2253
      %v2500 = vpack.c.bf16 %v2256, %v2255
      %v2501 = vpack.c.bf16 %v2258, %v2257
      %v2502 = vpack.c.bf16 %v2260, %v2259
      %v2503 = vpack.c.bf16 %v2262, %v2261
      %v2504 = vpack.c.bf16 %v2264, %v2263
      %v2505 = vpack.c.bf16 %v2266, %v2265
      %v2506 = vpack.c.bf16 %v2268, %v2267
      %v2507 = vpack.c.bf16 %v2270, %v2269
      %v2508 = vpack.c.bf16 %v2272, %v2271
      %v2509 = vpack.c.bf16 %v2274, %v2273
      %v2510 = vpack.c.bf16 %v2276, %v2275
      %v2511 = vpack.c.bf16 %v2278, %v2277
      %v2512 = vpack.c.bf16 %v2280, %v2279
      %v2513 = vpack.c.bf16 %v2282, %v2281
      %v2514 = vpack.c.bf16 %v2284, %v2283
      %v2515 = vpack.c.bf16 %v2286, %v2285
      %v2516 = vpack.c.bf16 %v2288, %v2287
      %v2517 = vpack.c.bf16 %v2290, %v2289
      %v2518 = vpack.c.bf16 %v2292, %v2291
      %v2519 = vpack.c.bf16 %v2294, %v2293
      %v2520 = vpack.c.bf16 %v2296, %v2295
      %v2521 = vpack.c.bf16 %v2298, %v2297
      %v2522 = vpack.c.bf16 %v2300, %v2299
      %v2523 = vpack.c.bf16 %v2302, %v2301
      %v2524 = vpack.c.bf16 %v2304, %v2303
      %v2525 = vpack.c.bf16 %v2306, %v2305
      %v2526 = vpack.c.bf16 %v2308, %v2307
      %v2527 = vpack.c.bf16 %v2310, %v2309
      %v2528 = vpack.c.bf16 %v2312, %v2311
      %v2529 = vpack.c.bf16 %v2314, %v2313
      %v2530 = vpack.c.bf16 %v2316, %v2315
      %v2531 = vpack.c.bf16 %v2318, %v2317
      %v2532 = vpack.c.bf16 %v2320, %v2319
      %v2533 = vpack.c.bf16 %v2322, %v2321
      %v2534 = vpack.c.bf16 %v2324, %v2323
      %v2535 = vpack.c.bf16 %v2326, %v2325
      %v2536 = vpack.c.bf16 %v2328, %v2327
      %v2537 = vpack.c.bf16 %v2330, %v2329
      %v2538 = vpack.c.bf16 %v2332, %v2331
      %v2539 = vpack.c.bf16 %v2334, %v2333
      %v2540 = vpack.c.bf16 %v2336, %v2335
      %v2541 = vpack.c.bf16 %v2338, %v2337
      %v2542 = vpack.c.bf16 %v2340, %v2339
      %v2543 = vpack.c.bf16 %v2342, %v2341
      %v2544 = vpack.c.bf16 %v2344, %v2343
      %v2545 = vpack.c.bf16 %v2346, %v2345
      %v2546 = vpack.c.bf16 %v2348, %v2347
      %v2547 = vpack.c.bf16 %v2350, %v2349
      %v2548 = vpack.c.bf16 %v2352, %v2351
      %v2549 = vpack.c.bf16 %v2354, %v2353
      %v2550 = vpack.c.bf16 %v2356, %v2355
      %v2551 = vpack.c.bf16 %v2358, %v2357
      %v2552 = vpack.c.bf16 %v2360, %v2359
      %v2553 = vpack.c.bf16 %v2362, %v2361
      %v2554 = vpack.c.bf16 %v2364, %v2363
      %v2555 = vpack.c.bf16 %v2366, %v2365
      %v2556 = vpack.c.bf16 %v2368, %v2367
      %v2557 = vpack.c.bf16 %v2370, %v2369
      %v2558 = vpack.c.bf16 %v2372, %v2371
      %v2559 = vpack.c.bf16 %v2374, %v2373
      %v2560 = vpack.c.bf16 %v2376, %v2375
      %v2561 = vpack.c.bf16 %v2378, %v2377
      %v2562 = vpack.c.bf16 %v2380, %v2379
      %v2563 = vpack.c.bf16 %v2382, %v2381
      %v2564 = vpack.c.bf16 %v2384, %v2383
      %v2565 = vpack.c.bf16 %v2386, %v2385
      %v2566 = vpack.c.bf16 %v2388, %v2387
      %v2567 = vpack.c.bf16 %v2390, %v2389
      %v2568 = vpack.c.bf16 %v2392, %v2391
      %v2569 = vpack.c.bf16 %v2394, %v2393
      %v2570 = vpack.c.bf16 %v2396, %v2395
      %v2571 = vpack.c.bf16 %v2398, %v2397
      %v2572 = vpack.c.bf16 %v2400, %v2399
      %v2573 = vpack.c.bf16 %v2402, %v2401
      %v2574 = vpack.c.bf16 %v2404, %v2403
      %v2575 = vpack.c.bf16 %v2406, %v2405
      %v2576 = vpack.c.bf16 %v2408, %v2407
      %v2577 = vpack.c.bf16 %v2410, %v2409
      %v2578 = vpack.c.bf16 %v2412, %v2411
      %v2579 = vpack.c.bf16 %v2414, %v2413
      %v2580 = vpack.c.bf16 %v2416, %v2415
      %v2581 = vpack.c.bf16 %v2418, %v2417
      %v2582 = vpack.c.bf16 %v2420, %v2419
      %v2583 = vpack.c.bf16 %v2422, %v2421
      %v2584 = vpack.c.bf16 %v2424, %v2423
      %v2585 = vpack.c.bf16 %v2426, %v2425
      %v2586 = vpack.c.bf16 %v2428, %v2427
      %v2587 = vpack.c.bf16 %v2430, %v2429
      %v2588 = vpack.c.bf16 %v2432, %v2431
      %v2589 = vpack.c.bf16 %v2434, %v2433
      %v2590 = vpack.c.bf16 %v2436, %v2435
      %v2591 = vpack.c.bf16 %v2438, %v2437
      %v2592 = vpack.c.bf16 %v2440, %v2439
      %v2593 = vpack.c.bf16 %v2442, %v2441
      %v2594 = vpack.c.bf16 %v2444, %v2443
      %v2595 = vpack.c.bf16 %v2446, %v2445
      %v2596 = vpack.c.bf16 %v2448, %v2447
      %v2597 = vpack.c.bf16 %v2450, %v2449
      %v2598 = vpack.c.bf16 %v2452, %v2451
      %v2599 = vpack.c.bf16 %v2454, %v2453
      %v2600 = vpack.c.bf16 %v2456, %v2455
      %v2601 = vpack.c.bf16 %v2458, %v2457
      %v2602 = vpack.c.bf16 %v2460, %v2459
      %v2603 = vpack.c.bf16 %v2462, %v2461
      %v2604 = vpack.c.bf16 %v2464, %v2463
      %v2605 = vpack.c.bf16 %v2466, %v2465
      %v2606 = vpack.c.bf16 %v2468, %v2467
      %v2607 = vpack.c.bf16 %v2470, %v2469
      %v2608 = vpack.c.bf16 %v2472, %v2471
      %v2609 = vpack.c.bf16 %v2474, %v2473
      %v2610 = vpack.c.bf16 %v2476, %v2475
      %v2611 = vpack.c.bf16 %v2478, %v2477
      %v2612 = vpack.c.bf16 %v2480, %v2479
      %v2613 = vpack.c.bf16 %v2482, %v2481
      %v2614 = vpack.c.bf16 %v2484, %v2483
      %v2615 = vpack.c.bf16 %v2486, %v2485
      %v2616 = vpack.c.bf16 %v2488, %v2487
      %v2617 = vld [vmem:[%s3] sm:$0xf]
      %v2618 = vld [vmem:[%s3 + $0x4] sm:$0xf]
      %v2619 = vld [vmem:[%s3 + $0x8] sm:$0xf]
      %v2620 = vld [vmem:[%s3 + $0xc] sm:$0xf]
      %v2621 = vld [vmem:[%s3 + $0x10] sm:$0xf]
      %v2622 = vld [vmem:[%s3 + $0x14] sm:$0xf]
      %v2623 = vld [vmem:[%s3 + $0x18] sm:$0xf]
      %v2624 = vld [vmem:[%s3 + $0x1c] sm:$0xf]
      %v2625 = vld [vmem:[%s4] sm:$0x1]
      %v2627 = vperm.slane %v2625, 0
      %v2637 = vunpack.c.l.b16 %v2617
      %v2638 = vunpack.c.l.b16 %v2618
      %v2639 = vunpack.c.l.b16 %v2619
      %v2640 = vunpack.c.l.b16 %v2620
      %v2641 = vunpack.c.l.b16 %v2621
      %v2642 = vunpack.c.l.b16 %v2622
      %v2643 = vunpack.c.l.b16 %v2623
      %v2644 = vunpack.c.l.b16 %v2624
      %v2645 = vpack.c.b16 %v2638, %v2637
      %v2646 = vpack.c.b16 %v2640, %v2639
      %v2647 = vpack.c.b16 %v2642, %v2641
      %v2648 = vpack.c.b16 %v2644, %v2643
      %vm2653 = vcmask 523264
      %v2655 = vsel %vm2653, %v2489, 0
      %v2658 = vsel %vm2653, %v2490, 0
      %v2661 = vsel %vm2653, %v2491, 0
      %v2664 = vsel %vm2653, %v2492, 0
      %v2667 = vsel %vm2653, %v2493, 0
      %v2670 = vsel %vm2653, %v2494, 0
      %v2673 = vsel %vm2653, %v2495, 0
      %v2676 = vsel %vm2653, %v2496, 0
      %v2679 = vsel %vm2653, %v2497, 0
      %v2682 = vsel %vm2653, %v2498, 0
      %v2685 = vsel %vm2653, %v2499, 0
      %v2688 = vsel %vm2653, %v2500, 0
      %v2691 = vsel %vm2653, %v2501, 0
      %v2694 = vsel %vm2653, %v2502, 0
      %v2697 = vsel %vm2653, %v2503, 0
      %v2700 = vsel %vm2653, %v2504, 0
      %v2703 = vsel %vm2653, %v2505, 0
      %v2706 = vsel %vm2653, %v2506, 0
      %v2709 = vsel %vm2653, %v2507, 0
      %v2712 = vsel %vm2653, %v2508, 0
      %v2715 = vsel %vm2653, %v2509, 0
      %v2718 = vsel %vm2653, %v2510, 0
      %v2721 = vsel %vm2653, %v2511, 0
      %v2724 = vsel %vm2653, %v2512, 0
      %v2727 = vsel %vm2653, %v2513, 0
      %v2730 = vsel %vm2653, %v2514, 0
      %v2733 = vsel %vm2653, %v2515, 0
      %v2736 = vsel %vm2653, %v2516, 0
      %v2739 = vsel %vm2653, %v2517, 0
      %v2742 = vsel %vm2653, %v2518, 0
      %v2745 = vsel %vm2653, %v2519, 0
      %v2748 = vsel %vm2653, %v2520, 0
      %v2751 = vsel %vm2653, %v2521, 0
      %v2754 = vsel %vm2653, %v2522, 0
      %v2757 = vsel %vm2653, %v2523, 0
      %v2760 = vsel %vm2653, %v2524, 0
      %v2763 = vsel %vm2653, %v2525, 0
      %v2766 = vsel %vm2653, %v2526, 0
      %v2769 = vsel %vm2653, %v2527, 0
      %v2772 = vsel %vm2653, %v2528, 0
      %v2775 = vsel %vm2653, %v2529, 0
      %v2778 = vsel %vm2653, %v2530, 0
      %v2781 = vsel %vm2653, %v2531, 0
      %v2784 = vsel %vm2653, %v2532, 0
      %v2787 = vsel %vm2653, %v2533, 0
      %v2790 = vsel %vm2653, %v2534, 0
      %v2793 = vsel %vm2653, %v2535, 0
      %v2796 = vsel %vm2653, %v2536, 0
      %v2799 = vsel %vm2653, %v2537, 0
      %v2802 = vsel %vm2653, %v2538, 0
      %v2805 = vsel %vm2653, %v2539, 0
      %v2808 = vsel %vm2653, %v2540, 0
      %v2811 = vsel %vm2653, %v2541, 0
      %v2814 = vsel %vm2653, %v2542, 0
      %v2817 = vsel %vm2653, %v2543, 0
      %v2820 = vsel %vm2653, %v2544, 0
      %v2823 = vsel %vm2653, %v2545, 0
      %v2826 = vsel %vm2653, %v2546, 0
      %v2829 = vsel %vm2653, %v2547, 0
      %v2832 = vsel %vm2653, %v2548, 0
      %v2835 = vsel %vm2653, %v2549, 0
      %v2838 = vsel %vm2653, %v2550, 0
      %v2841 = vsel %vm2653, %v2551, 0
      %v2844 = vsel %vm2653, %v2552, 0
      %v2847 = vsel %vm2653, %v2553, 0
      %v2850 = vsel %vm2653, %v2554, 0
      %v2853 = vsel %vm2653, %v2555, 0
      %v2856 = vsel %vm2653, %v2556, 0
      %v2859 = vsel %vm2653, %v2557, 0
      %v2862 = vsel %vm2653, %v2558, 0
      %v2865 = vsel %vm2653, %v2559, 0
      %v2868 = vsel %vm2653, %v2560, 0
      %v2871 = vsel %vm2653, %v2561, 0
      %v2874 = vsel %vm2653, %v2562, 0
      %v2877 = vsel %vm2653, %v2563, 0
      %v2880 = vsel %vm2653, %v2564, 0
      %v2883 = vsel %vm2653, %v2565, 0
      %v2886 = vsel %vm2653, %v2566, 0
      %v2889 = vsel %vm2653, %v2567, 0
      %v2892 = vsel %vm2653, %v2568, 0
      %v2895 = vsel %vm2653, %v2569, 0
      %v2898 = vsel %vm2653, %v2570, 0
      %v2901 = vsel %vm2653, %v2571, 0
      %v2904 = vsel %vm2653, %v2572, 0
      %v2907 = vsel %vm2653, %v2573, 0
      %v2910 = vsel %vm2653, %v2574, 0
      %v2913 = vsel %vm2653, %v2575, 0
      %v2916 = vsel %vm2653, %v2576, 0
      %v2919 = vsel %vm2653, %v2577, 0
      %v2922 = vsel %vm2653, %v2578, 0
      %v2925 = vsel %vm2653, %v2579, 0
      %v2928 = vsel %vm2653, %v2580, 0
      %v2931 = vsel %vm2653, %v2581, 0
      %v2934 = vsel %vm2653, %v2582, 0
      %v2937 = vsel %vm2653, %v2583, 0
      %v2940 = vsel %vm2653, %v2584, 0
      %v2943 = vsel %vm2653, %v2585, 0
      %v2946 = vsel %vm2653, %v2586, 0
      %v2949 = vsel %vm2653, %v2587, 0
      %v2952 = vsel %vm2653, %v2588, 0
      %v2955 = vsel %vm2653, %v2589, 0
      %v2958 = vsel %vm2653, %v2590, 0
      %v2961 = vsel %vm2653, %v2591, 0
      %v2964 = vsel %vm2653, %v2592, 0
      %v2967 = vsel %vm2653, %v2593, 0
      %v2970 = vsel %vm2653, %v2594, 0
      %v2973 = vsel %vm2653, %v2595, 0
      %v2976 = vsel %vm2653, %v2596, 0
      %v2979 = vsel %vm2653, %v2597, 0
      %v2982 = vsel %vm2653, %v2598, 0
      %v2985 = vsel %vm2653, %v2599, 0
      %v2988 = vsel %vm2653, %v2600, 0
      %v2991 = vsel %vm2653, %v2601, 0
      %v2994 = vsel %vm2653, %v2602, 0
      %v2997 = vsel %vm2653, %v2603, 0
      %v3000 = vsel %vm2653, %v2604, 0
      %v3003 = vsel %vm2653, %v2605, 0
      %v3006 = vsel %vm2653, %v2606, 0
      %v3009 = vsel %vm2653, %v2607, 0
      %v3012 = vsel %vm2653, %v2608, 0
      %v3015 = vsel %vm2653, %v2609, 0
      %v3018 = vsel %vm2653, %v2610, 0
      %v3021 = vsel %vm2653, %v2611, 0
      %v3024 = vsel %vm2653, %v2612, 0
      %v3027 = vsel %vm2653, %v2613, 0
      %v3030 = vsel %vm2653, %v2614, 0
      %v3033 = vsel %vm2653, %v2615, 0
      %v3036 = vsel %vm2653, %v2616, 0
      %3038 = vmatpush.bf16.msra.mxu0 0
      %3039 = vmatpush.bf16.msra.mxu0 0
      %3040 = vmatpush.bf16.msra.mxu0 0
      %3041 = vmatpush.bf16.msra.mxu0 0
      %3042 = vmatpush.bf16.msra.mxu0 %v2648
      %3043 = vmatpush.bf16.msra.mxu0 %v2647
      %3044 = vmatpush.bf16.msra.mxu0 %v2646
      %3045 = vmatpush.bf16.msra.mxu0 %v2645
      %3046 = vmatmul.bf16.gmra.mxu0 %v2655
      %v3047 = vpop.f32.mrf.mxu0
      %v3048 = vadd.f32 %v2627, %v3047
      %v3049 = vpop.f32.mrf.mxu0
      %v3050 = vadd.f32 %v2627, %v3049
      %3051 = vmatmul.bf16.gmra.mxu0 %v2658
      %v3052 = vpop.f32.mrf.mxu0
      %v3053 = vadd.f32 %v2627, %v3052
      %v3054 = vpop.f32.mrf.mxu0
      %v3055 = vadd.f32 %v2627, %v3054
      %3056 = vmatmul.bf16.gmra.mxu0 %v2661
      %v3057 = vpop.f32.mrf.mxu0
      %v3058 = vadd.f32 %v2627, %v3057
      %v3059 = vpop.f32.mrf.mxu0
      %v3060 = vadd.f32 %v2627, %v3059
      %3061 = vmatmul.bf16.gmra.mxu0 %v2664
      %v3062 = vpop.f32.mrf.mxu0
      %v3063 = vadd.f32 %v2627, %v3062
      %v3064 = vpop.f32.mrf.mxu0
      %v3065 = vadd.f32 %v2627, %v3064
      %3066 = vmatmul.bf16.gmra.mxu0 %v2667
      %v3067 = vpop.f32.mrf.mxu0
      %v3068 = vadd.f32 %v2627, %v3067
      %v3069 = vpop.f32.mrf.mxu0
      %v3070 = vadd.f32 %v2627, %v3069
      %3071 = vmatmul.bf16.gmra.mxu0 %v2670
      %v3072 = vpop.f32.mrf.mxu0
      %v3073 = vadd.f32 %v2627, %v3072
      %v3074 = vpop.f32.mrf.mxu0
      %v3075 = vadd.f32 %v2627, %v3074
      %3076 = vmatmul.bf16.gmra.mxu0 %v2673
      %v3077 = vpop.f32.mrf.mxu0
      %v3078 = vadd.f32 %v2627, %v3077
      %v3079 = vpop.f32.mrf.mxu0
      %v3080 = vadd.f32 %v2627, %v3079
      %3081 = vmatmul.bf16.gmra.mxu0 %v2676
      %v3082 = vpop.f32.mrf.mxu0
      %v3083 = vadd.f32 %v2627, %v3082
      %v3084 = vpop.f32.mrf.mxu0
      %v3085 = vadd.f32 %v2627, %v3084
      %3086 = vmatmul.bf16.gmra.mxu0 %v2679
      %v3087 = vpop.f32.mrf.mxu0
      %v3088 = vadd.f32 %v2627, %v3087
      %v3089 = vpop.f32.mrf.mxu0
      %v3090 = vadd.f32 %v2627, %v3089
      %3091 = vmatmul.bf16.gmra.mxu0 %v2682
      %v3092 = vpop.f32.mrf.mxu0
      %v3093 = vadd.f32 %v2627, %v3092
      %v3094 = vpop.f32.mrf.mxu0
      %v3095 = vadd.f32 %v2627, %v3094
      %3096 = vmatmul.bf16.gmra.mxu0 %v2685
      %v3097 = vpop.f32.mrf.mxu0
      %v3098 = vadd.f32 %v2627, %v3097
      %v3099 = vpop.f32.mrf.mxu0
      %v3100 = vadd.f32 %v2627, %v3099
      %3101 = vmatmul.bf16.gmra.mxu0 %v2688
      %v3102 = vpop.f32.mrf.mxu0
      %v3103 = vadd.f32 %v2627, %v3102
      %v3104 = vpop.f32.mrf.mxu0
      %v3105 = vadd.f32 %v2627, %v3104
      %3106 = vmatmul.bf16.gmra.mxu0 %v2691
      %v3107 = vpop.f32.mrf.mxu0
      %v3108 = vadd.f32 %v2627, %v3107
      %v3109 = vpop.f32.mrf.mxu0
      %v3110 = vadd.f32 %v2627, %v3109
      %3111 = vmatmul.bf16.gmra.mxu0 %v2694
      %v3112 = vpop.f32.mrf.mxu0
      %v3113 = vadd.f32 %v2627, %v3112
      %v3114 = vpop.f32.mrf.mxu0
      %v3115 = vadd.f32 %v2627, %v3114
      %3116 = vmatmul.bf16.gmra.mxu0 %v2697
      %v3117 = vpop.f32.mrf.mxu0
      %v3118 = vadd.f32 %v2627, %v3117
      %v3119 = vpop.f32.mrf.mxu0
      %v3120 = vadd.f32 %v2627, %v3119
      %3121 = vmatmul.bf16.gmra.mxu0 %v2700
      %v3122 = vpop.f32.mrf.mxu0
      %v3123 = vadd.f32 %v2627, %v3122
      %v3124 = vpop.f32.mrf.mxu0
      %v3125 = vadd.f32 %v2627, %v3124
      %3126 = vmatmul.bf16.gmra.mxu0 %v2703
      %v3127 = vpop.f32.mrf.mxu0
      %v3128 = vadd.f32 %v2627, %v3127
      %v3129 = vpop.f32.mrf.mxu0
      %v3130 = vadd.f32 %v2627, %v3129
      %3131 = vmatmul.bf16.gmra.mxu0 %v2706
      %v3132 = vpop.f32.mrf.mxu0
      %v3133 = vadd.f32 %v2627, %v3132
      %v3134 = vpop.f32.mrf.mxu0
      %v3135 = vadd.f32 %v2627, %v3134
      %3136 = vmatmul.bf16.gmra.mxu0 %v2709
      %v3137 = vpop.f32.mrf.mxu0
      %v3138 = vadd.f32 %v2627, %v3137
      %v3139 = vpop.f32.mrf.mxu0
      %v3140 = vadd.f32 %v2627, %v3139
      %3141 = vmatmul.bf16.gmra.mxu0 %v2712
      %v3142 = vpop.f32.mrf.mxu0
      %v3143 = vadd.f32 %v2627, %v3142
      %v3144 = vpop.f32.mrf.mxu0
      %v3145 = vadd.f32 %v2627, %v3144
      %3146 = vmatmul.bf16.gmra.mxu0 %v2715
      %v3147 = vpop.f32.mrf.mxu0
      %v3148 = vadd.f32 %v2627, %v3147
      %v3149 = vpop.f32.mrf.mxu0
      %v3150 = vadd.f32 %v2627, %v3149
      %3151 = vmatmul.bf16.gmra.mxu0 %v2718
      %v3152 = vpop.f32.mrf.mxu0
      %v3153 = vadd.f32 %v2627, %v3152
      %v3154 = vpop.f32.mrf.mxu0
      %v3155 = vadd.f32 %v2627, %v3154
      %3156 = vmatmul.bf16.gmra.mxu0 %v2721
      %v3157 = vpop.f32.mrf.mxu0
      %v3158 = vadd.f32 %v2627, %v3157
      %v3159 = vpop.f32.mrf.mxu0
      %v3160 = vadd.f32 %v2627, %v3159
      %3161 = vmatmul.bf16.gmra.mxu0 %v2724
      %v3162 = vpop.f32.mrf.mxu0
      %v3163 = vadd.f32 %v2627, %v3162
      %v3164 = vpop.f32.mrf.mxu0
      %v3165 = vadd.f32 %v2627, %v3164
      %3166 = vmatmul.bf16.gmra.mxu0 %v2727
      %v3167 = vpop.f32.mrf.mxu0
      %v3168 = vadd.f32 %v2627, %v3167
      %v3169 = vpop.f32.mrf.mxu0
      %v3170 = vadd.f32 %v2627, %v3169
      %3171 = vmatmul.bf16.gmra.mxu0 %v2730
      %v3172 = vpop.f32.mrf.mxu0
      %v3173 = vadd.f32 %v2627, %v3172
      %v3174 = vpop.f32.mrf.mxu0
      %v3175 = vadd.f32 %v2627, %v3174
      %3176 = vmatmul.bf16.gmra.mxu0 %v2733
      %v3177 = vpop.f32.mrf.mxu0
      %v3178 = vadd.f32 %v2627, %v3177
      %v3179 = vpop.f32.mrf.mxu0
      %v3180 = vadd.f32 %v2627, %v3179
      %3181 = vmatmul.bf16.gmra.mxu0 %v2736
      %v3182 = vpop.f32.mrf.mxu0
      %v3183 = vadd.f32 %v2627, %v3182
      %v3184 = vpop.f32.mrf.mxu0
      %v3185 = vadd.f32 %v2627, %v3184
      %3186 = vmatmul.bf16.gmra.mxu0 %v2739
      %v3187 = vpop.f32.mrf.mxu0
      %v3188 = vadd.f32 %v2627, %v3187
      %v3189 = vpop.f32.mrf.mxu0
      %v3190 = vadd.f32 %v2627, %v3189
      %3191 = vmatmul.bf16.gmra.mxu0 %v2742
      %v3192 = vpop.f32.mrf.mxu0
      %v3193 = vadd.f32 %v2627, %v3192
      %v3194 = vpop.f32.mrf.mxu0
      %v3195 = vadd.f32 %v2627, %v3194
      %3196 = vmatmul.bf16.gmra.mxu0 %v2745
      %v3197 = vpop.f32.mrf.mxu0
      %v3198 = vadd.f32 %v2627, %v3197
      %v3199 = vpop.f32.mrf.mxu0
      %v3200 = vadd.f32 %v2627, %v3199
      %3201 = vmatmul.bf16.gmra.mxu0 %v2748
      %v3202 = vpop.f32.mrf.mxu0
      %v3203 = vadd.f32 %v2627, %v3202
      %v3204 = vpop.f32.mrf.mxu0
      %v3205 = vadd.f32 %v2627, %v3204
      %3206 = vmatmul.bf16.gmra.mxu0 %v2751
      %v3207 = vpop.f32.mrf.mxu0
      %v3208 = vadd.f32 %v2627, %v3207
      %v3209 = vpop.f32.mrf.mxu0
      %v3210 = vadd.f32 %v2627, %v3209
      %3211 = vmatmul.bf16.gmra.mxu0 %v2754
      %v3212 = vpop.f32.mrf.mxu0
      %v3213 = vadd.f32 %v2627, %v3212
      %v3214 = vpop.f32.mrf.mxu0
      %v3215 = vadd.f32 %v2627, %v3214
      %3216 = vmatmul.bf16.gmra.mxu0 %v2757
      %v3217 = vpop.f32.mrf.mxu0
      %v3218 = vadd.f32 %v2627, %v3217
      %v3219 = vpop.f32.mrf.mxu0
      %v3220 = vadd.f32 %v2627, %v3219
      %3221 = vmatmul.bf16.gmra.mxu0 %v2760
      %v3222 = vpop.f32.mrf.mxu0
      %v3223 = vadd.f32 %v2627, %v3222
      %v3224 = vpop.f32.mrf.mxu0
      %v3225 = vadd.f32 %v2627, %v3224
      %3226 = vmatmul.bf16.gmra.mxu0 %v2763
      %v3227 = vpop.f32.mrf.mxu0
      %v3228 = vadd.f32 %v2627, %v3227
      %v3229 = vpop.f32.mrf.mxu0
      %v3230 = vadd.f32 %v2627, %v3229
      %3231 = vmatmul.bf16.gmra.mxu0 %v2766
      %v3232 = vpop.f32.mrf.mxu0
      %v3233 = vadd.f32 %v2627, %v3232
      %v3234 = vpop.f32.mrf.mxu0
      %v3235 = vadd.f32 %v2627, %v3234
      %3236 = vmatmul.bf16.gmra.mxu0 %v2769
      %v3237 = vpop.f32.mrf.mxu0
      %v3238 = vadd.f32 %v2627, %v3237
      %v3239 = vpop.f32.mrf.mxu0
      %v3240 = vadd.f32 %v2627, %v3239
      %3241 = vmatmul.bf16.gmra.mxu0 %v2772
      %v3242 = vpop.f32.mrf.mxu0
      %v3243 = vadd.f32 %v2627, %v3242
      %v3244 = vpop.f32.mrf.mxu0
      %v3245 = vadd.f32 %v2627, %v3244
      %3246 = vmatmul.bf16.gmra.mxu0 %v2775
      %v3247 = vpop.f32.mrf.mxu0
      %v3248 = vadd.f32 %v2627, %v3247
      %v3249 = vpop.f32.mrf.mxu0
      %v3250 = vadd.f32 %v2627, %v3249
      %3251 = vmatmul.bf16.gmra.mxu0 %v2778
      %v3252 = vpop.f32.mrf.mxu0
      %v3253 = vadd.f32 %v2627, %v3252
      %v3254 = vpop.f32.mrf.mxu0
      %v3255 = vadd.f32 %v2627, %v3254
      %3256 = vmatmul.bf16.gmra.mxu0 %v2781
      %v3257 = vpop.f32.mrf.mxu0
      %v3258 = vadd.f32 %v2627, %v3257
      %v3259 = vpop.f32.mrf.mxu0
      %v3260 = vadd.f32 %v2627, %v3259
      %3261 = vmatmul.bf16.gmra.mxu0 %v2784
      %v3262 = vpop.f32.mrf.mxu0
      %v3263 = vadd.f32 %v2627, %v3262
      %v3264 = vpop.f32.mrf.mxu0
      %v3265 = vadd.f32 %v2627, %v3264
      %3266 = vmatmul.bf16.gmra.mxu0 %v2787
      %v3267 = vpop.f32.mrf.mxu0
      %v3268 = vadd.f32 %v2627, %v3267
      %v3269 = vpop.f32.mrf.mxu0
      %v3270 = vadd.f32 %v2627, %v3269
      %3271 = vmatmul.bf16.gmra.mxu0 %v2790
      %v3272 = vpop.f32.mrf.mxu0
      %v3273 = vadd.f32 %v2627, %v3272
      %v3274 = vpop.f32.mrf.mxu0
      %v3275 = vadd.f32 %v2627, %v3274
      %3276 = vmatmul.bf16.gmra.mxu0 %v2793
      %v3277 = vpop.f32.mrf.mxu0
      %v3278 = vadd.f32 %v2627, %v3277
      %v3279 = vpop.f32.mrf.mxu0
      %v3280 = vadd.f32 %v2627, %v3279
      %3281 = vmatmul.bf16.gmra.mxu0 %v2796
      %v3282 = vpop.f32.mrf.mxu0
      %v3283 = vadd.f32 %v2627, %v3282
      %v3284 = vpop.f32.mrf.mxu0
      %v3285 = vadd.f32 %v2627, %v3284
      %3286 = vmatmul.bf16.gmra.mxu0 %v2799
      %v3287 = vpop.f32.mrf.mxu0
      %v3288 = vadd.f32 %v2627, %v3287
      %v3289 = vpop.f32.mrf.mxu0
      %v3290 = vadd.f32 %v2627, %v3289
      %3291 = vmatmul.bf16.gmra.mxu0 %v2802
      %v3292 = vpop.f32.mrf.mxu0
      %v3293 = vadd.f32 %v2627, %v3292
      %v3294 = vpop.f32.mrf.mxu0
      %v3295 = vadd.f32 %v2627, %v3294
      %3296 = vmatmul.bf16.gmra.mxu0 %v2805
      %v3297 = vpop.f32.mrf.mxu0
      %v3298 = vadd.f32 %v2627, %v3297
      %v3299 = vpop.f32.mrf.mxu0
      %v3300 = vadd.f32 %v2627, %v3299
      %3301 = vmatmul.bf16.gmra.mxu0 %v2808
      %v3302 = vpop.f32.mrf.mxu0
      %v3303 = vadd.f32 %v2627, %v3302
      %v3304 = vpop.f32.mrf.mxu0
      %v3305 = vadd.f32 %v2627, %v3304
      %3306 = vmatmul.bf16.gmra.mxu0 %v2811
      %v3307 = vpop.f32.mrf.mxu0
      %v3308 = vadd.f32 %v2627, %v3307
      %v3309 = vpop.f32.mrf.mxu0
      %v3310 = vadd.f32 %v2627, %v3309
      %3311 = vmatmul.bf16.gmra.mxu0 %v2814
      %v3312 = vpop.f32.mrf.mxu0
      %v3313 = vadd.f32 %v2627, %v3312
      %v3314 = vpop.f32.mrf.mxu0
      %v3315 = vadd.f32 %v2627, %v3314
      %3316 = vmatmul.bf16.gmra.mxu0 %v2817
      %v3317 = vpop.f32.mrf.mxu0
      %v3318 = vadd.f32 %v2627, %v3317
      %v3319 = vpop.f32.mrf.mxu0
      %v3320 = vadd.f32 %v2627, %v3319
      %3321 = vmatmul.bf16.gmra.mxu0 %v2820
      %v3322 = vpop.f32.mrf.mxu0
      %v3323 = vadd.f32 %v2627, %v3322
      %v3324 = vpop.f32.mrf.mxu0
      %v3325 = vadd.f32 %v2627, %v3324
      %3326 = vmatmul.bf16.gmra.mxu0 %v2823
      %v3327 = vpop.f32.mrf.mxu0
      %v3328 = vadd.f32 %v2627, %v3327
      %v3329 = vpop.f32.mrf.mxu0
      %v3330 = vadd.f32 %v2627, %v3329
      %3331 = vmatmul.bf16.gmra.mxu0 %v2826
      %v3332 = vpop.f32.mrf.mxu0
      %v3333 = vadd.f32 %v2627, %v3332
      %v3334 = vpop.f32.mrf.mxu0
      %v3335 = vadd.f32 %v2627, %v3334
      %3336 = vmatmul.bf16.gmra.mxu0 %v2829
      %v3337 = vpop.f32.mrf.mxu0
      %v3338 = vadd.f32 %v2627, %v3337
      %v3339 = vpop.f32.mrf.mxu0
      %v3340 = vadd.f32 %v2627, %v3339
      %3341 = vmatmul.bf16.gmra.mxu0 %v2832
      %v3342 = vpop.f32.mrf.mxu0
      %v3343 = vadd.f32 %v2627, %v3342
      %v3344 = vpop.f32.mrf.mxu0
      %v3345 = vadd.f32 %v2627, %v3344
      %3346 = vmatmul.bf16.gmra.mxu0 %v2835
      %v3347 = vpop.f32.mrf.mxu0
      %v3348 = vadd.f32 %v2627, %v3347
      %v3349 = vpop.f32.mrf.mxu0
      %v3350 = vadd.f32 %v2627, %v3349
      %3351 = vmatmul.bf16.gmra.mxu0 %v2838
      %v3352 = vpop.f32.mrf.mxu0
      %v3353 = vadd.f32 %v2627, %v3352
      %v3354 = vpop.f32.mrf.mxu0
      %v3355 = vadd.f32 %v2627, %v3354
      %3356 = vmatmul.bf16.gmra.mxu0 %v2841
      %v3357 = vpop.f32.mrf.mxu0
      %v3358 = vadd.f32 %v2627, %v3357
      %v3359 = vpop.f32.mrf.mxu0
      %v3360 = vadd.f32 %v2627, %v3359
      %3361 = vmatmul.bf16.gmra.mxu0 %v2844
      %v3362 = vpop.f32.mrf.mxu0
      %v3363 = vadd.f32 %v2627, %v3362
      %v3364 = vpop.f32.mrf.mxu0
      %v3365 = vadd.f32 %v2627, %v3364
      %3366 = vmatmul.bf16.gmra.mxu0 %v2847
      %v3367 = vpop.f32.mrf.mxu0
      %v3368 = vadd.f32 %v2627, %v3367
      %v3369 = vpop.f32.mrf.mxu0
      %v3370 = vadd.f32 %v2627, %v3369
      %3371 = vmatmul.bf16.gmra.mxu0 %v2850
      %v3372 = vpop.f32.mrf.mxu0
      %v3373 = vadd.f32 %v2627, %v3372
      %v3374 = vpop.f32.mrf.mxu0
      %v3375 = vadd.f32 %v2627, %v3374
      %3376 = vmatmul.bf16.gmra.mxu0 %v2853
      %v3377 = vpop.f32.mrf.mxu0
      %v3378 = vadd.f32 %v2627, %v3377
      %v3379 = vpop.f32.mrf.mxu0
      %v3380 = vadd.f32 %v2627, %v3379
      %3381 = vmatmul.bf16.gmra.mxu0 %v2856
      %v3382 = vpop.f32.mrf.mxu0
      %v3383 = vadd.f32 %v2627, %v3382
      %v3384 = vpop.f32.mrf.mxu0
      %v3385 = vadd.f32 %v2627, %v3384
      %3386 = vmatmul.bf16.gmra.mxu0 %v2859
      %v3387 = vpop.f32.mrf.mxu0
      %v3388 = vadd.f32 %v2627, %v3387
      %v3389 = vpop.f32.mrf.mxu0
      %v3390 = vadd.f32 %v2627, %v3389
      %3391 = vmatmul.bf16.gmra.mxu0 %v2862
      %v3392 = vpop.f32.mrf.mxu0
      %v3393 = vadd.f32 %v2627, %v3392
      %v3394 = vpop.f32.mrf.mxu0
      %v3395 = vadd.f32 %v2627, %v3394
      %3396 = vmatmul.bf16.gmra.mxu0 %v2865
      %v3397 = vpop.f32.mrf.mxu0
      %v3398 = vadd.f32 %v2627, %v3397
      %v3399 = vpop.f32.mrf.mxu0
      %v3400 = vadd.f32 %v2627, %v3399
      %3401 = vmatmul.bf16.gmra.mxu0 %v2868
      %v3402 = vpop.f32.mrf.mxu0
      %v3403 = vadd.f32 %v2627, %v3402
      %v3404 = vpop.f32.mrf.mxu0
      %v3405 = vadd.f32 %v2627, %v3404
      %3406 = vmatmul.bf16.gmra.mxu0 %v2871
      %v3407 = vpop.f32.mrf.mxu0
      %v3408 = vadd.f32 %v2627, %v3407
      %v3409 = vpop.f32.mrf.mxu0
      %v3410 = vadd.f32 %v2627, %v3409
      %3411 = vmatmul.bf16.gmra.mxu0 %v2874
      %v3412 = vpop.f32.mrf.mxu0
      %v3413 = vadd.f32 %v2627, %v3412
      %v3414 = vpop.f32.mrf.mxu0
      %v3415 = vadd.f32 %v2627, %v3414
      %3416 = vmatmul.bf16.gmra.mxu0 %v2877
      %v3417 = vpop.f32.mrf.mxu0
      %v3418 = vadd.f32 %v2627, %v3417
      %v3419 = vpop.f32.mrf.mxu0
      %v3420 = vadd.f32 %v2627, %v3419
      %3421 = vmatmul.bf16.gmra.mxu0 %v2880
      %v3422 = vpop.f32.mrf.mxu0
      %v3423 = vadd.f32 %v2627, %v3422
      %v3424 = vpop.f32.mrf.mxu0
      %v3425 = vadd.f32 %v2627, %v3424
      %3426 = vmatmul.bf16.gmra.mxu0 %v2883
      %v3427 = vpop.f32.mrf.mxu0
      %v3428 = vadd.f32 %v2627, %v3427
      %v3429 = vpop.f32.mrf.mxu0
      %v3430 = vadd.f32 %v2627, %v3429
      %3431 = vmatmul.bf16.gmra.mxu0 %v2886
      %v3432 = vpop.f32.mrf.mxu0
      %v3433 = vadd.f32 %v2627, %v3432
      %v3434 = vpop.f32.mrf.mxu0
      %v3435 = vadd.f32 %v2627, %v3434
      %3436 = vmatmul.bf16.gmra.mxu0 %v2889
      %v3437 = vpop.f32.mrf.mxu0
      %v3438 = vadd.f32 %v2627, %v3437
      %v3439 = vpop.f32.mrf.mxu0
      %v3440 = vadd.f32 %v2627, %v3439
      %3441 = vmatmul.bf16.gmra.mxu0 %v2892
      %v3442 = vpop.f32.mrf.mxu0
      %v3443 = vadd.f32 %v2627, %v3442
      %v3444 = vpop.f32.mrf.mxu0
      %v3445 = vadd.f32 %v2627, %v3444
      %3446 = vmatmul.bf16.gmra.mxu0 %v2895
      %v3447 = vpop.f32.mrf.mxu0
      %v3448 = vadd.f32 %v2627, %v3447
      %v3449 = vpop.f32.mrf.mxu0
      %v3450 = vadd.f32 %v2627, %v3449
      %3451 = vmatmul.bf16.gmra.mxu0 %v2898
      %v3452 = vpop.f32.mrf.mxu0
      %v3453 = vadd.f32 %v2627, %v3452
      %v3454 = vpop.f32.mrf.mxu0
      %v3455 = vadd.f32 %v2627, %v3454
      %3456 = vmatmul.bf16.gmra.mxu0 %v2901
      %v3457 = vpop.f32.mrf.mxu0
      %v3458 = vadd.f32 %v2627, %v3457
      %v3459 = vpop.f32.mrf.mxu0
      %v3460 = vadd.f32 %v2627, %v3459
      %3461 = vmatmul.bf16.gmra.mxu0 %v2904
      %v3462 = vpop.f32.mrf.mxu0
      %v3463 = vadd.f32 %v2627, %v3462
      %v3464 = vpop.f32.mrf.mxu0
      %v3465 = vadd.f32 %v2627, %v3464
      %3466 = vmatmul.bf16.gmra.mxu0 %v2907
      %v3467 = vpop.f32.mrf.mxu0
      %v3468 = vadd.f32 %v2627, %v3467
      %v3469 = vpop.f32.mrf.mxu0
      %v3470 = vadd.f32 %v2627, %v3469
      %3471 = vmatmul.bf16.gmra.mxu0 %v2910
      %v3472 = vpop.f32.mrf.mxu0
      %v3473 = vadd.f32 %v2627, %v3472
      %v3474 = vpop.f32.mrf.mxu0
      %v3475 = vadd.f32 %v2627, %v3474
      %3476 = vmatmul.bf16.gmra.mxu0 %v2913
      %v3477 = vpop.f32.mrf.mxu0
      %v3478 = vadd.f32 %v2627, %v3477
      %v3479 = vpop.f32.mrf.mxu0
      %v3480 = vadd.f32 %v2627, %v3479
      %3481 = vmatmul.bf16.gmra.mxu0 %v2916
      %v3482 = vpop.f32.mrf.mxu0
      %v3483 = vadd.f32 %v2627, %v3482
      %v3484 = vpop.f32.mrf.mxu0
      %v3485 = vadd.f32 %v2627, %v3484
      %3486 = vmatmul.bf16.gmra.mxu0 %v2919
      %v3487 = vpop.f32.mrf.mxu0
      %v3488 = vadd.f32 %v2627, %v3487
      %v3489 = vpop.f32.mrf.mxu0
      %v3490 = vadd.f32 %v2627, %v3489
      %3491 = vmatmul.bf16.gmra.mxu0 %v2922
      %v3492 = vpop.f32.mrf.mxu0
      %v3493 = vadd.f32 %v2627, %v3492
      %v3494 = vpop.f32.mrf.mxu0
      %v3495 = vadd.f32 %v2627, %v3494
      %3496 = vmatmul.bf16.gmra.mxu0 %v2925
      %v3497 = vpop.f32.mrf.mxu0
      %v3498 = vadd.f32 %v2627, %v3497
      %v3499 = vpop.f32.mrf.mxu0
      %v3500 = vadd.f32 %v2627, %v3499
      %3501 = vmatmul.bf16.gmra.mxu0 %v2928
      %v3502 = vpop.f32.mrf.mxu0
      %v3503 = vadd.f32 %v2627, %v3502
      %v3504 = vpop.f32.mrf.mxu0
      %v3505 = vadd.f32 %v2627, %v3504
      %3506 = vmatmul.bf16.gmra.mxu0 %v2931
      %v3507 = vpop.f32.mrf.mxu0
      %v3508 = vadd.f32 %v2627, %v3507
      %v3509 = vpop.f32.mrf.mxu0
      %v3510 = vadd.f32 %v2627, %v3509
      %3511 = vmatmul.bf16.gmra.mxu0 %v2934
      %v3512 = vpop.f32.mrf.mxu0
      %v3513 = vadd.f32 %v2627, %v3512
      %v3514 = vpop.f32.mrf.mxu0
      %v3515 = vadd.f32 %v2627, %v3514
      %3516 = vmatmul.bf16.gmra.mxu0 %v2937
      %v3517 = vpop.f32.mrf.mxu0
      %v3518 = vadd.f32 %v2627, %v3517
      %v3519 = vpop.f32.mrf.mxu0
      %v3520 = vadd.f32 %v2627, %v3519
      %3521 = vmatmul.bf16.gmra.mxu0 %v2940
      %v3522 = vpop.f32.mrf.mxu0
      %v3523 = vadd.f32 %v2627, %v3522
      %v3524 = vpop.f32.mrf.mxu0
      %v3525 = vadd.f32 %v2627, %v3524
      %3526 = vmatmul.bf16.gmra.mxu0 %v2943
      %v3527 = vpop.f32.mrf.mxu0
      %v3528 = vadd.f32 %v2627, %v3527
      %v3529 = vpop.f32.mrf.mxu0
      %v3530 = vadd.f32 %v2627, %v3529
      %3531 = vmatmul.bf16.gmra.mxu0 %v2946
      %v3532 = vpop.f32.mrf.mxu0
      %v3533 = vadd.f32 %v2627, %v3532
      %v3534 = vpop.f32.mrf.mxu0
      %v3535 = vadd.f32 %v2627, %v3534
      %3536 = vmatmul.bf16.gmra.mxu0 %v2949
      %v3537 = vpop.f32.mrf.mxu0
      %v3538 = vadd.f32 %v2627, %v3537
      %v3539 = vpop.f32.mrf.mxu0
      %v3540 = vadd.f32 %v2627, %v3539
      %3541 = vmatmul.bf16.gmra.mxu0 %v2952
      %v3542 = vpop.f32.mrf.mxu0
      %v3543 = vadd.f32 %v2627, %v3542
      %v3544 = vpop.f32.mrf.mxu0
      %v3545 = vadd.f32 %v2627, %v3544
      %3546 = vmatmul.bf16.gmra.mxu0 %v2955
      %v3547 = vpop.f32.mrf.mxu0
      %v3548 = vadd.f32 %v2627, %v3547
      %v3549 = vpop.f32.mrf.mxu0
      %v3550 = vadd.f32 %v2627, %v3549
      %3551 = vmatmul.bf16.gmra.mxu0 %v2958
      %v3552 = vpop.f32.mrf.mxu0
      %v3553 = vadd.f32 %v2627, %v3552
      %v3554 = vpop.f32.mrf.mxu0
      %v3555 = vadd.f32 %v2627, %v3554
      %3556 = vmatmul.bf16.gmra.mxu0 %v2961
      %v3557 = vpop.f32.mrf.mxu0
      %v3558 = vadd.f32 %v2627, %v3557
      %v3559 = vpop.f32.mrf.mxu0
      %v3560 = vadd.f32 %v2627, %v3559
      %3561 = vmatmul.bf16.gmra.mxu0 %v2964
      %v3562 = vpop.f32.mrf.mxu0
      %v3563 = vadd.f32 %v2627, %v3562
      %v3564 = vpop.f32.mrf.mxu0
      %v3565 = vadd.f32 %v2627, %v3564
      %3566 = vmatmul.bf16.gmra.mxu0 %v2967
      %v3567 = vpop.f32.mrf.mxu0
      %v3568 = vadd.f32 %v2627, %v3567
      %v3569 = vpop.f32.mrf.mxu0
      %v3570 = vadd.f32 %v2627, %v3569
      %3571 = vmatmul.bf16.gmra.mxu0 %v2970
      %v3572 = vpop.f32.mrf.mxu0
      %v3573 = vadd.f32 %v2627, %v3572
      %v3574 = vpop.f32.mrf.mxu0
      %v3575 = vadd.f32 %v2627, %v3574
      %3576 = vmatmul.bf16.gmra.mxu0 %v2973
      %v3577 = vpop.f32.mrf.mxu0
      %v3578 = vadd.f32 %v2627, %v3577
      %v3579 = vpop.f32.mrf.mxu0
      %v3580 = vadd.f32 %v2627, %v3579
      %3581 = vmatmul.bf16.gmra.mxu0 %v2976
      %v3582 = vpop.f32.mrf.mxu0
      %v3583 = vadd.f32 %v2627, %v3582
      %v3584 = vpop.f32.mrf.mxu0
      %v3585 = vadd.f32 %v2627, %v3584
      %3586 = vmatmul.bf16.gmra.mxu0 %v2979
      %v3587 = vpop.f32.mrf.mxu0
      %v3588 = vadd.f32 %v2627, %v3587
      %v3589 = vpop.f32.mrf.mxu0
      %v3590 = vadd.f32 %v2627, %v3589
      %3591 = vmatmul.bf16.gmra.mxu0 %v2982
      %v3592 = vpop.f32.mrf.mxu0
      %v3593 = vadd.f32 %v2627, %v3592
      %v3594 = vpop.f32.mrf.mxu0
      %v3595 = vadd.f32 %v2627, %v3594
      %3596 = vmatmul.bf16.gmra.mxu0 %v2985
      %v3597 = vpop.f32.mrf.mxu0
      %v3598 = vadd.f32 %v2627, %v3597
      %v3599 = vpop.f32.mrf.mxu0
      %v3600 = vadd.f32 %v2627, %v3599
      %3601 = vmatmul.bf16.gmra.mxu0 %v2988
      %v3602 = vpop.f32.mrf.mxu0
      %v3603 = vadd.f32 %v2627, %v3602
      %v3604 = vpop.f32.mrf.mxu0
      %v3605 = vadd.f32 %v2627, %v3604
      %3606 = vmatmul.bf16.gmra.mxu0 %v2991
      %v3607 = vpop.f32.mrf.mxu0
      %v3608 = vadd.f32 %v2627, %v3607
      %v3609 = vpop.f32.mrf.mxu0
      %v3610 = vadd.f32 %v2627, %v3609
      %3611 = vmatmul.bf16.gmra.mxu0 %v2994
      %v3612 = vpop.f32.mrf.mxu0
      %v3613 = vadd.f32 %v2627, %v3612
      %v3614 = vpop.f32.mrf.mxu0
      %v3615 = vadd.f32 %v2627, %v3614
      %3616 = vmatmul.bf16.gmra.mxu0 %v2997
      %v3617 = vpop.f32.mrf.mxu0
      %v3618 = vadd.f32 %v2627, %v3617
      %v3619 = vpop.f32.mrf.mxu0
      %v3620 = vadd.f32 %v2627, %v3619
      %3621 = vmatmul.bf16.gmra.mxu0 %v3000
      %v3622 = vpop.f32.mrf.mxu0
      %v3623 = vadd.f32 %v2627, %v3622
      %v3624 = vpop.f32.mrf.mxu0
      %v3625 = vadd.f32 %v2627, %v3624
      %3626 = vmatmul.bf16.gmra.mxu0 %v3003
      %v3627 = vpop.f32.mrf.mxu0
      %v3628 = vadd.f32 %v2627, %v3627
      %v3629 = vpop.f32.mrf.mxu0
      %v3630 = vadd.f32 %v2627, %v3629
      %3631 = vmatmul.bf16.gmra.mxu0 %v3006
      %v3632 = vpop.f32.mrf.mxu0
      %v3633 = vadd.f32 %v2627, %v3632
      %v3634 = vpop.f32.mrf.mxu0
      %v3635 = vadd.f32 %v2627, %v3634
      %3636 = vmatmul.bf16.gmra.mxu0 %v3009
      %v3637 = vpop.f32.mrf.mxu0
      %v3638 = vadd.f32 %v2627, %v3637
      %v3639 = vpop.f32.mrf.mxu0
      %v3640 = vadd.f32 %v2627, %v3639
      %3641 = vmatmul.bf16.gmra.mxu0 %v3012
      %v3642 = vpop.f32.mrf.mxu0
      %v3643 = vadd.f32 %v2627, %v3642
      %v3644 = vpop.f32.mrf.mxu0
      %v3645 = vadd.f32 %v2627, %v3644
      %3646 = vmatmul.bf16.gmra.mxu0 %v3015
      %v3647 = vpop.f32.mrf.mxu0
      %v3648 = vadd.f32 %v2627, %v3647
      %v3649 = vpop.f32.mrf.mxu0
      %v3650 = vadd.f32 %v2627, %v3649
      %3651 = vmatmul.bf16.gmra.mxu0 %v3018
      %v3652 = vpop.f32.mrf.mxu0
      %v3653 = vadd.f32 %v2627, %v3652
      %v3654 = vpop.f32.mrf.mxu0
      %v3655 = vadd.f32 %v2627, %v3654
      %3656 = vmatmul.bf16.gmra.mxu0 %v3021
      %v3657 = vpop.f32.mrf.mxu0
      %v3658 = vadd.f32 %v2627, %v3657
      %v3659 = vpop.f32.mrf.mxu0
      %v3660 = vadd.f32 %v2627, %v3659
      %3661 = vmatmul.bf16.gmra.mxu0 %v3024
      %v3662 = vpop.f32.mrf.mxu0
      %v3663 = vadd.f32 %v2627, %v3662
      %v3664 = vpop.f32.mrf.mxu0
      %v3665 = vadd.f32 %v2627, %v3664
      %3666 = vmatmul.bf16.gmra.mxu0 %v3027
      %v3667 = vpop.f32.mrf.mxu0
      %v3668 = vadd.f32 %v2627, %v3667
      %v3669 = vpop.f32.mrf.mxu0
      %v3670 = vadd.f32 %v2627, %v3669
      %3671 = vmatmul.bf16.gmra.mxu0 %v3030
      %v3672 = vpop.f32.mrf.mxu0
      %v3673 = vadd.f32 %v2627, %v3672
      %v3674 = vpop.f32.mrf.mxu0
      %v3675 = vadd.f32 %v2627, %v3674
      %3676 = vmatmul.bf16.gmra.mxu0 %v3033
      %v3677 = vpop.f32.mrf.mxu0
      %v3678 = vadd.f32 %v2627, %v3677
      %v3679 = vpop.f32.mrf.mxu0
      %v3680 = vadd.f32 %v2627, %v3679
      %3681 = vmatmul.bf16.gmra.mxu0 %v3036
      %v3682 = vpop.f32.mrf.mxu0
      %v3683 = vadd.f32 %v2627, %v3682
      %v3684 = vpop.f32.mrf.mxu0
      %v3685 = vadd.f32 %v2627, %v3684
      %3686 = vdwg.mxu0
      %vm3687 = vcmp.ge.f32.partialorder %v3048, 0.0
      %vm3688 = vcmp.ge.f32.partialorder %v3050, 0.0
      %vm3689 = vcmp.ge.f32.partialorder %v3053, 0.0
      %vm3690 = vcmp.ge.f32.partialorder %v3055, 0.0
      %vm3691 = vcmp.ge.f32.partialorder %v3058, 0.0
      %vm3692 = vcmp.ge.f32.partialorder %v3060, 0.0
      %vm3693 = vcmp.ge.f32.partialorder %v3063, 0.0
      %vm3694 = vcmp.ge.f32.partialorder %v3065, 0.0
      %vm3695 = vcmp.ge.f32.partialorder %v3068, 0.0
      %vm3696 = vcmp.ge.f32.partialorder %v3070, 0.0
      %vm3697 = vcmp.ge.f32.partialorder %v3073, 0.0
      %vm3698 = vcmp.ge.f32.partialorder %v3075, 0.0
      %vm3699 = vcmp.ge.f32.partialorder %v3078, 0.0
      %vm3700 = vcmp.ge.f32.partialorder %v3080, 0.0
      %vm3701 = vcmp.ge.f32.partialorder %v3083, 0.0
      %vm3702 = vcmp.ge.f32.partialorder %v3085, 0.0
      %vm3703 = vcmp.ge.f32.partialorder %v3088, 0.0
      %vm3704 = vcmp.ge.f32.partialorder %v3090, 0.0
      %vm3705 = vcmp.ge.f32.partialorder %v3093, 0.0
      %vm3706 = vcmp.ge.f32.partialorder %v3095, 0.0
      %vm3707 = vcmp.ge.f32.partialorder %v3098, 0.0
      %vm3708 = vcmp.ge.f32.partialorder %v3100, 0.0
      %vm3709 = vcmp.ge.f32.partialorder %v3103, 0.0
      %vm3710 = vcmp.ge.f32.partialorder %v3105, 0.0
      %vm3711 = vcmp.ge.f32.partialorder %v3108, 0.0
      %vm3712 = vcmp.ge.f32.partialorder %v3110, 0.0
      %vm3713 = vcmp.ge.f32.partialorder %v3113, 0.0
      %vm3714 = vcmp.ge.f32.partialorder %v3115, 0.0
      %vm3715 = vcmp.ge.f32.partialorder %v3118, 0.0
      %vm3716 = vcmp.ge.f32.partialorder %v3120, 0.0
      %vm3717 = vcmp.ge.f32.partialorder %v3123, 0.0
      %vm3718 = vcmp.ge.f32.partialorder %v3125, 0.0
      %vm3719 = vcmp.ge.f32.partialorder %v3128, 0.0
      %vm3720 = vcmp.ge.f32.partialorder %v3130, 0.0
      %vm3721 = vcmp.ge.f32.partialorder %v3133, 0.0
      %vm3722 = vcmp.ge.f32.partialorder %v3135, 0.0
      %vm3723 = vcmp.ge.f32.partialorder %v3138, 0.0
      %vm3724 = vcmp.ge.f32.partialorder %v3140, 0.0
      %vm3725 = vcmp.ge.f32.partialorder %v3143, 0.0
      %vm3726 = vcmp.ge.f32.partialorder %v3145, 0.0
      %vm3727 = vcmp.ge.f32.partialorder %v3148, 0.0
      %vm3728 = vcmp.ge.f32.partialorder %v3150, 0.0
      %vm3729 = vcmp.ge.f32.partialorder %v3153, 0.0
      %vm3730 = vcmp.ge.f32.partialorder %v3155, 0.0
      %vm3731 = vcmp.ge.f32.partialorder %v3158, 0.0
      %vm3732 = vcmp.ge.f32.partialorder %v3160, 0.0
      %vm3733 = vcmp.ge.f32.partialorder %v3163, 0.0
      %vm3734 = vcmp.ge.f32.partialorder %v3165, 0.0
      %vm3735 = vcmp.ge.f32.partialorder %v3168, 0.0
      %vm3736 = vcmp.ge.f32.partialorder %v3170, 0.0
      %vm3737 = vcmp.ge.f32.partialorder %v3173, 0.0
      %vm3738 = vcmp.ge.f32.partialorder %v3175, 0.0
      %vm3739 = vcmp.ge.f32.partialorder %v3178, 0.0
      %vm3740 = vcmp.ge.f32.partialorder %v3180, 0.0
      %vm3741 = vcmp.ge.f32.partialorder %v3183, 0.0
      %vm3742 = vcmp.ge.f32.partialorder %v3185, 0.0
      %vm3743 = vcmp.ge.f32.partialorder %v3188, 0.0
      %vm3744 = vcmp.ge.f32.partialorder %v3190, 0.0
      %vm3745 = vcmp.ge.f32.partialorder %v3193, 0.0
      %vm3746 = vcmp.ge.f32.partialorder %v3195, 0.0
      %vm3747 = vcmp.ge.f32.partialorder %v3198, 0.0
      %vm3748 = vcmp.ge.f32.partialorder %v3200, 0.0
      %vm3749 = vcmp.ge.f32.partialorder %v3203, 0.0
      %vm3750 = vcmp.ge.f32.partialorder %v3205, 0.0
      %vm3751 = vcmp.ge.f32.partialorder %v3208, 0.0
      %vm3752 = vcmp.ge.f32.partialorder %v3210, 0.0
      %vm3753 = vcmp.ge.f32.partialorder %v3213, 0.0
      %vm3754 = vcmp.ge.f32.partialorder %v3215, 0.0
      %vm3755 = vcmp.ge.f32.partialorder %v3218, 0.0
      %vm3756 = vcmp.ge.f32.partialorder %v3220, 0.0
      %vm3757 = vcmp.ge.f32.partialorder %v3223, 0.0
      %vm3758 = vcmp.ge.f32.partialorder %v3225, 0.0
      %vm3759 = vcmp.ge.f32.partialorder %v3228, 0.0
      %vm3760 = vcmp.ge.f32.partialorder %v3230, 0.0
      %vm3761 = vcmp.ge.f32.partialorder %v3233, 0.0
      %vm3762 = vcmp.ge.f32.partialorder %v3235, 0.0
      %vm3763 = vcmp.ge.f32.partialorder %v3238, 0.0
      %vm3764 = vcmp.ge.f32.partialorder %v3240, 0.0
      %vm3765 = vcmp.ge.f32.partialorder %v3243, 0.0
      %vm3766 = vcmp.ge.f32.partialorder %v3245, 0.0
      %vm3767 = vcmp.ge.f32.partialorder %v3248, 0.0
      %vm3768 = vcmp.ge.f32.partialorder %v3250, 0.0
      %vm3769 = vcmp.ge.f32.partialorder %v3253, 0.0
      %vm3770 = vcmp.ge.f32.partialorder %v3255, 0.0
      %vm3771 = vcmp.ge.f32.partialorder %v3258, 0.0
      %vm3772 = vcmp.ge.f32.partialorder %v3260, 0.0
      %vm3773 = vcmp.ge.f32.partialorder %v3263, 0.0
      %vm3774 = vcmp.ge.f32.partialorder %v3265, 0.0
      %vm3775 = vcmp.ge.f32.partialorder %v3268, 0.0
      %vm3776 = vcmp.ge.f32.partialorder %v3270, 0.0
      %vm3777 = vcmp.ge.f32.partialorder %v3273, 0.0
      %vm3778 = vcmp.ge.f32.partialorder %v3275, 0.0
      %vm3779 = vcmp.ge.f32.partialorder %v3278, 0.0
      %vm3780 = vcmp.ge.f32.partialorder %v3280, 0.0
      %vm3781 = vcmp.ge.f32.partialorder %v3283, 0.0
      %vm3782 = vcmp.ge.f32.partialorder %v3285, 0.0
      %vm3783 = vcmp.ge.f32.partialorder %v3288, 0.0
      %vm3784 = vcmp.ge.f32.partialorder %v3290, 0.0
      %vm3785 = vcmp.ge.f32.partialorder %v3293, 0.0
      %vm3786 = vcmp.ge.f32.partialorder %v3295, 0.0
      %vm3787 = vcmp.ge.f32.partialorder %v3298, 0.0
      %vm3788 = vcmp.ge.f32.partialorder %v3300, 0.0
      %vm3789 = vcmp.ge.f32.partialorder %v3303, 0.0
      %vm3790 = vcmp.ge.f32.partialorder %v3305, 0.0
      %vm3791 = vcmp.ge.f32.partialorder %v3308, 0.0
      %vm3792 = vcmp.ge.f32.partialorder %v3310, 0.0
      %vm3793 = vcmp.ge.f32.partialorder %v3313, 0.0
      %vm3794 = vcmp.ge.f32.partialorder %v3315, 0.0
      %vm3795 = vcmp.ge.f32.partialorder %v3318, 0.0
      %vm3796 = vcmp.ge.f32.partialorder %v3320, 0.0
      %vm3797 = vcmp.ge.f32.partialorder %v3323, 0.0
      %vm3798 = vcmp.ge.f32.partialorder %v3325, 0.0
      %vm3799 = vcmp.ge.f32.partialorder %v3328, 0.0
      %vm3800 = vcmp.ge.f32.partialorder %v3330, 0.0
      %vm3801 = vcmp.ge.f32.partialorder %v3333, 0.0
      %vm3802 = vcmp.ge.f32.partialorder %v3335, 0.0
      %vm3803 = vcmp.ge.f32.partialorder %v3338, 0.0
      %vm3804 = vcmp.ge.f32.partialorder %v3340, 0.0
      %vm3805 = vcmp.ge.f32.partialorder %v3343, 0.0
      %vm3806 = vcmp.ge.f32.partialorder %v3345, 0.0
      %vm3807 = vcmp.ge.f32.partialorder %v3348, 0.0
      %vm3808 = vcmp.ge.f32.partialorder %v3350, 0.0
      %vm3809 = vcmp.ge.f32.partialorder %v3353, 0.0
      %vm3810 = vcmp.ge.f32.partialorder %v3355, 0.0
      %vm3811 = vcmp.ge.f32.partialorder %v3358, 0.0
      %vm3812 = vcmp.ge.f32.partialorder %v3360, 0.0
      %vm3813 = vcmp.ge.f32.partialorder %v3363, 0.0
      %vm3814 = vcmp.ge.f32.partialorder %v3365, 0.0
      %vm3815 = vcmp.ge.f32.partialorder %v3368, 0.0
      %vm3816 = vcmp.ge.f32.partialorder %v3370, 0.0
      %vm3817 = vcmp.ge.f32.partialorder %v3373, 0.0
      %vm3818 = vcmp.ge.f32.partialorder %v3375, 0.0
      %vm3819 = vcmp.ge.f32.partialorder %v3378, 0.0
      %vm3820 = vcmp.ge.f32.partialorder %v3380, 0.0
      %vm3821 = vcmp.ge.f32.partialorder %v3383, 0.0
      %vm3822 = vcmp.ge.f32.partialorder %v3385, 0.0
      %vm3823 = vcmp.ge.f32.partialorder %v3388, 0.0
      %vm3824 = vcmp.ge.f32.partialorder %v3390, 0.0
      %vm3825 = vcmp.ge.f32.partialorder %v3393, 0.0
      %vm3826 = vcmp.ge.f32.partialorder %v3395, 0.0
      %vm3827 = vcmp.ge.f32.partialorder %v3398, 0.0
      %vm3828 = vcmp.ge.f32.partialorder %v3400, 0.0
      %vm3829 = vcmp.ge.f32.partialorder %v3403, 0.0
      %vm3830 = vcmp.ge.f32.partialorder %v3405, 0.0
      %vm3831 = vcmp.ge.f32.partialorder %v3408, 0.0
      %vm3832 = vcmp.ge.f32.partialorder %v3410, 0.0
      %vm3833 = vcmp.ge.f32.partialorder %v3413, 0.0
      %vm3834 = vcmp.ge.f32.partialorder %v3415, 0.0
      %vm3835 = vcmp.ge.f32.partialorder %v3418, 0.0
      %vm3836 = vcmp.ge.f32.partialorder %v3420, 0.0
      %vm3837 = vcmp.ge.f32.partialorder %v3423, 0.0
      %vm3838 = vcmp.ge.f32.partialorder %v3425, 0.0
      %vm3839 = vcmp.ge.f32.partialorder %v3428, 0.0
      %vm3840 = vcmp.ge.f32.partialorder %v3430, 0.0
      %vm3841 = vcmp.ge.f32.partialorder %v3433, 0.0
      %vm3842 = vcmp.ge.f32.partialorder %v3435, 0.0
      %vm3843 = vcmp.ge.f32.partialorder %v3438, 0.0
      %vm3844 = vcmp.ge.f32.partialorder %v3440, 0.0
      %vm3845 = vcmp.ge.f32.partialorder %v3443, 0.0
      %vm3846 = vcmp.ge.f32.partialorder %v3445, 0.0
      %vm3847 = vcmp.ge.f32.partialorder %v3448, 0.0
      %vm3848 = vcmp.ge.f32.partialorder %v3450, 0.0
      %vm3849 = vcmp.ge.f32.partialorder %v3453, 0.0
      %vm3850 = vcmp.ge.f32.partialorder %v3455, 0.0
      %vm3851 = vcmp.ge.f32.partialorder %v3458, 0.0
      %vm3852 = vcmp.ge.f32.partialorder %v3460, 0.0
      %vm3853 = vcmp.ge.f32.partialorder %v3463, 0.0
      %vm3854 = vcmp.ge.f32.partialorder %v3465, 0.0
      %vm3855 = vcmp.ge.f32.partialorder %v3468, 0.0
      %vm3856 = vcmp.ge.f32.partialorder %v3470, 0.0
      %vm3857 = vcmp.ge.f32.partialorder %v3473, 0.0
      %vm3858 = vcmp.ge.f32.partialorder %v3475, 0.0
      %vm3859 = vcmp.ge.f32.partialorder %v3478, 0.0
      %vm3860 = vcmp.ge.f32.partialorder %v3480, 0.0
      %vm3861 = vcmp.ge.f32.partialorder %v3483, 0.0
      %vm3862 = vcmp.ge.f32.partialorder %v3485, 0.0
      %vm3863 = vcmp.ge.f32.partialorder %v3488, 0.0
      %vm3864 = vcmp.ge.f32.partialorder %v3490, 0.0
      %vm3865 = vcmp.ge.f32.partialorder %v3493, 0.0
      %vm3866 = vcmp.ge.f32.partialorder %v3495, 0.0
      %vm3867 = vcmp.ge.f32.partialorder %v3498, 0.0
      %vm3868 = vcmp.ge.f32.partialorder %v3500, 0.0
      %vm3869 = vcmp.ge.f32.partialorder %v3503, 0.0
      %vm3870 = vcmp.ge.f32.partialorder %v3505, 0.0
      %vm3871 = vcmp.ge.f32.partialorder %v3508, 0.0
      %vm3872 = vcmp.ge.f32.partialorder %v3510, 0.0
      %vm3873 = vcmp.ge.f32.partialorder %v3513, 0.0
      %vm3874 = vcmp.ge.f32.partialorder %v3515, 0.0
      %vm3875 = vcmp.ge.f32.partialorder %v3518, 0.0
      %vm3876 = vcmp.ge.f32.partialorder %v3520, 0.0
      %vm3877 = vcmp.ge.f32.partialorder %v3523, 0.0
      %vm3878 = vcmp.ge.f32.partialorder %v3525, 0.0
      %vm3879 = vcmp.ge.f32.partialorder %v3528, 0.0
      %vm3880 = vcmp.ge.f32.partialorder %v3530, 0.0
      %vm3881 = vcmp.ge.f32.partialorder %v3533, 0.0
      %vm3882 = vcmp.ge.f32.partialorder %v3535, 0.0
      %vm3883 = vcmp.ge.f32.partialorder %v3538, 0.0
      %vm3884 = vcmp.ge.f32.partialorder %v3540, 0.0
      %vm3885 = vcmp.ge.f32.partialorder %v3543, 0.0
      %vm3886 = vcmp.ge.f32.partialorder %v3545, 0.0
      %vm3887 = vcmp.ge.f32.partialorder %v3548, 0.0
      %vm3888 = vcmp.ge.f32.partialorder %v3550, 0.0
      %vm3889 = vcmp.ge.f32.partialorder %v3553, 0.0
      %vm3890 = vcmp.ge.f32.partialorder %v3555, 0.0
      %vm3891 = vcmp.ge.f32.partialorder %v3558, 0.0
      %vm3892 = vcmp.ge.f32.partialorder %v3560, 0.0
      %vm3893 = vcmp.ge.f32.partialorder %v3563, 0.0
      %vm3894 = vcmp.ge.f32.partialorder %v3565, 0.0
      %vm3895 = vcmp.ge.f32.partialorder %v3568, 0.0
      %vm3896 = vcmp.ge.f32.partialorder %v3570, 0.0
      %vm3897 = vcmp.ge.f32.partialorder %v3573, 0.0
      %vm3898 = vcmp.ge.f32.partialorder %v3575, 0.0
      %vm3899 = vcmp.ge.f32.partialorder %v3578, 0.0
      %vm3900 = vcmp.ge.f32.partialorder %v3580, 0.0
      %vm3901 = vcmp.ge.f32.partialorder %v3583, 0.0
      %vm3902 = vcmp.ge.f32.partialorder %v3585, 0.0
      %vm3903 = vcmp.ge.f32.partialorder %v3588, 0.0
      %vm3904 = vcmp.ge.f32.partialorder %v3590, 0.0
      %vm3905 = vcmp.ge.f32.partialorder %v3593, 0.0
      %vm3906 = vcmp.ge.f32.partialorder %v3595, 0.0
      %vm3907 = vcmp.ge.f32.partialorder %v3598, 0.0
      %vm3908 = vcmp.ge.f32.partialorder %v3600, 0.0
      %vm3909 = vcmp.ge.f32.partialorder %v3603, 0.0
      %vm3910 = vcmp.ge.f32.partialorder %v3605, 0.0
      %vm3911 = vcmp.ge.f32.partialorder %v3608, 0.0
      %vm3912 = vcmp.ge.f32.partialorder %v3610, 0.0
      %vm3913 = vcmp.ge.f32.partialorder %v3613, 0.0
      %vm3914 = vcmp.ge.f32.partialorder %v3615, 0.0
      %vm3915 = vcmp.ge.f32.partialorder %v3618, 0.0
      %vm3916 = vcmp.ge.f32.partialorder %v3620, 0.0
      %vm3917 = vcmp.ge.f32.partialorder %v3623, 0.0
      %vm3918 = vcmp.ge.f32.partialorder %v3625, 0.0
      %vm3919 = vcmp.ge.f32.partialorder %v3628, 0.0
      %vm3920 = vcmp.ge.f32.partialorder %v3630, 0.0
      %vm3921 = vcmp.ge.f32.partialorder %v3633, 0.0
      %vm3922 = vcmp.ge.f32.partialorder %v3635, 0.0
      %vm3923 = vcmp.ge.f32.partialorder %v3638, 0.0
      %vm3924 = vcmp.ge.f32.partialorder %v3640, 0.0
      %vm3925 = vcmp.ge.f32.partialorder %v3643, 0.0
      %vm3926 = vcmp.ge.f32.partialorder %v3645, 0.0
      %vm3927 = vcmp.ge.f32.partialorder %v3648, 0.0
      %vm3928 = vcmp.ge.f32.partialorder %v3650, 0.0
      %vm3929 = vcmp.ge.f32.partialorder %v3653, 0.0
      %vm3930 = vcmp.ge.f32.partialorder %v3655, 0.0
      %vm3931 = vcmp.ge.f32.partialorder %v3658, 0.0
      %vm3932 = vcmp.ge.f32.partialorder %v3660, 0.0
      %vm3933 = vcmp.ge.f32.partialorder %v3663, 0.0
      %vm3934 = vcmp.ge.f32.partialorder %v3665, 0.0
      %vm3935 = vcmp.ge.f32.partialorder %v3668, 0.0
      %vm3936 = vcmp.ge.f32.partialorder %v3670, 0.0
      %vm3937 = vcmp.ge.f32.partialorder %v3673, 0.0
      %vm3938 = vcmp.ge.f32.partialorder %v3675, 0.0
      %vm3939 = vcmp.ge.f32.partialorder %v3678, 0.0
      %vm3940 = vcmp.ge.f32.partialorder %v3680, 0.0
      %vm3941 = vcmp.ge.f32.partialorder %v3683, 0.0
      %vm3942 = vcmp.ge.f32.partialorder %v3685, 0.0
      %v3943 = vmul.f32 %v3048, 0.01
      %v3944 = vmul.f32 %v3050, 0.01
      %v3945 = vmul.f32 %v3053, 0.01
      %v3946 = vmul.f32 %v3055, 0.01
      %v3947 = vmul.f32 %v3058, 0.01
      %v3948 = vmul.f32 %v3060, 0.01
      %v3949 = vmul.f32 %v3063, 0.01
      %v3950 = vmul.f32 %v3065, 0.01
      %v3951 = vmul.f32 %v3068, 0.01
      %v3952 = vmul.f32 %v3070, 0.01
      %v3953 = vmul.f32 %v3073, 0.01
      %v3954 = vmul.f32 %v3075, 0.01
      %v3955 = vmul.f32 %v3078, 0.01
      %v3956 = vmul.f32 %v3080, 0.01
      %v3957 = vmul.f32 %v3083, 0.01
      %v3958 = vmul.f32 %v3085, 0.01
      %v3959 = vmul.f32 %v3088, 0.01
      %v3960 = vmul.f32 %v3090, 0.01
      %v3961 = vmul.f32 %v3093, 0.01
      %v3962 = vmul.f32 %v3095, 0.01
      %v3963 = vmul.f32 %v3098, 0.01
      %v3964 = vmul.f32 %v3100, 0.01
      %v3965 = vmul.f32 %v3103, 0.01
      %v3966 = vmul.f32 %v3105, 0.01
      %v3967 = vmul.f32 %v3108, 0.01
      %v3968 = vmul.f32 %v3110, 0.01
      %v3969 = vmul.f32 %v3113, 0.01
      %v3970 = vmul.f32 %v3115, 0.01
      %v3971 = vmul.f32 %v3118, 0.01
      %v3972 = vmul.f32 %v3120, 0.01
      %v3973 = vmul.f32 %v3123, 0.01
      %v3974 = vmul.f32 %v3125, 0.01
      %v3975 = vmul.f32 %v3128, 0.01
      %v3976 = vmul.f32 %v3130, 0.01
      %v3977 = vmul.f32 %v3133, 0.01
      %v3978 = vmul.f32 %v3135, 0.01
      %v3979 = vmul.f32 %v3138, 0.01
      %v3980 = vmul.f32 %v3140, 0.01
      %v3981 = vmul.f32 %v3143, 0.01
      %v3982 = vmul.f32 %v3145, 0.01
      %v3983 = vmul.f32 %v3148, 0.01
      %v3984 = vmul.f32 %v3150, 0.01
      %v3985 = vmul.f32 %v3153, 0.01
      %v3986 = vmul.f32 %v3155, 0.01
      %v3987 = vmul.f32 %v3158, 0.01
      %v3988 = vmul.f32 %v3160, 0.01
      %v3989 = vmul.f32 %v3163, 0.01
      %v3990 = vmul.f32 %v3165, 0.01
      %v3991 = vmul.f32 %v3168, 0.01
      %v3992 = vmul.f32 %v3170, 0.01
      %v3993 = vmul.f32 %v3173, 0.01
      %v3994 = vmul.f32 %v3175, 0.01
      %v3995 = vmul.f32 %v3178, 0.01
      %v3996 = vmul.f32 %v3180, 0.01
      %v3997 = vmul.f32 %v3183, 0.01
      %v3998 = vmul.f32 %v3185, 0.01
      %v3999 = vmul.f32 %v3188, 0.01
      %v4000 = vmul.f32 %v3190, 0.01
      %v4001 = vmul.f32 %v3193, 0.01
      %v4002 = vmul.f32 %v3195, 0.01
      %v4003 = vmul.f32 %v3198, 0.01
      %v4004 = vmul.f32 %v3200, 0.01
      %v4005 = vmul.f32 %v3203, 0.01
      %v4006 = vmul.f32 %v3205, 0.01
      %v4007 = vmul.f32 %v3208, 0.01
      %v4008 = vmul.f32 %v3210, 0.01
      %v4009 = vmul.f32 %v3213, 0.01
      %v4010 = vmul.f32 %v3215, 0.01
      %v4011 = vmul.f32 %v3218, 0.01
      %v4012 = vmul.f32 %v3220, 0.01
      %v4013 = vmul.f32 %v3223, 0.01
      %v4014 = vmul.f32 %v3225, 0.01
      %v4015 = vmul.f32 %v3228, 0.01
      %v4016 = vmul.f32 %v3230, 0.01
      %v4017 = vmul.f32 %v3233, 0.01
      %v4018 = vmul.f32 %v3235, 0.01
      %v4019 = vmul.f32 %v3238, 0.01
      %v4020 = vmul.f32 %v3240, 0.01
      %v4021 = vmul.f32 %v3243, 0.01
      %v4022 = vmul.f32 %v3245, 0.01
      %v4023 = vmul.f32 %v3248, 0.01
      %v4024 = vmul.f32 %v3250, 0.01
      %v4025 = vmul.f32 %v3253, 0.01
      %v4026 = vmul.f32 %v3255, 0.01
      %v4027 = vmul.f32 %v3258, 0.01
      %v4028 = vmul.f32 %v3260, 0.01
      %v4029 = vmul.f32 %v3263, 0.01
      %v4030 = vmul.f32 %v3265, 0.01
      %v4031 = vmul.f32 %v3268, 0.01
      %v4032 = vmul.f32 %v3270, 0.01
      %v4033 = vmul.f32 %v3273, 0.01
      %v4034 = vmul.f32 %v3275, 0.01
      %v4035 = vmul.f32 %v3278, 0.01
      %v4036 = vmul.f32 %v3280, 0.01
      %v4037 = vmul.f32 %v3283, 0.01
      %v4038 = vmul.f32 %v3285, 0.01
      %v4039 = vmul.f32 %v3288, 0.01
      %v4040 = vmul.f32 %v3290, 0.01
      %v4041 = vmul.f32 %v3293, 0.01
      %v4042 = vmul.f32 %v3295, 0.01
      %v4043 = vmul.f32 %v3298, 0.01
      %v4044 = vmul.f32 %v3300, 0.01
      %v4045 = vmul.f32 %v3303, 0.01
      %v4046 = vmul.f32 %v3305, 0.01
      %v4047 = vmul.f32 %v3308, 0.01
      %v4048 = vmul.f32 %v3310, 0.01
      %v4049 = vmul.f32 %v3313, 0.01
      %v4050 = vmul.f32 %v3315, 0.01
      %v4051 = vmul.f32 %v3318, 0.01
      %v4052 = vmul.f32 %v3320, 0.01
      %v4053 = vmul.f32 %v3323, 0.01
      %v4054 = vmul.f32 %v3325, 0.01
      %v4055 = vmul.f32 %v3328, 0.01
      %v4056 = vmul.f32 %v3330, 0.01
      %v4057 = vmul.f32 %v3333, 0.01
      %v4058 = vmul.f32 %v3335, 0.01
      %v4059 = vmul.f32 %v3338, 0.01
      %v4060 = vmul.f32 %v3340, 0.01
      %v4061 = vmul.f32 %v3343, 0.01
      %v4062 = vmul.f32 %v3345, 0.01
      %v4063 = vmul.f32 %v3348, 0.01
      %v4064 = vmul.f32 %v3350, 0.01
      %v4065 = vmul.f32 %v3353, 0.01
      %v4066 = vmul.f32 %v3355, 0.01
      %v4067 = vmul.f32 %v3358, 0.01
      %v4068 = vmul.f32 %v3360, 0.01
      %v4069 = vmul.f32 %v3363, 0.01
      %v4070 = vmul.f32 %v3365, 0.01
      %v4071 = vmul.f32 %v3368, 0.01
      %v4072 = vmul.f32 %v3370, 0.01
      %v4073 = vmul.f32 %v3373, 0.01
      %v4074 = vmul.f32 %v3375, 0.01
      %v4075 = vmul.f32 %v3378, 0.01
      %v4076 = vmul.f32 %v3380, 0.01
      %v4077 = vmul.f32 %v3383, 0.01
      %v4078 = vmul.f32 %v3385, 0.01
      %v4079 = vmul.f32 %v3388, 0.01
      %v4080 = vmul.f32 %v3390, 0.01
      %v4081 = vmul.f32 %v3393, 0.01
      %v4082 = vmul.f32 %v3395, 0.01
      %v4083 = vmul.f32 %v3398, 0.01
      %v4084 = vmul.f32 %v3400, 0.01
      %v4085 = vmul.f32 %v3403, 0.01
      %v4086 = vmul.f32 %v3405, 0.01
      %v4087 = vmul.f32 %v3408, 0.01
      %v4088 = vmul.f32 %v3410, 0.01
      %v4089 = vmul.f32 %v3413, 0.01
      %v4090 = vmul.f32 %v3415, 0.01
      %v4091 = vmul.f32 %v3418, 0.01
      %v4092 = vmul.f32 %v3420, 0.01
      %v4093 = vmul.f32 %v3423, 0.01
      %v4094 = vmul.f32 %v3425, 0.01
      %v4095 = vmul.f32 %v3428, 0.01
      %v4096 = vmul.f32 %v3430, 0.01
      %v4097 = vmul.f32 %v3433, 0.01
      %v4098 = vmul.f32 %v3435, 0.01
      %v4099 = vmul.f32 %v3438, 0.01
      %v4100 = vmul.f32 %v3440, 0.01
      %v4101 = vmul.f32 %v3443, 0.01
      %v4102 = vmul.f32 %v3445, 0.01
      %v4103 = vmul.f32 %v3448, 0.01
      %v4104 = vmul.f32 %v3450, 0.01
      %v4105 = vmul.f32 %v3453, 0.01
      %v4106 = vmul.f32 %v3455, 0.01
      %v4107 = vmul.f32 %v3458, 0.01
      %v4108 = vmul.f32 %v3460, 0.01
      %v4109 = vmul.f32 %v3463, 0.01
      %v4110 = vmul.f32 %v3465, 0.01
      %v4111 = vmul.f32 %v3468, 0.01
      %v4112 = vmul.f32 %v3470, 0.01
      %v4113 = vmul.f32 %v3473, 0.01
      %v4114 = vmul.f32 %v3475, 0.01
      %v4115 = vmul.f32 %v3478, 0.01
      %v4116 = vmul.f32 %v3480, 0.01
      %v4117 = vmul.f32 %v3483, 0.01
      %v4118 = vmul.f32 %v3485, 0.01
      %v4119 = vmul.f32 %v3488, 0.01
      %v4120 = vmul.f32 %v3490, 0.01
      %v4121 = vmul.f32 %v3493, 0.01
      %v4122 = vmul.f32 %v3495, 0.01
      %v4123 = vmul.f32 %v3498, 0.01
      %v4124 = vmul.f32 %v3500, 0.01
      %v4125 = vmul.f32 %v3503, 0.01
      %v4126 = vmul.f32 %v3505, 0.01
      %v4127 = vmul.f32 %v3508, 0.01
      %v4128 = vmul.f32 %v3510, 0.01
      %v4129 = vmul.f32 %v3513, 0.01
      %v4130 = vmul.f32 %v3515, 0.01
      %v4131 = vmul.f32 %v3518, 0.01
      %v4132 = vmul.f32 %v3520, 0.01
      %v4133 = vmul.f32 %v3523, 0.01
      %v4134 = vmul.f32 %v3525, 0.01
      %v4135 = vmul.f32 %v3528, 0.01
      %v4136 = vmul.f32 %v3530, 0.01
      %v4137 = vmul.f32 %v3533, 0.01
      %v4138 = vmul.f32 %v3535, 0.01
      %v4139 = vmul.f32 %v3538, 0.01
      %v4140 = vmul.f32 %v3540, 0.01
      %v4141 = vmul.f32 %v3543, 0.01
      %v4142 = vmul.f32 %v3545, 0.01
      %v4143 = vmul.f32 %v3548, 0.01
      %v4144 = vmul.f32 %v3550, 0.01
      %v4145 = vmul.f32 %v3553, 0.01
      %v4146 = vmul.f32 %v3555, 0.01
      %v4147 = vmul.f32 %v3558, 0.01
      %v4148 = vmul.f32 %v3560, 0.01
      %v4149 = vmul.f32 %v3563, 0.01
      %v4150 = vmul.f32 %v3565, 0.01
      %v4151 = vmul.f32 %v3568, 0.01
      %v4152 = vmul.f32 %v3570, 0.01
      %v4153 = vmul.f32 %v3573, 0.01
      %v4154 = vmul.f32 %v3575, 0.01
      %v4155 = vmul.f32 %v3578, 0.01
      %v4156 = vmul.f32 %v3580, 0.01
      %v4157 = vmul.f32 %v3583, 0.01
      %v4158 = vmul.f32 %v3585, 0.01
      %v4159 = vmul.f32 %v3588, 0.01
      %v4160 = vmul.f32 %v3590, 0.01
      %v4161 = vmul.f32 %v3593, 0.01
      %v4162 = vmul.f32 %v3595, 0.01
      %v4163 = vmul.f32 %v3598, 0.01
      %v4164 = vmul.f32 %v3600, 0.01
      %v4165 = vmul.f32 %v3603, 0.01
      %v4166 = vmul.f32 %v3605, 0.01
      %v4167 = vmul.f32 %v3608, 0.01
      %v4168 = vmul.f32 %v3610, 0.01
      %v4169 = vmul.f32 %v3613, 0.01
      %v4170 = vmul.f32 %v3615, 0.01
      %v4171 = vmul.f32 %v3618, 0.01
      %v4172 = vmul.f32 %v3620, 0.01
      %v4173 = vmul.f32 %v3623, 0.01
      %v4174 = vmul.f32 %v3625, 0.01
      %v4175 = vmul.f32 %v3628, 0.01
      %v4176 = vmul.f32 %v3630, 0.01
      %v4177 = vmul.f32 %v3633, 0.01
      %v4178 = vmul.f32 %v3635, 0.01
      %v4179 = vmul.f32 %v3638, 0.01
      %v4180 = vmul.f32 %v3640, 0.01
      %v4181 = vmul.f32 %v3643, 0.01
      %v4182 = vmul.f32 %v3645, 0.01
      %v4183 = vmul.f32 %v3648, 0.01
      %v4184 = vmul.f32 %v3650, 0.01
      %v4185 = vmul.f32 %v3653, 0.01
      %v4186 = vmul.f32 %v3655, 0.01
      %v4187 = vmul.f32 %v3658, 0.01
      %v4188 = vmul.f32 %v3660, 0.01
      %v4189 = vmul.f32 %v3663, 0.01
      %v4190 = vmul.f32 %v3665, 0.01
      %v4191 = vmul.f32 %v3668, 0.01
      %v4192 = vmul.f32 %v3670, 0.01
      %v4193 = vmul.f32 %v3673, 0.01
      %v4194 = vmul.f32 %v3675, 0.01
      %v4195 = vmul.f32 %v3678, 0.01
      %v4196 = vmul.f32 %v3680, 0.01
      %v4197 = vmul.f32 %v3683, 0.01
      %v4198 = vmul.f32 %v3685, 0.01
      %v4199 = vsel %vm3687, %v3048, %v3943
      %v4200 = vsel %vm3688, %v3050, %v3944
      %v4201 = vsel %vm3689, %v3053, %v3945
      %v4202 = vsel %vm3690, %v3055, %v3946
      %v4203 = vsel %vm3691, %v3058, %v3947
      %v4204 = vsel %vm3692, %v3060, %v3948
      %v4205 = vsel %vm3693, %v3063, %v3949
      %v4206 = vsel %vm3694, %v3065, %v3950
      %v4207 = vsel %vm3695, %v3068, %v3951
      %v4208 = vsel %vm3696, %v3070, %v3952
      %v4209 = vsel %vm3697, %v3073, %v3953
      %v4210 = vsel %vm3698, %v3075, %v3954
      %v4211 = vsel %vm3699, %v3078, %v3955
      %v4212 = vsel %vm3700, %v3080, %v3956
      %v4213 = vsel %vm3701, %v3083, %v3957
      %v4214 = vsel %vm3702, %v3085, %v3958
      %v4215 = vsel %vm3703, %v3088, %v3959
      %v4216 = vsel %vm3704, %v3090, %v3960
      %v4217 = vsel %vm3705, %v3093, %v3961
      %v4218 = vsel %vm3706, %v3095, %v3962
      %v4219 = vsel %vm3707, %v3098, %v3963
      %v4220 = vsel %vm3708, %v3100, %v3964
      %v4221 = vsel %vm3709, %v3103, %v3965
      %v4222 = vsel %vm3710, %v3105, %v3966
      %v4223 = vsel %vm3711, %v3108, %v3967
      %v4224 = vsel %vm3712, %v3110, %v3968
      %v4225 = vsel %vm3713, %v3113, %v3969
      %v4226 = vsel %vm3714, %v3115, %v3970
      %v4227 = vsel %vm3715, %v3118, %v3971
      %v4228 = vsel %vm3716, %v3120, %v3972
      %v4229 = vsel %vm3717, %v3123, %v3973
      %v4230 = vsel %vm3718, %v3125, %v3974
      %v4231 = vsel %vm3719, %v3128, %v3975
      %v4232 = vsel %vm3720, %v3130, %v3976
      %v4233 = vsel %vm3721, %v3133, %v3977
      %v4234 = vsel %vm3722, %v3135, %v3978
      %v4235 = vsel %vm3723, %v3138, %v3979
      %v4236 = vsel %vm3724, %v3140, %v3980
      %v4237 = vsel %vm3725, %v3143, %v3981
      %v4238 = vsel %vm3726, %v3145, %v3982
      %v4239 = vsel %vm3727, %v3148, %v3983
      %v4240 = vsel %vm3728, %v3150, %v3984
      %v4241 = vsel %vm3729, %v3153, %v3985
      %v4242 = vsel %vm3730, %v3155, %v3986
      %v4243 = vsel %vm3731, %v3158, %v3987
      %v4244 = vsel %vm3732, %v3160, %v3988
      %v4245 = vsel %vm3733, %v3163, %v3989
      %v4246 = vsel %vm3734, %v3165, %v3990
      %v4247 = vsel %vm3735, %v3168, %v3991
      %v4248 = vsel %vm3736, %v3170, %v3992
      %v4249 = vsel %vm3737, %v3173, %v3993
      %v4250 = vsel %vm3738, %v3175, %v3994
      %v4251 = vsel %vm3739, %v3178, %v3995
      %v4252 = vsel %vm3740, %v3180, %v3996
      %v4253 = vsel %vm3741, %v3183, %v3997
      %v4254 = vsel %vm3742, %v3185, %v3998
      %v4255 = vsel %vm3743, %v3188, %v3999
      %v4256 = vsel %vm3744, %v3190, %v4000
      %v4257 = vsel %vm3745, %v3193, %v4001
      %v4258 = vsel %vm3746, %v3195, %v4002
      %v4259 = vsel %vm3747, %v3198, %v4003
      %v4260 = vsel %vm3748, %v3200, %v4004
      %v4261 = vsel %vm3749, %v3203, %v4005
      %v4262 = vsel %vm3750, %v3205, %v4006
      %v4263 = vsel %vm3751, %v3208, %v4007
      %v4264 = vsel %vm3752, %v3210, %v4008
      %v4265 = vsel %vm3753, %v3213, %v4009
      %v4266 = vsel %vm3754, %v3215, %v4010
      %v4267 = vsel %vm3755, %v3218, %v4011
      %v4268 = vsel %vm3756, %v3220, %v4012
      %v4269 = vsel %vm3757, %v3223, %v4013
      %v4270 = vsel %vm3758, %v3225, %v4014
      %v4271 = vsel %vm3759, %v3228, %v4015
      %v4272 = vsel %vm3760, %v3230, %v4016
      %v4273 = vsel %vm3761, %v3233, %v4017
      %v4274 = vsel %vm3762, %v3235, %v4018
      %v4275 = vsel %vm3763, %v3238, %v4019
      %v4276 = vsel %vm3764, %v3240, %v4020
      %v4277 = vsel %vm3765, %v3243, %v4021
      %v4278 = vsel %vm3766, %v3245, %v4022
      %v4279 = vsel %vm3767, %v3248, %v4023
      %v4280 = vsel %vm3768, %v3250, %v4024
      %v4281 = vsel %vm3769, %v3253, %v4025
      %v4282 = vsel %vm3770, %v3255, %v4026
      %v4283 = vsel %vm3771, %v3258, %v4027
      %v4284 = vsel %vm3772, %v3260, %v4028
      %v4285 = vsel %vm3773, %v3263, %v4029
      %v4286 = vsel %vm3774, %v3265, %v4030
      %v4287 = vsel %vm3775, %v3268, %v4031
      %v4288 = vsel %vm3776, %v3270, %v4032
      %v4289 = vsel %vm3777, %v3273, %v4033
      %v4290 = vsel %vm3778, %v3275, %v4034
      %v4291 = vsel %vm3779, %v3278, %v4035
      %v4292 = vsel %vm3780, %v3280, %v4036
      %v4293 = vsel %vm3781, %v3283, %v4037
      %v4294 = vsel %vm3782, %v3285, %v4038
      %v4295 = vsel %vm3783, %v3288, %v4039
      %v4296 = vsel %vm3784, %v3290, %v4040
      %v4297 = vsel %vm3785, %v3293, %v4041
      %v4298 = vsel %vm3786, %v3295, %v4042
      %v4299 = vsel %vm3787, %v3298, %v4043
      %v4300 = vsel %vm3788, %v3300, %v4044
      %v4301 = vsel %vm3789, %v3303, %v4045
      %v4302 = vsel %vm3790, %v3305, %v4046
      %v4303 = vsel %vm3791, %v3308, %v4047
      %v4304 = vsel %vm3792, %v3310, %v4048
      %v4305 = vsel %vm3793, %v3313, %v4049
      %v4306 = vsel %vm3794, %v3315, %v4050
      %v4307 = vsel %vm3795, %v3318, %v4051
      %v4308 = vsel %vm3796, %v3320, %v4052
      %v4309 = vsel %vm3797, %v3323, %v4053
      %v4310 = vsel %vm3798, %v3325, %v4054
      %v4311 = vsel %vm3799, %v3328, %v4055
      %v4312 = vsel %vm3800, %v3330, %v4056
      %v4313 = vsel %vm3801, %v3333, %v4057
      %v4314 = vsel %vm3802, %v3335, %v4058
      %v4315 = vsel %vm3803, %v3338, %v4059
      %v4316 = vsel %vm3804, %v3340, %v4060
      %v4317 = vsel %vm3805, %v3343, %v4061
      %v4318 = vsel %vm3806, %v3345, %v4062
      %v4319 = vsel %vm3807, %v3348, %v4063
      %v4320 = vsel %vm3808, %v3350, %v4064
      %v4321 = vsel %vm3809, %v3353, %v4065
      %v4322 = vsel %vm3810, %v3355, %v4066
      %v4323 = vsel %vm3811, %v3358, %v4067
      %v4324 = vsel %vm3812, %v3360, %v4068
      %v4325 = vsel %vm3813, %v3363, %v4069
      %v4326 = vsel %vm3814, %v3365, %v4070
      %v4327 = vsel %vm3815, %v3368, %v4071
      %v4328 = vsel %vm3816, %v3370, %v4072
      %v4329 = vsel %vm3817, %v3373, %v4073
      %v4330 = vsel %vm3818, %v3375, %v4074
      %v4331 = vsel %vm3819, %v3378, %v4075
      %v4332 = vsel %vm3820, %v3380, %v4076
      %v4333 = vsel %vm3821, %v3383, %v4077
      %v4334 = vsel %vm3822, %v3385, %v4078
      %v4335 = vsel %vm3823, %v3388, %v4079
      %v4336 = vsel %vm3824, %v3390, %v4080
      %v4337 = vsel %vm3825, %v3393, %v4081
      %v4338 = vsel %vm3826, %v3395, %v4082
      %v4339 = vsel %vm3827, %v3398, %v4083
      %v4340 = vsel %vm3828, %v3400, %v4084
      %v4341 = vsel %vm3829, %v3403, %v4085
      %v4342 = vsel %vm3830, %v3405, %v4086
      %v4343 = vsel %vm3831, %v3408, %v4087
      %v4344 = vsel %vm3832, %v3410, %v4088
      %v4345 = vsel %vm3833, %v3413, %v4089
      %v4346 = vsel %vm3834, %v3415, %v4090
      %v4347 = vsel %vm3835, %v3418, %v4091
      %v4348 = vsel %vm3836, %v3420, %v4092
      %v4349 = vsel %vm3837, %v3423, %v4093
      %v4350 = vsel %vm3838, %v3425, %v4094
      %v4351 = vsel %vm3839, %v3428, %v4095
      %v4352 = vsel %vm3840, %v3430, %v4096
      %v4353 = vsel %vm3841, %v3433, %v4097
      %v4354 = vsel %vm3842, %v3435, %v4098
      %v4355 = vsel %vm3843, %v3438, %v4099
      %v4356 = vsel %vm3844, %v3440, %v4100
      %v4357 = vsel %vm3845, %v3443, %v4101
      %v4358 = vsel %vm3846, %v3445, %v4102
      %v4359 = vsel %vm3847, %v3448, %v4103
      %v4360 = vsel %vm3848, %v3450, %v4104
      %v4361 = vsel %vm3849, %v3453, %v4105
      %v4362 = vsel %vm3850, %v3455, %v4106
      %v4363 = vsel %vm3851, %v3458, %v4107
      %v4364 = vsel %vm3852, %v3460, %v4108
      %v4365 = vsel %vm3853, %v3463, %v4109
      %v4366 = vsel %vm3854, %v3465, %v4110
      %v4367 = vsel %vm3855, %v3468, %v4111
      %v4368 = vsel %vm3856, %v3470, %v4112
      %v4369 = vsel %vm3857, %v3473, %v4113
      %v4370 = vsel %vm3858, %v3475, %v4114
      %v4371 = vsel %vm3859, %v3478, %v4115
      %v4372 = vsel %vm3860, %v3480, %v4116
      %v4373 = vsel %vm3861, %v3483, %v4117
      %v4374 = vsel %vm3862, %v3485, %v4118
      %v4375 = vsel %vm3863, %v3488, %v4119
      %v4376 = vsel %vm3864, %v3490, %v4120
      %v4377 = vsel %vm3865, %v3493, %v4121
      %v4378 = vsel %vm3866, %v3495, %v4122
      %v4379 = vsel %vm3867, %v3498, %v4123
      %v4380 = vsel %vm3868, %v3500, %v4124
      %v4381 = vsel %vm3869, %v3503, %v4125
      %v4382 = vsel %vm3870, %v3505, %v4126
      %v4383 = vsel %vm3871, %v3508, %v4127
      %v4384 = vsel %vm3872, %v3510, %v4128
      %v4385 = vsel %vm3873, %v3513, %v4129
      %v4386 = vsel %vm3874, %v3515, %v4130
      %v4387 = vsel %vm3875, %v3518, %v4131
      %v4388 = vsel %vm3876, %v3520, %v4132
      %v4389 = vsel %vm3877, %v3523, %v4133
      %v4390 = vsel %vm3878, %v3525, %v4134
      %v4391 = vsel %vm3879, %v3528, %v4135
      %v4392 = vsel %vm3880, %v3530, %v4136
      %v4393 = vsel %vm3881, %v3533, %v4137
      %v4394 = vsel %vm3882, %v3535, %v4138
      %v4395 = vsel %vm3883, %v3538, %v4139
      %v4396 = vsel %vm3884, %v3540, %v4140
      %v4397 = vsel %vm3885, %v3543, %v4141
      %v4398 = vsel %vm3886, %v3545, %v4142
      %v4399 = vsel %vm3887, %v3548, %v4143
      %v4400 = vsel %vm3888, %v3550, %v4144
      %v4401 = vsel %vm3889, %v3553, %v4145
      %v4402 = vsel %vm3890, %v3555, %v4146
      %v4403 = vsel %vm3891, %v3558, %v4147
      %v4404 = vsel %vm3892, %v3560, %v4148
      %v4405 = vsel %vm3893, %v3563, %v4149
      %v4406 = vsel %vm3894, %v3565, %v4150
      %v4407 = vsel %vm3895, %v3568, %v4151
      %v4408 = vsel %vm3896, %v3570, %v4152
      %v4409 = vsel %vm3897, %v3573, %v4153
      %v4410 = vsel %vm3898, %v3575, %v4154
      %v4411 = vsel %vm3899, %v3578, %v4155
      %v4412 = vsel %vm3900, %v3580, %v4156
      %v4413 = vsel %vm3901, %v3583, %v4157
      %v4414 = vsel %vm3902, %v3585, %v4158
      %v4415 = vsel %vm3903, %v3588, %v4159
      %v4416 = vsel %vm3904, %v3590, %v4160
      %v4417 = vsel %vm3905, %v3593, %v4161
      %v4418 = vsel %vm3906, %v3595, %v4162
      %v4419 = vsel %vm3907, %v3598, %v4163
      %v4420 = vsel %vm3908, %v3600, %v4164
      %v4421 = vsel %vm3909, %v3603, %v4165
      %v4422 = vsel %vm3910, %v3605, %v4166
      %v4423 = vsel %vm3911, %v3608, %v4167
      %v4424 = vsel %vm3912, %v3610, %v4168
      %v4425 = vsel %vm3913, %v3613, %v4169
      %v4426 = vsel %vm3914, %v3615, %v4170
      %v4427 = vsel %vm3915, %v3618, %v4171
      %v4428 = vsel %vm3916, %v3620, %v4172
      %v4429 = vsel %vm3917, %v3623, %v4173
      %v4430 = vsel %vm3918, %v3625, %v4174
      %v4431 = vsel %vm3919, %v3628, %v4175
      %v4432 = vsel %vm3920, %v3630, %v4176
      %v4433 = vsel %vm3921, %v3633, %v4177
      %v4434 = vsel %vm3922, %v3635, %v4178
      %v4435 = vsel %vm3923, %v3638, %v4179
      %v4436 = vsel %vm3924, %v3640, %v4180
      %v4437 = vsel %vm3925, %v3643, %v4181
      %v4438 = vsel %vm3926, %v3645, %v4182
      %v4439 = vsel %vm3927, %v3648, %v4183
      %v4440 = vsel %vm3928, %v3650, %v4184
      %v4441 = vsel %vm3929, %v3653, %v4185
      %v4442 = vsel %vm3930, %v3655, %v4186
      %v4443 = vsel %vm3931, %v3658, %v4187
      %v4444 = vsel %vm3932, %v3660, %v4188
      %v4445 = vsel %vm3933, %v3663, %v4189
      %v4446 = vsel %vm3934, %v3665, %v4190
      %v4447 = vsel %vm3935, %v3668, %v4191
      %v4448 = vsel %vm3936, %v3670, %v4192
      %v4449 = vsel %vm3937, %v3673, %v4193
      %v4450 = vsel %vm3938, %v3675, %v4194
      %v4451 = vsel %vm3939, %v3678, %v4195
      %v4452 = vsel %vm3940, %v3680, %v4196
      %v4453 = vsel %vm3941, %v3683, %v4197
      %v4454 = vsel %vm3942, %v3685, %v4198
      %v4455 = vpack.c.bf16 %v4200, %v4199
      %v4456 = vpack.c.bf16 %v4202, %v4201
      %v4457 = vpack.c.bf16 %v4204, %v4203
      %v4458 = vpack.c.bf16 %v4206, %v4205
      %v4459 = vpack.c.bf16 %v4208, %v4207
      %v4460 = vpack.c.bf16 %v4210, %v4209
      %v4461 = vpack.c.bf16 %v4212, %v4211
      %v4462 = vpack.c.bf16 %v4214, %v4213
      %v4463 = vpack.c.bf16 %v4216, %v4215
      %v4464 = vpack.c.bf16 %v4218, %v4217
      %v4465 = vpack.c.bf16 %v4220, %v4219
      %v4466 = vpack.c.bf16 %v4222, %v4221
      %v4467 = vpack.c.bf16 %v4224, %v4223
      %v4468 = vpack.c.bf16 %v4226, %v4225
      %v4469 = vpack.c.bf16 %v4228, %v4227
      %v4470 = vpack.c.bf16 %v4230, %v4229
      %v4471 = vpack.c.bf16 %v4232, %v4231
      %v4472 = vpack.c.bf16 %v4234, %v4233
      %v4473 = vpack.c.bf16 %v4236, %v4235
      %v4474 = vpack.c.bf16 %v4238, %v4237
      %v4475 = vpack.c.bf16 %v4240, %v4239
      %v4476 = vpack.c.bf16 %v4242, %v4241
      %v4477 = vpack.c.bf16 %v4244, %v4243
      %v4478 = vpack.c.bf16 %v4246, %v4245
      %v4479 = vpack.c.bf16 %v4248, %v4247
      %v4480 = vpack.c.bf16 %v4250, %v4249
      %v4481 = vpack.c.bf16 %v4252, %v4251
      %v4482 = vpack.c.bf16 %v4254, %v4253
      %v4483 = vpack.c.bf16 %v4256, %v4255
      %v4484 = vpack.c.bf16 %v4258, %v4257
      %v4485 = vpack.c.bf16 %v4260, %v4259
      %v4486 = vpack.c.bf16 %v4262, %v4261
      %v4487 = vpack.c.bf16 %v4264, %v4263
      %v4488 = vpack.c.bf16 %v4266, %v4265
      %v4489 = vpack.c.bf16 %v4268, %v4267
      %v4490 = vpack.c.bf16 %v4270, %v4269
      %v4491 = vpack.c.bf16 %v4272, %v4271
      %v4492 = vpack.c.bf16 %v4274, %v4273
      %v4493 = vpack.c.bf16 %v4276, %v4275
      %v4494 = vpack.c.bf16 %v4278, %v4277
      %v4495 = vpack.c.bf16 %v4280, %v4279
      %v4496 = vpack.c.bf16 %v4282, %v4281
      %v4497 = vpack.c.bf16 %v4284, %v4283
      %v4498 = vpack.c.bf16 %v4286, %v4285
      %v4499 = vpack.c.bf16 %v4288, %v4287
      %v4500 = vpack.c.bf16 %v4290, %v4289
      %v4501 = vpack.c.bf16 %v4292, %v4291
      %v4502 = vpack.c.bf16 %v4294, %v4293
      %v4503 = vpack.c.bf16 %v4296, %v4295
      %v4504 = vpack.c.bf16 %v4298, %v4297
      %v4505 = vpack.c.bf16 %v4300, %v4299
      %v4506 = vpack.c.bf16 %v4302, %v4301
      %v4507 = vpack.c.bf16 %v4304, %v4303
      %v4508 = vpack.c.bf16 %v4306, %v4305
      %v4509 = vpack.c.bf16 %v4308, %v4307
      %v4510 = vpack.c.bf16 %v4310, %v4309
      %v4511 = vpack.c.bf16 %v4312, %v4311
      %v4512 = vpack.c.bf16 %v4314, %v4313
      %v4513 = vpack.c.bf16 %v4316, %v4315
      %v4514 = vpack.c.bf16 %v4318, %v4317
      %v4515 = vpack.c.bf16 %v4320, %v4319
      %v4516 = vpack.c.bf16 %v4322, %v4321
      %v4517 = vpack.c.bf16 %v4324, %v4323
      %v4518 = vpack.c.bf16 %v4326, %v4325
      %v4519 = vpack.c.bf16 %v4328, %v4327
      %v4520 = vpack.c.bf16 %v4330, %v4329
      %v4521 = vpack.c.bf16 %v4332, %v4331
      %v4522 = vpack.c.bf16 %v4334, %v4333
      %v4523 = vpack.c.bf16 %v4336, %v4335
      %v4524 = vpack.c.bf16 %v4338, %v4337
      %v4525 = vpack.c.bf16 %v4340, %v4339
      %v4526 = vpack.c.bf16 %v4342, %v4341
      %v4527 = vpack.c.bf16 %v4344, %v4343
      %v4528 = vpack.c.bf16 %v4346, %v4345
      %v4529 = vpack.c.bf16 %v4348, %v4347
      %v4530 = vpack.c.bf16 %v4350, %v4349
      %v4531 = vpack.c.bf16 %v4352, %v4351
      %v4532 = vpack.c.bf16 %v4354, %v4353
      %v4533 = vpack.c.bf16 %v4356, %v4355
      %v4534 = vpack.c.bf16 %v4358, %v4357
      %v4535 = vpack.c.bf16 %v4360, %v4359
      %v4536 = vpack.c.bf16 %v4362, %v4361
      %v4537 = vpack.c.bf16 %v4364, %v4363
      %v4538 = vpack.c.bf16 %v4366, %v4365
      %v4539 = vpack.c.bf16 %v4368, %v4367
      %v4540 = vpack.c.bf16 %v4370, %v4369
      %v4541 = vpack.c.bf16 %v4372, %v4371
      %v4542 = vpack.c.bf16 %v4374, %v4373
      %v4543 = vpack.c.bf16 %v4376, %v4375
      %v4544 = vpack.c.bf16 %v4378, %v4377
      %v4545 = vpack.c.bf16 %v4380, %v4379
      %v4546 = vpack.c.bf16 %v4382, %v4381
      %v4547 = vpack.c.bf16 %v4384, %v4383
      %v4548 = vpack.c.bf16 %v4386, %v4385
      %v4549 = vpack.c.bf16 %v4388, %v4387
      %v4550 = vpack.c.bf16 %v4390, %v4389
      %v4551 = vpack.c.bf16 %v4392, %v4391
      %v4552 = vpack.c.bf16 %v4394, %v4393
      %v4553 = vpack.c.bf16 %v4396, %v4395
      %v4554 = vpack.c.bf16 %v4398, %v4397
      %v4555 = vpack.c.bf16 %v4400, %v4399
      %v4556 = vpack.c.bf16 %v4402, %v4401
      %v4557 = vpack.c.bf16 %v4404, %v4403
      %v4558 = vpack.c.bf16 %v4406, %v4405
      %v4559 = vpack.c.bf16 %v4408, %v4407
      %v4560 = vpack.c.bf16 %v4410, %v4409
      %v4561 = vpack.c.bf16 %v4412, %v4411
      %v4562 = vpack.c.bf16 %v4414, %v4413
      %v4563 = vpack.c.bf16 %v4416, %v4415
      %v4564 = vpack.c.bf16 %v4418, %v4417
      %v4565 = vpack.c.bf16 %v4420, %v4419
      %v4566 = vpack.c.bf16 %v4422, %v4421
      %v4567 = vpack.c.bf16 %v4424, %v4423
      %v4568 = vpack.c.bf16 %v4426, %v4425
      %v4569 = vpack.c.bf16 %v4428, %v4427
      %v4570 = vpack.c.bf16 %v4430, %v4429
      %v4571 = vpack.c.bf16 %v4432, %v4431
      %v4572 = vpack.c.bf16 %v4434, %v4433
      %v4573 = vpack.c.bf16 %v4436, %v4435
      %v4574 = vpack.c.bf16 %v4438, %v4437
      %v4575 = vpack.c.bf16 %v4440, %v4439
      %v4576 = vpack.c.bf16 %v4442, %v4441
      %v4577 = vpack.c.bf16 %v4444, %v4443
      %v4578 = vpack.c.bf16 %v4446, %v4445
      %v4579 = vpack.c.bf16 %v4448, %v4447
      %v4580 = vpack.c.bf16 %v4450, %v4449
      %v4581 = vpack.c.bf16 %v4452, %v4451
      %v4582 = vpack.c.bf16 %v4454, %v4453
      %v4583 = vld [vmem:[%s5] sm:$0xf]
      %v4584 = vld [vmem:[%s5 + $0x4] sm:$0xf]
      %v4585 = vld [vmem:[%s5 + $0x8] sm:$0xf]
      %v4586 = vld [vmem:[%s5 + $0xc] sm:$0xf]
      %v4587 = vld [vmem:[%s5 + $0x10] sm:$0xf]
      %v4588 = vld [vmem:[%s5 + $0x14] sm:$0xf]
      %v4589 = vld [vmem:[%s5 + $0x18] sm:$0xf]
      %v4590 = vld [vmem:[%s5 + $0x1c] sm:$0xf]
      %v4591 = vld [vmem:[%s6] sm:$0x1]
      %v4593 = vperm.slane %v4591, 0
      %v4603 = vunpack.c.l.b16 %v4583
      %v4604 = vunpack.c.l.b16 %v4584
      %v4605 = vunpack.c.l.b16 %v4585
      %v4606 = vunpack.c.l.b16 %v4586
      %v4607 = vunpack.c.l.b16 %v4587
      %v4608 = vunpack.c.l.b16 %v4588
      %v4609 = vunpack.c.l.b16 %v4589
      %v4610 = vunpack.c.l.b16 %v4590
      %v4611 = vpack.c.b16 %v4604, %v4603
      %v4612 = vpack.c.b16 %v4606, %v4605
      %v4613 = vpack.c.b16 %v4608, %v4607
      %v4614 = vpack.c.b16 %v4610, %v4609
      %v4620 = vsel %vm2653, %v4455, 0
      %v4623 = vsel %vm2653, %v4456, 0
      %v4626 = vsel %vm2653, %v4457, 0
      %v4629 = vsel %vm2653, %v4458, 0
      %v4632 = vsel %vm2653, %v4459, 0
      %v4635 = vsel %vm2653, %v4460, 0
      %v4638 = vsel %vm2653, %v4461, 0
      %v4641 = vsel %vm2653, %v4462, 0
      %v4644 = vsel %vm2653, %v4463, 0
      %v4647 = vsel %vm2653, %v4464, 0
      %v4650 = vsel %vm2653, %v4465, 0
      %v4653 = vsel %vm2653, %v4466, 0
      %v4656 = vsel %vm2653, %v4467, 0
      %v4659 = vsel %vm2653, %v4468, 0
      %v4662 = vsel %vm2653, %v4469, 0
      %v4665 = vsel %vm2653, %v4470, 0
      %v4668 = vsel %vm2653, %v4471, 0
      %v4671 = vsel %vm2653, %v4472, 0
      %v4674 = vsel %vm2653, %v4473, 0
      %v4677 = vsel %vm2653, %v4474, 0
      %v4680 = vsel %vm2653, %v4475, 0
      %v4683 = vsel %vm2653, %v4476, 0
      %v4686 = vsel %vm2653, %v4477, 0
      %v4689 = vsel %vm2653, %v4478, 0
      %v4692 = vsel %vm2653, %v4479, 0
      %v4695 = vsel %vm2653, %v4480, 0
      %v4698 = vsel %vm2653, %v4481, 0
      %v4701 = vsel %vm2653, %v4482, 0
      %v4704 = vsel %vm2653, %v4483, 0
      %v4707 = vsel %vm2653, %v4484, 0
      %v4710 = vsel %vm2653, %v4485, 0
      %v4713 = vsel %vm2653, %v4486, 0
      %v4716 = vsel %vm2653, %v4487, 0
      %v4719 = vsel %vm2653, %v4488, 0
      %v4722 = vsel %vm2653, %v4489, 0
      %v4725 = vsel %vm2653, %v4490, 0
      %v4728 = vsel %vm2653, %v4491, 0
      %v4731 = vsel %vm2653, %v4492, 0
      %v4734 = vsel %vm2653, %v4493, 0
      %v4737 = vsel %vm2653, %v4494, 0
      %v4740 = vsel %vm2653, %v4495, 0
      %v4743 = vsel %vm2653, %v4496, 0
      %v4746 = vsel %vm2653, %v4497, 0
      %v4749 = vsel %vm2653, %v4498, 0
      %v4752 = vsel %vm2653, %v4499, 0
      %v4755 = vsel %vm2653, %v4500, 0
      %v4758 = vsel %vm2653, %v4501, 0
      %v4761 = vsel %vm2653, %v4502, 0
      %v4764 = vsel %vm2653, %v4503, 0
      %v4767 = vsel %vm2653, %v4504, 0
      %v4770 = vsel %vm2653, %v4505, 0
      %v4773 = vsel %vm2653, %v4506, 0
      %v4776 = vsel %vm2653, %v4507, 0
      %v4779 = vsel %vm2653, %v4508, 0
      %v4782 = vsel %vm2653, %v4509, 0
      %v4785 = vsel %vm2653, %v4510, 0
      %v4788 = vsel %vm2653, %v4511, 0
      %v4791 = vsel %vm2653, %v4512, 0
      %v4794 = vsel %vm2653, %v4513, 0
      %v4797 = vsel %vm2653, %v4514, 0
      %v4800 = vsel %vm2653, %v4515, 0
      %v4803 = vsel %vm2653, %v4516, 0
      %v4806 = vsel %vm2653, %v4517, 0
      %v4809 = vsel %vm2653, %v4518, 0
      %v4812 = vsel %vm2653, %v4519, 0
      %v4815 = vsel %vm2653, %v4520, 0
      %v4818 = vsel %vm2653, %v4521, 0
      %v4821 = vsel %vm2653, %v4522, 0
      %v4824 = vsel %vm2653, %v4523, 0
      %v4827 = vsel %vm2653, %v4524, 0
      %v4830 = vsel %vm2653, %v4525, 0
      %v4833 = vsel %vm2653, %v4526, 0
      %v4836 = vsel %vm2653, %v4527, 0
      %v4839 = vsel %vm2653, %v4528, 0
      %v4842 = vsel %vm2653, %v4529, 0
      %v4845 = vsel %vm2653, %v4530, 0
      %v4848 = vsel %vm2653, %v4531, 0
      %v4851 = vsel %vm2653, %v4532, 0
      %v4854 = vsel %vm2653, %v4533, 0
      %v4857 = vsel %vm2653, %v4534, 0
      %v4860 = vsel %vm2653, %v4535, 0
      %v4863 = vsel %vm2653, %v4536, 0
      %v4866 = vsel %vm2653, %v4537, 0
      %v4869 = vsel %vm2653, %v4538, 0
      %v4872 = vsel %vm2653, %v4539, 0
      %v4875 = vsel %vm2653, %v4540, 0
      %v4878 = vsel %vm2653, %v4541, 0
      %v4881 = vsel %vm2653, %v4542, 0
      %v4884 = vsel %vm2653, %v4543, 0
      %v4887 = vsel %vm2653, %v4544, 0
      %v4890 = vsel %vm2653, %v4545, 0
      %v4893 = vsel %vm2653, %v4546, 0
      %v4896 = vsel %vm2653, %v4547, 0
      %v4899 = vsel %vm2653, %v4548, 0
      %v4902 = vsel %vm2653, %v4549, 0
      %v4905 = vsel %vm2653, %v4550, 0
      %v4908 = vsel %vm2653, %v4551, 0
      %v4911 = vsel %vm2653, %v4552, 0
      %v4914 = vsel %vm2653, %v4553, 0
      %v4917 = vsel %vm2653, %v4554, 0
      %v4920 = vsel %vm2653, %v4555, 0
      %v4923 = vsel %vm2653, %v4556, 0
      %v4926 = vsel %vm2653, %v4557, 0
      %v4929 = vsel %vm2653, %v4558, 0
      %v4932 = vsel %vm2653, %v4559, 0
      %v4935 = vsel %vm2653, %v4560, 0
      %v4938 = vsel %vm2653, %v4561, 0
      %v4941 = vsel %vm2653, %v4562, 0
      %v4944 = vsel %vm2653, %v4563, 0
      %v4947 = vsel %vm2653, %v4564, 0
      %v4950 = vsel %vm2653, %v4565, 0
      %v4953 = vsel %vm2653, %v4566, 0
      %v4956 = vsel %vm2653, %v4567, 0
      %v4959 = vsel %vm2653, %v4568, 0
      %v4962 = vsel %vm2653, %v4569, 0
      %v4965 = vsel %vm2653, %v4570, 0
      %v4968 = vsel %vm2653, %v4571, 0
      %v4971 = vsel %vm2653, %v4572, 0
      %v4974 = vsel %vm2653, %v4573, 0
      %v4977 = vsel %vm2653, %v4574, 0
      %v4980 = vsel %vm2653, %v4575, 0
      %v4983 = vsel %vm2653, %v4576, 0
      %v4986 = vsel %vm2653, %v4577, 0
      %v4989 = vsel %vm2653, %v4578, 0
      %v4992 = vsel %vm2653, %v4579, 0
      %v4995 = vsel %vm2653, %v4580, 0
      %v4998 = vsel %vm2653, %v4581, 0
      %v5001 = vsel %vm2653, %v4582, 0
      %5003 = vmatpush.bf16.msra.mxu0 0
      %5004 = vmatpush.bf16.msra.mxu0 0
      %5005 = vmatpush.bf16.msra.mxu0 0
      %5006 = vmatpush.bf16.msra.mxu0 0
      %5007 = vmatpush.bf16.msra.mxu0 %v4614
      %5008 = vmatpush.bf16.msra.mxu0 %v4613
      %5009 = vmatpush.bf16.msra.mxu0 %v4612
      %5010 = vmatpush.bf16.msra.mxu0 %v4611
      %5011 = vmatmul.bf16.gmra.mxu0 %v4620
      %v5012 = vpop.f32.mrf.mxu0
      %v5013 = vadd.f32 %v4593, %v5012
      %v5014 = vpop.f32.mrf.mxu0
      %v5015 = vadd.f32 %v4593, %v5014
      %5016 = vmatmul.bf16.gmra.mxu0 %v4623
      %v5017 = vpop.f32.mrf.mxu0
      %v5018 = vadd.f32 %v4593, %v5017
      %v5019 = vpop.f32.mrf.mxu0
      %v5020 = vadd.f32 %v4593, %v5019
      %5021 = vmatmul.bf16.gmra.mxu0 %v4626
      %v5022 = vpop.f32.mrf.mxu0
      %v5023 = vadd.f32 %v4593, %v5022
      %v5024 = vpop.f32.mrf.mxu0
      %v5025 = vadd.f32 %v4593, %v5024
      %5026 = vmatmul.bf16.gmra.mxu0 %v4629
      %v5027 = vpop.f32.mrf.mxu0
      %v5028 = vadd.f32 %v4593, %v5027
      %v5029 = vpop.f32.mrf.mxu0
      %v5030 = vadd.f32 %v4593, %v5029
      %5031 = vmatmul.bf16.gmra.mxu0 %v4632
      %v5032 = vpop.f32.mrf.mxu0
      %v5033 = vadd.f32 %v4593, %v5032
      %v5034 = vpop.f32.mrf.mxu0
      %v5035 = vadd.f32 %v4593, %v5034
      %5036 = vmatmul.bf16.gmra.mxu0 %v4635
      %v5037 = vpop.f32.mrf.mxu0
      %v5038 = vadd.f32 %v4593, %v5037
      %v5039 = vpop.f32.mrf.mxu0
      %v5040 = vadd.f32 %v4593, %v5039
      %5041 = vmatmul.bf16.gmra.mxu0 %v4638
      %v5042 = vpop.f32.mrf.mxu0
      %v5043 = vadd.f32 %v4593, %v5042
      %v5044 = vpop.f32.mrf.mxu0
      %v5045 = vadd.f32 %v4593, %v5044
      %5046 = vmatmul.bf16.gmra.mxu0 %v4641
      %v5047 = vpop.f32.mrf.mxu0
      %v5048 = vadd.f32 %v4593, %v5047
      %v5049 = vpop.f32.mrf.mxu0
      %v5050 = vadd.f32 %v4593, %v5049
      %5051 = vmatmul.bf16.gmra.mxu0 %v4644
      %v5052 = vpop.f32.mrf.mxu0
      %v5053 = vadd.f32 %v4593, %v5052
      %v5054 = vpop.f32.mrf.mxu0
      %v5055 = vadd.f32 %v4593, %v5054
      %5056 = vmatmul.bf16.gmra.mxu0 %v4647
      %v5057 = vpop.f32.mrf.mxu0
      %v5058 = vadd.f32 %v4593, %v5057
      %v5059 = vpop.f32.mrf.mxu0
      %v5060 = vadd.f32 %v4593, %v5059
      %5061 = vmatmul.bf16.gmra.mxu0 %v4650
      %v5062 = vpop.f32.mrf.mxu0
      %v5063 = vadd.f32 %v4593, %v5062
      %v5064 = vpop.f32.mrf.mxu0
      %v5065 = vadd.f32 %v4593, %v5064
      %5066 = vmatmul.bf16.gmra.mxu0 %v4653
      %v5067 = vpop.f32.mrf.mxu0
      %v5068 = vadd.f32 %v4593, %v5067
      %v5069 = vpop.f32.mrf.mxu0
      %v5070 = vadd.f32 %v4593, %v5069
      %5071 = vmatmul.bf16.gmra.mxu0 %v4656
      %v5072 = vpop.f32.mrf.mxu0
      %v5073 = vadd.f32 %v4593, %v5072
      %v5074 = vpop.f32.mrf.mxu0
      %v5075 = vadd.f32 %v4593, %v5074
      %5076 = vmatmul.bf16.gmra.mxu0 %v4659
      %v5077 = vpop.f32.mrf.mxu0
      %v5078 = vadd.f32 %v4593, %v5077
      %v5079 = vpop.f32.mrf.mxu0
      %v5080 = vadd.f32 %v4593, %v5079
      %5081 = vmatmul.bf16.gmra.mxu0 %v4662
      %v5082 = vpop.f32.mrf.mxu0
      %v5083 = vadd.f32 %v4593, %v5082
      %v5084 = vpop.f32.mrf.mxu0
      %v5085 = vadd.f32 %v4593, %v5084
      %5086 = vmatmul.bf16.gmra.mxu0 %v4665
      %v5087 = vpop.f32.mrf.mxu0
      %v5088 = vadd.f32 %v4593, %v5087
      %v5089 = vpop.f32.mrf.mxu0
      %v5090 = vadd.f32 %v4593, %v5089
      %5091 = vmatmul.bf16.gmra.mxu0 %v4668
      %v5092 = vpop.f32.mrf.mxu0
      %v5093 = vadd.f32 %v4593, %v5092
      %v5094 = vpop.f32.mrf.mxu0
      %v5095 = vadd.f32 %v4593, %v5094
      %5096 = vmatmul.bf16.gmra.mxu0 %v4671
      %v5097 = vpop.f32.mrf.mxu0
      %v5098 = vadd.f32 %v4593, %v5097
      %v5099 = vpop.f32.mrf.mxu0
      %v5100 = vadd.f32 %v4593, %v5099
      %5101 = vmatmul.bf16.gmra.mxu0 %v4674
      %v5102 = vpop.f32.mrf.mxu0
      %v5103 = vadd.f32 %v4593, %v5102
      %v5104 = vpop.f32.mrf.mxu0
      %v5105 = vadd.f32 %v4593, %v5104
      %5106 = vmatmul.bf16.gmra.mxu0 %v4677
      %v5107 = vpop.f32.mrf.mxu0
      %v5108 = vadd.f32 %v4593, %v5107
      %v5109 = vpop.f32.mrf.mxu0
      %v5110 = vadd.f32 %v4593, %v5109
      %5111 = vmatmul.bf16.gmra.mxu0 %v4680
      %v5112 = vpop.f32.mrf.mxu0
      %v5113 = vadd.f32 %v4593, %v5112
      %v5114 = vpop.f32.mrf.mxu0
      %v5115 = vadd.f32 %v4593, %v5114
      %5116 = vmatmul.bf16.gmra.mxu0 %v4683
      %v5117 = vpop.f32.mrf.mxu0
      %v5118 = vadd.f32 %v4593, %v5117
      %v5119 = vpop.f32.mrf.mxu0
      %v5120 = vadd.f32 %v4593, %v5119
      %5121 = vmatmul.bf16.gmra.mxu0 %v4686
      %v5122 = vpop.f32.mrf.mxu0
      %v5123 = vadd.f32 %v4593, %v5122
      %v5124 = vpop.f32.mrf.mxu0
      %v5125 = vadd.f32 %v4593, %v5124
      %5126 = vmatmul.bf16.gmra.mxu0 %v4689
      %v5127 = vpop.f32.mrf.mxu0
      %v5128 = vadd.f32 %v4593, %v5127
      %v5129 = vpop.f32.mrf.mxu0
      %v5130 = vadd.f32 %v4593, %v5129
      %5131 = vmatmul.bf16.gmra.mxu0 %v4692
      %v5132 = vpop.f32.mrf.mxu0
      %v5133 = vadd.f32 %v4593, %v5132
      %v5134 = vpop.f32.mrf.mxu0
      %v5135 = vadd.f32 %v4593, %v5134
      %5136 = vmatmul.bf16.gmra.mxu0 %v4695
      %v5137 = vpop.f32.mrf.mxu0
      %v5138 = vadd.f32 %v4593, %v5137
      %v5139 = vpop.f32.mrf.mxu0
      %v5140 = vadd.f32 %v4593, %v5139
      %5141 = vmatmul.bf16.gmra.mxu0 %v4698
      %v5142 = vpop.f32.mrf.mxu0
      %v5143 = vadd.f32 %v4593, %v5142
      %v5144 = vpop.f32.mrf.mxu0
      %v5145 = vadd.f32 %v4593, %v5144
      %5146 = vmatmul.bf16.gmra.mxu0 %v4701
      %v5147 = vpop.f32.mrf.mxu0
      %v5148 = vadd.f32 %v4593, %v5147
      %v5149 = vpop.f32.mrf.mxu0
      %v5150 = vadd.f32 %v4593, %v5149
      %5151 = vmatmul.bf16.gmra.mxu0 %v4704
      %v5152 = vpop.f32.mrf.mxu0
      %v5153 = vadd.f32 %v4593, %v5152
      %v5154 = vpop.f32.mrf.mxu0
      %v5155 = vadd.f32 %v4593, %v5154
      %5156 = vmatmul.bf16.gmra.mxu0 %v4707
      %v5157 = vpop.f32.mrf.mxu0
      %v5158 = vadd.f32 %v4593, %v5157
      %v5159 = vpop.f32.mrf.mxu0
      %v5160 = vadd.f32 %v4593, %v5159
      %5161 = vmatmul.bf16.gmra.mxu0 %v4710
      %v5162 = vpop.f32.mrf.mxu0
      %v5163 = vadd.f32 %v4593, %v5162
      %v5164 = vpop.f32.mrf.mxu0
      %v5165 = vadd.f32 %v4593, %v5164
      %5166 = vmatmul.bf16.gmra.mxu0 %v4713
      %v5167 = vpop.f32.mrf.mxu0
      %v5168 = vadd.f32 %v4593, %v5167
      %v5169 = vpop.f32.mrf.mxu0
      %v5170 = vadd.f32 %v4593, %v5169
      %5171 = vmatmul.bf16.gmra.mxu0 %v4716
      %v5172 = vpop.f32.mrf.mxu0
      %v5173 = vadd.f32 %v4593, %v5172
      %v5174 = vpop.f32.mrf.mxu0
      %v5175 = vadd.f32 %v4593, %v5174
      %5176 = vmatmul.bf16.gmra.mxu0 %v4719
      %v5177 = vpop.f32.mrf.mxu0
      %v5178 = vadd.f32 %v4593, %v5177
      %v5179 = vpop.f32.mrf.mxu0
      %v5180 = vadd.f32 %v4593, %v5179
      %5181 = vmatmul.bf16.gmra.mxu0 %v4722
      %v5182 = vpop.f32.mrf.mxu0
      %v5183 = vadd.f32 %v4593, %v5182
      %v5184 = vpop.f32.mrf.mxu0
      %v5185 = vadd.f32 %v4593, %v5184
      %5186 = vmatmul.bf16.gmra.mxu0 %v4725
      %v5187 = vpop.f32.mrf.mxu0
      %v5188 = vadd.f32 %v4593, %v5187
      %v5189 = vpop.f32.mrf.mxu0
      %v5190 = vadd.f32 %v4593, %v5189
      %5191 = vmatmul.bf16.gmra.mxu0 %v4728
      %v5192 = vpop.f32.mrf.mxu0
      %v5193 = vadd.f32 %v4593, %v5192
      %v5194 = vpop.f32.mrf.mxu0
      %v5195 = vadd.f32 %v4593, %v5194
      %5196 = vmatmul.bf16.gmra.mxu0 %v4731
      %v5197 = vpop.f32.mrf.mxu0
      %v5198 = vadd.f32 %v4593, %v5197
      %v5199 = vpop.f32.mrf.mxu0
      %v5200 = vadd.f32 %v4593, %v5199
      %5201 = vmatmul.bf16.gmra.mxu0 %v4734
      %v5202 = vpop.f32.mrf.mxu0
      %v5203 = vadd.f32 %v4593, %v5202
      %v5204 = vpop.f32.mrf.mxu0
      %v5205 = vadd.f32 %v4593, %v5204
      %5206 = vmatmul.bf16.gmra.mxu0 %v4737
      %v5207 = vpop.f32.mrf.mxu0
      %v5208 = vadd.f32 %v4593, %v5207
      %v5209 = vpop.f32.mrf.mxu0
      %v5210 = vadd.f32 %v4593, %v5209
      %5211 = vmatmul.bf16.gmra.mxu0 %v4740
      %v5212 = vpop.f32.mrf.mxu0
      %v5213 = vadd.f32 %v4593, %v5212
      %v5214 = vpop.f32.mrf.mxu0
      %v5215 = vadd.f32 %v4593, %v5214
      %5216 = vmatmul.bf16.gmra.mxu0 %v4743
      %v5217 = vpop.f32.mrf.mxu0
      %v5218 = vadd.f32 %v4593, %v5217
      %v5219 = vpop.f32.mrf.mxu0
      %v5220 = vadd.f32 %v4593, %v5219
      %5221 = vmatmul.bf16.gmra.mxu0 %v4746
      %v5222 = vpop.f32.mrf.mxu0
      %v5223 = vadd.f32 %v4593, %v5222
      %v5224 = vpop.f32.mrf.mxu0
      %v5225 = vadd.f32 %v4593, %v5224
      %5226 = vmatmul.bf16.gmra.mxu0 %v4749
      %v5227 = vpop.f32.mrf.mxu0
      %v5228 = vadd.f32 %v4593, %v5227
      %v5229 = vpop.f32.mrf.mxu0
      %v5230 = vadd.f32 %v4593, %v5229
      %5231 = vmatmul.bf16.gmra.mxu0 %v4752
      %v5232 = vpop.f32.mrf.mxu0
      %v5233 = vadd.f32 %v4593, %v5232
      %v5234 = vpop.f32.mrf.mxu0
      %v5235 = vadd.f32 %v4593, %v5234
      %5236 = vmatmul.bf16.gmra.mxu0 %v4755
      %v5237 = vpop.f32.mrf.mxu0
      %v5238 = vadd.f32 %v4593, %v5237
      %v5239 = vpop.f32.mrf.mxu0
      %v5240 = vadd.f32 %v4593, %v5239
      %5241 = vmatmul.bf16.gmra.mxu0 %v4758
      %v5242 = vpop.f32.mrf.mxu0
      %v5243 = vadd.f32 %v4593, %v5242
      %v5244 = vpop.f32.mrf.mxu0
      %v5245 = vadd.f32 %v4593, %v5244
      %5246 = vmatmul.bf16.gmra.mxu0 %v4761
      %v5247 = vpop.f32.mrf.mxu0
      %v5248 = vadd.f32 %v4593, %v5247
      %v5249 = vpop.f32.mrf.mxu0
      %v5250 = vadd.f32 %v4593, %v5249
      %5251 = vmatmul.bf16.gmra.mxu0 %v4764
      %v5252 = vpop.f32.mrf.mxu0
      %v5253 = vadd.f32 %v4593, %v5252
      %v5254 = vpop.f32.mrf.mxu0
      %v5255 = vadd.f32 %v4593, %v5254
      %5256 = vmatmul.bf16.gmra.mxu0 %v4767
      %v5257 = vpop.f32.mrf.mxu0
      %v5258 = vadd.f32 %v4593, %v5257
      %v5259 = vpop.f32.mrf.mxu0
      %v5260 = vadd.f32 %v4593, %v5259
      %5261 = vmatmul.bf16.gmra.mxu0 %v4770
      %v5262 = vpop.f32.mrf.mxu0
      %v5263 = vadd.f32 %v4593, %v5262
      %v5264 = vpop.f32.mrf.mxu0
      %v5265 = vadd.f32 %v4593, %v5264
      %5266 = vmatmul.bf16.gmra.mxu0 %v4773
      %v5267 = vpop.f32.mrf.mxu0
      %v5268 = vadd.f32 %v4593, %v5267
      %v5269 = vpop.f32.mrf.mxu0
      %v5270 = vadd.f32 %v4593, %v5269
      %5271 = vmatmul.bf16.gmra.mxu0 %v4776
      %v5272 = vpop.f32.mrf.mxu0
      %v5273 = vadd.f32 %v4593, %v5272
      %v5274 = vpop.f32.mrf.mxu0
      %v5275 = vadd.f32 %v4593, %v5274
      %5276 = vmatmul.bf16.gmra.mxu0 %v4779
      %v5277 = vpop.f32.mrf.mxu0
      %v5278 = vadd.f32 %v4593, %v5277
      %v5279 = vpop.f32.mrf.mxu0
      %v5280 = vadd.f32 %v4593, %v5279
      %5281 = vmatmul.bf16.gmra.mxu0 %v4782
      %v5282 = vpop.f32.mrf.mxu0
      %v5283 = vadd.f32 %v4593, %v5282
      %v5284 = vpop.f32.mrf.mxu0
      %v5285 = vadd.f32 %v4593, %v5284
      %5286 = vmatmul.bf16.gmra.mxu0 %v4785
      %v5287 = vpop.f32.mrf.mxu0
      %v5288 = vadd.f32 %v4593, %v5287
      %v5289 = vpop.f32.mrf.mxu0
      %v5290 = vadd.f32 %v4593, %v5289
      %5291 = vmatmul.bf16.gmra.mxu0 %v4788
      %v5292 = vpop.f32.mrf.mxu0
      %v5293 = vadd.f32 %v4593, %v5292
      %v5294 = vpop.f32.mrf.mxu0
      %v5295 = vadd.f32 %v4593, %v5294
      %5296 = vmatmul.bf16.gmra.mxu0 %v4791
      %v5297 = vpop.f32.mrf.mxu0
      %v5298 = vadd.f32 %v4593, %v5297
      %v5299 = vpop.f32.mrf.mxu0
      %v5300 = vadd.f32 %v4593, %v5299
      %5301 = vmatmul.bf16.gmra.mxu0 %v4794
      %v5302 = vpop.f32.mrf.mxu0
      %v5303 = vadd.f32 %v4593, %v5302
      %v5304 = vpop.f32.mrf.mxu0
      %v5305 = vadd.f32 %v4593, %v5304
      %5306 = vmatmul.bf16.gmra.mxu0 %v4797
      %v5307 = vpop.f32.mrf.mxu0
      %v5308 = vadd.f32 %v4593, %v5307
      %v5309 = vpop.f32.mrf.mxu0
      %v5310 = vadd.f32 %v4593, %v5309
      %5311 = vmatmul.bf16.gmra.mxu0 %v4800
      %v5312 = vpop.f32.mrf.mxu0
      %v5313 = vadd.f32 %v4593, %v5312
      %v5314 = vpop.f32.mrf.mxu0
      %v5315 = vadd.f32 %v4593, %v5314
      %5316 = vmatmul.bf16.gmra.mxu0 %v4803
      %v5317 = vpop.f32.mrf.mxu0
      %v5318 = vadd.f32 %v4593, %v5317
      %v5319 = vpop.f32.mrf.mxu0
      %v5320 = vadd.f32 %v4593, %v5319
      %5321 = vmatmul.bf16.gmra.mxu0 %v4806
      %v5322 = vpop.f32.mrf.mxu0
      %v5323 = vadd.f32 %v4593, %v5322
      %v5324 = vpop.f32.mrf.mxu0
      %v5325 = vadd.f32 %v4593, %v5324
      %5326 = vmatmul.bf16.gmra.mxu0 %v4809
      %v5327 = vpop.f32.mrf.mxu0
      %v5328 = vadd.f32 %v4593, %v5327
      %v5329 = vpop.f32.mrf.mxu0
      %v5330 = vadd.f32 %v4593, %v5329
      %5331 = vmatmul.bf16.gmra.mxu0 %v4812
      %v5332 = vpop.f32.mrf.mxu0
      %v5333 = vadd.f32 %v4593, %v5332
      %v5334 = vpop.f32.mrf.mxu0
      %v5335 = vadd.f32 %v4593, %v5334
      %5336 = vmatmul.bf16.gmra.mxu0 %v4815
      %v5337 = vpop.f32.mrf.mxu0
      %v5338 = vadd.f32 %v4593, %v5337
      %v5339 = vpop.f32.mrf.mxu0
      %v5340 = vadd.f32 %v4593, %v5339
      %5341 = vmatmul.bf16.gmra.mxu0 %v4818
      %v5342 = vpop.f32.mrf.mxu0
      %v5343 = vadd.f32 %v4593, %v5342
      %v5344 = vpop.f32.mrf.mxu0
      %v5345 = vadd.f32 %v4593, %v5344
      %5346 = vmatmul.bf16.gmra.mxu0 %v4821
      %v5347 = vpop.f32.mrf.mxu0
      %v5348 = vadd.f32 %v4593, %v5347
      %v5349 = vpop.f32.mrf.mxu0
      %v5350 = vadd.f32 %v4593, %v5349
      %5351 = vmatmul.bf16.gmra.mxu0 %v4824
      %v5352 = vpop.f32.mrf.mxu0
      %v5353 = vadd.f32 %v4593, %v5352
      %v5354 = vpop.f32.mrf.mxu0
      %v5355 = vadd.f32 %v4593, %v5354
      %5356 = vmatmul.bf16.gmra.mxu0 %v4827
      %v5357 = vpop.f32.mrf.mxu0
      %v5358 = vadd.f32 %v4593, %v5357
      %v5359 = vpop.f32.mrf.mxu0
      %v5360 = vadd.f32 %v4593, %v5359
      %5361 = vmatmul.bf16.gmra.mxu0 %v4830
      %v5362 = vpop.f32.mrf.mxu0
      %v5363 = vadd.f32 %v4593, %v5362
      %v5364 = vpop.f32.mrf.mxu0
      %v5365 = vadd.f32 %v4593, %v5364
      %5366 = vmatmul.bf16.gmra.mxu0 %v4833
      %v5367 = vpop.f32.mrf.mxu0
      %v5368 = vadd.f32 %v4593, %v5367
      %v5369 = vpop.f32.mrf.mxu0
      %v5370 = vadd.f32 %v4593, %v5369
      %5371 = vmatmul.bf16.gmra.mxu0 %v4836
      %v5372 = vpop.f32.mrf.mxu0
      %v5373 = vadd.f32 %v4593, %v5372
      %v5374 = vpop.f32.mrf.mxu0
      %v5375 = vadd.f32 %v4593, %v5374
      %5376 = vmatmul.bf16.gmra.mxu0 %v4839
      %v5377 = vpop.f32.mrf.mxu0
      %v5378 = vadd.f32 %v4593, %v5377
      %v5379 = vpop.f32.mrf.mxu0
      %v5380 = vadd.f32 %v4593, %v5379
      %5381 = vmatmul.bf16.gmra.mxu0 %v4842
      %v5382 = vpop.f32.mrf.mxu0
      %v5383 = vadd.f32 %v4593, %v5382
      %v5384 = vpop.f32.mrf.mxu0
      %v5385 = vadd.f32 %v4593, %v5384
      %5386 = vmatmul.bf16.gmra.mxu0 %v4845
      %v5387 = vpop.f32.mrf.mxu0
      %v5388 = vadd.f32 %v4593, %v5387
      %v5389 = vpop.f32.mrf.mxu0
      %v5390 = vadd.f32 %v4593, %v5389
      %5391 = vmatmul.bf16.gmra.mxu0 %v4848
      %v5392 = vpop.f32.mrf.mxu0
      %v5393 = vadd.f32 %v4593, %v5392
      %v5394 = vpop.f32.mrf.mxu0
      %v5395 = vadd.f32 %v4593, %v5394
      %5396 = vmatmul.bf16.gmra.mxu0 %v4851
      %v5397 = vpop.f32.mrf.mxu0
      %v5398 = vadd.f32 %v4593, %v5397
      %v5399 = vpop.f32.mrf.mxu0
      %v5400 = vadd.f32 %v4593, %v5399
      %5401 = vmatmul.bf16.gmra.mxu0 %v4854
      %v5402 = vpop.f32.mrf.mxu0
      %v5403 = vadd.f32 %v4593, %v5402
      %v5404 = vpop.f32.mrf.mxu0
      %v5405 = vadd.f32 %v4593, %v5404
      %5406 = vmatmul.bf16.gmra.mxu0 %v4857
      %v5407 = vpop.f32.mrf.mxu0
      %v5408 = vadd.f32 %v4593, %v5407
      %v5409 = vpop.f32.mrf.mxu0
      %v5410 = vadd.f32 %v4593, %v5409
      %5411 = vmatmul.bf16.gmra.mxu0 %v4860
      %v5412 = vpop.f32.mrf.mxu0
      %v5413 = vadd.f32 %v4593, %v5412
      %v5414 = vpop.f32.mrf.mxu0
      %v5415 = vadd.f32 %v4593, %v5414
      %5416 = vmatmul.bf16.gmra.mxu0 %v4863
      %v5417 = vpop.f32.mrf.mxu0
      %v5418 = vadd.f32 %v4593, %v5417
      %v5419 = vpop.f32.mrf.mxu0
      %v5420 = vadd.f32 %v4593, %v5419
      %5421 = vmatmul.bf16.gmra.mxu0 %v4866
      %v5422 = vpop.f32.mrf.mxu0
      %v5423 = vadd.f32 %v4593, %v5422
      %v5424 = vpop.f32.mrf.mxu0
      %v5425 = vadd.f32 %v4593, %v5424
      %5426 = vmatmul.bf16.gmra.mxu0 %v4869
      %v5427 = vpop.f32.mrf.mxu0
      %v5428 = vadd.f32 %v4593, %v5427
      %v5429 = vpop.f32.mrf.mxu0
      %v5430 = vadd.f32 %v4593, %v5429
      %5431 = vmatmul.bf16.gmra.mxu0 %v4872
      %v5432 = vpop.f32.mrf.mxu0
      %v5433 = vadd.f32 %v4593, %v5432
      %v5434 = vpop.f32.mrf.mxu0
      %v5435 = vadd.f32 %v4593, %v5434
      %5436 = vmatmul.bf16.gmra.mxu0 %v4875
      %v5437 = vpop.f32.mrf.mxu0
      %v5438 = vadd.f32 %v4593, %v5437
      %v5439 = vpop.f32.mrf.mxu0
      %v5440 = vadd.f32 %v4593, %v5439
      %5441 = vmatmul.bf16.gmra.mxu0 %v4878
      %v5442 = vpop.f32.mrf.mxu0
      %v5443 = vadd.f32 %v4593, %v5442
      %v5444 = vpop.f32.mrf.mxu0
      %v5445 = vadd.f32 %v4593, %v5444
      %5446 = vmatmul.bf16.gmra.mxu0 %v4881
      %v5447 = vpop.f32.mrf.mxu0
      %v5448 = vadd.f32 %v4593, %v5447
      %v5449 = vpop.f32.mrf.mxu0
      %v5450 = vadd.f32 %v4593, %v5449
      %5451 = vmatmul.bf16.gmra.mxu0 %v4884
      %v5452 = vpop.f32.mrf.mxu0
      %v5453 = vadd.f32 %v4593, %v5452
      %v5454 = vpop.f32.mrf.mxu0
      %v5455 = vadd.f32 %v4593, %v5454
      %5456 = vmatmul.bf16.gmra.mxu0 %v4887
      %v5457 = vpop.f32.mrf.mxu0
      %v5458 = vadd.f32 %v4593, %v5457
      %v5459 = vpop.f32.mrf.mxu0
      %v5460 = vadd.f32 %v4593, %v5459
      %5461 = vmatmul.bf16.gmra.mxu0 %v4890
      %v5462 = vpop.f32.mrf.mxu0
      %v5463 = vadd.f32 %v4593, %v5462
      %v5464 = vpop.f32.mrf.mxu0
      %v5465 = vadd.f32 %v4593, %v5464
      %5466 = vmatmul.bf16.gmra.mxu0 %v4893
      %v5467 = vpop.f32.mrf.mxu0
      %v5468 = vadd.f32 %v4593, %v5467
      %v5469 = vpop.f32.mrf.mxu0
      %v5470 = vadd.f32 %v4593, %v5469
      %5471 = vmatmul.bf16.gmra.mxu0 %v4896
      %v5472 = vpop.f32.mrf.mxu0
      %v5473 = vadd.f32 %v4593, %v5472
      %v5474 = vpop.f32.mrf.mxu0
      %v5475 = vadd.f32 %v4593, %v5474
      %5476 = vmatmul.bf16.gmra.mxu0 %v4899
      %v5477 = vpop.f32.mrf.mxu0
      %v5478 = vadd.f32 %v4593, %v5477
      %v5479 = vpop.f32.mrf.mxu0
      %v5480 = vadd.f32 %v4593, %v5479
      %5481 = vmatmul.bf16.gmra.mxu0 %v4902
      %v5482 = vpop.f32.mrf.mxu0
      %v5483 = vadd.f32 %v4593, %v5482
      %v5484 = vpop.f32.mrf.mxu0
      %v5485 = vadd.f32 %v4593, %v5484
      %5486 = vmatmul.bf16.gmra.mxu0 %v4905
      %v5487 = vpop.f32.mrf.mxu0
      %v5488 = vadd.f32 %v4593, %v5487
      %v5489 = vpop.f32.mrf.mxu0
      %v5490 = vadd.f32 %v4593, %v5489
      %5491 = vmatmul.bf16.gmra.mxu0 %v4908
      %v5492 = vpop.f32.mrf.mxu0
      %v5493 = vadd.f32 %v4593, %v5492
      %v5494 = vpop.f32.mrf.mxu0
      %v5495 = vadd.f32 %v4593, %v5494
      %5496 = vmatmul.bf16.gmra.mxu0 %v4911
      %v5497 = vpop.f32.mrf.mxu0
      %v5498 = vadd.f32 %v4593, %v5497
      %v5499 = vpop.f32.mrf.mxu0
      %v5500 = vadd.f32 %v4593, %v5499
      %5501 = vmatmul.bf16.gmra.mxu0 %v4914
      %v5502 = vpop.f32.mrf.mxu0
      %v5503 = vadd.f32 %v4593, %v5502
      %v5504 = vpop.f32.mrf.mxu0
      %v5505 = vadd.f32 %v4593, %v5504
      %5506 = vmatmul.bf16.gmra.mxu0 %v4917
      %v5507 = vpop.f32.mrf.mxu0
      %v5508 = vadd.f32 %v4593, %v5507
      %v5509 = vpop.f32.mrf.mxu0
      %v5510 = vadd.f32 %v4593, %v5509
      %5511 = vmatmul.bf16.gmra.mxu0 %v4920
      %v5512 = vpop.f32.mrf.mxu0
      %v5513 = vadd.f32 %v4593, %v5512
      %v5514 = vpop.f32.mrf.mxu0
      %v5515 = vadd.f32 %v4593, %v5514
      %5516 = vmatmul.bf16.gmra.mxu0 %v4923
      %v5517 = vpop.f32.mrf.mxu0
      %v5518 = vadd.f32 %v4593, %v5517
      %v5519 = vpop.f32.mrf.mxu0
      %v5520 = vadd.f32 %v4593, %v5519
      %5521 = vmatmul.bf16.gmra.mxu0 %v4926
      %v5522 = vpop.f32.mrf.mxu0
      %v5523 = vadd.f32 %v4593, %v5522
      %v5524 = vpop.f32.mrf.mxu0
      %v5525 = vadd.f32 %v4593, %v5524
      %5526 = vmatmul.bf16.gmra.mxu0 %v4929
      %v5527 = vpop.f32.mrf.mxu0
      %v5528 = vadd.f32 %v4593, %v5527
      %v5529 = vpop.f32.mrf.mxu0
      %v5530 = vadd.f32 %v4593, %v5529
      %5531 = vmatmul.bf16.gmra.mxu0 %v4932
      %v5532 = vpop.f32.mrf.mxu0
      %v5533 = vadd.f32 %v4593, %v5532
      %v5534 = vpop.f32.mrf.mxu0
      %v5535 = vadd.f32 %v4593, %v5534
      %5536 = vmatmul.bf16.gmra.mxu0 %v4935
      %v5537 = vpop.f32.mrf.mxu0
      %v5538 = vadd.f32 %v4593, %v5537
      %v5539 = vpop.f32.mrf.mxu0
      %v5540 = vadd.f32 %v4593, %v5539
      %5541 = vmatmul.bf16.gmra.mxu0 %v4938
      %v5542 = vpop.f32.mrf.mxu0
      %v5543 = vadd.f32 %v4593, %v5542
      %v5544 = vpop.f32.mrf.mxu0
      %v5545 = vadd.f32 %v4593, %v5544
      %5546 = vmatmul.bf16.gmra.mxu0 %v4941
      %v5547 = vpop.f32.mrf.mxu0
      %v5548 = vadd.f32 %v4593, %v5547
      %v5549 = vpop.f32.mrf.mxu0
      %v5550 = vadd.f32 %v4593, %v5549
      %5551 = vmatmul.bf16.gmra.mxu0 %v4944
      %v5552 = vpop.f32.mrf.mxu0
      %v5553 = vadd.f32 %v4593, %v5552
      %v5554 = vpop.f32.mrf.mxu0
      %v5555 = vadd.f32 %v4593, %v5554
      %5556 = vmatmul.bf16.gmra.mxu0 %v4947
      %v5557 = vpop.f32.mrf.mxu0
      %v5558 = vadd.f32 %v4593, %v5557
      %v5559 = vpop.f32.mrf.mxu0
      %v5560 = vadd.f32 %v4593, %v5559
      %5561 = vmatmul.bf16.gmra.mxu0 %v4950
      %v5562 = vpop.f32.mrf.mxu0
      %v5563 = vadd.f32 %v4593, %v5562
      %v5564 = vpop.f32.mrf.mxu0
      %v5565 = vadd.f32 %v4593, %v5564
      %5566 = vmatmul.bf16.gmra.mxu0 %v4953
      %v5567 = vpop.f32.mrf.mxu0
      %v5568 = vadd.f32 %v4593, %v5567
      %v5569 = vpop.f32.mrf.mxu0
      %v5570 = vadd.f32 %v4593, %v5569
      %5571 = vmatmul.bf16.gmra.mxu0 %v4956
      %v5572 = vpop.f32.mrf.mxu0
      %v5573 = vadd.f32 %v4593, %v5572
      %v5574 = vpop.f32.mrf.mxu0
      %v5575 = vadd.f32 %v4593, %v5574
      %5576 = vmatmul.bf16.gmra.mxu0 %v4959
      %v5577 = vpop.f32.mrf.mxu0
      %v5578 = vadd.f32 %v4593, %v5577
      %v5579 = vpop.f32.mrf.mxu0
      %v5580 = vadd.f32 %v4593, %v5579
      %5581 = vmatmul.bf16.gmra.mxu0 %v4962
      %v5582 = vpop.f32.mrf.mxu0
      %v5583 = vadd.f32 %v4593, %v5582
      %v5584 = vpop.f32.mrf.mxu0
      %v5585 = vadd.f32 %v4593, %v5584
      %5586 = vmatmul.bf16.gmra.mxu0 %v4965
      %v5587 = vpop.f32.mrf.mxu0
      %v5588 = vadd.f32 %v4593, %v5587
      %v5589 = vpop.f32.mrf.mxu0
      %v5590 = vadd.f32 %v4593, %v5589
      %5591 = vmatmul.bf16.gmra.mxu0 %v4968
      %v5592 = vpop.f32.mrf.mxu0
      %v5593 = vadd.f32 %v4593, %v5592
      %v5594 = vpop.f32.mrf.mxu0
      %v5595 = vadd.f32 %v4593, %v5594
      %5596 = vmatmul.bf16.gmra.mxu0 %v4971
      %v5597 = vpop.f32.mrf.mxu0
      %v5598 = vadd.f32 %v4593, %v5597
      %v5599 = vpop.f32.mrf.mxu0
      %v5600 = vadd.f32 %v4593, %v5599
      %5601 = vmatmul.bf16.gmra.mxu0 %v4974
      %v5602 = vpop.f32.mrf.mxu0
      %v5603 = vadd.f32 %v4593, %v5602
      %v5604 = vpop.f32.mrf.mxu0
      %v5605 = vadd.f32 %v4593, %v5604
      %5606 = vmatmul.bf16.gmra.mxu0 %v4977
      %v5607 = vpop.f32.mrf.mxu0
      %v5608 = vadd.f32 %v4593, %v5607
      %v5609 = vpop.f32.mrf.mxu0
      %v5610 = vadd.f32 %v4593, %v5609
      %5611 = vmatmul.bf16.gmra.mxu0 %v4980
      %v5612 = vpop.f32.mrf.mxu0
      %v5613 = vadd.f32 %v4593, %v5612
      %v5614 = vpop.f32.mrf.mxu0
      %v5615 = vadd.f32 %v4593, %v5614
      %5616 = vmatmul.bf16.gmra.mxu0 %v4983
      %v5617 = vpop.f32.mrf.mxu0
      %v5618 = vadd.f32 %v4593, %v5617
      %v5619 = vpop.f32.mrf.mxu0
      %v5620 = vadd.f32 %v4593, %v5619
      %5621 = vmatmul.bf16.gmra.mxu0 %v4986
      %v5622 = vpop.f32.mrf.mxu0
      %v5623 = vadd.f32 %v4593, %v5622
      %v5624 = vpop.f32.mrf.mxu0
      %v5625 = vadd.f32 %v4593, %v5624
      %5626 = vmatmul.bf16.gmra.mxu0 %v4989
      %v5627 = vpop.f32.mrf.mxu0
      %v5628 = vadd.f32 %v4593, %v5627
      %v5629 = vpop.f32.mrf.mxu0
      %v5630 = vadd.f32 %v4593, %v5629
      %5631 = vmatmul.bf16.gmra.mxu0 %v4992
      %v5632 = vpop.f32.mrf.mxu0
      %v5633 = vadd.f32 %v4593, %v5632
      %v5634 = vpop.f32.mrf.mxu0
      %v5635 = vadd.f32 %v4593, %v5634
      %5636 = vmatmul.bf16.gmra.mxu0 %v4995
      %v5637 = vpop.f32.mrf.mxu0
      %v5638 = vadd.f32 %v4593, %v5637
      %v5639 = vpop.f32.mrf.mxu0
      %v5640 = vadd.f32 %v4593, %v5639
      %5641 = vmatmul.bf16.gmra.mxu0 %v4998
      %v5642 = vpop.f32.mrf.mxu0
      %v5643 = vadd.f32 %v4593, %v5642
      %v5644 = vpop.f32.mrf.mxu0
      %v5645 = vadd.f32 %v4593, %v5644
      %5646 = vmatmul.bf16.gmra.mxu0 %v5001
      %v5647 = vpop.f32.mrf.mxu0
      %v5648 = vadd.f32 %v4593, %v5647
      %v5649 = vpop.f32.mrf.mxu0
      %v5650 = vadd.f32 %v4593, %v5649
      %5651 = vdwg.mxu0
      %v5652 = vmax.f32 %v5013, -1.0
      %v5653 = vmax.f32 %v5015, -1.0
      %v5654 = vmax.f32 %v5018, -1.0
      %v5655 = vmax.f32 %v5020, -1.0
      %v5656 = vmax.f32 %v5023, -1.0
      %v5657 = vmax.f32 %v5025, -1.0
      %v5658 = vmax.f32 %v5028, -1.0
      %v5659 = vmax.f32 %v5030, -1.0
      %v5660 = vmax.f32 %v5033, -1.0
      %v5661 = vmax.f32 %v5035, -1.0
      %v5662 = vmax.f32 %v5038, -1.0
      %v5663 = vmax.f32 %v5040, -1.0
      %v5664 = vmax.f32 %v5043, -1.0
      %v5665 = vmax.f32 %v5045, -1.0
      %v5666 = vmax.f32 %v5048, -1.0
      %v5667 = vmax.f32 %v5050, -1.0
      %v5668 = vmax.f32 %v5053, -1.0
      %v5669 = vmax.f32 %v5055, -1.0
      %v5670 = vmax.f32 %v5058, -1.0
      %v5671 = vmax.f32 %v5060, -1.0
      %v5672 = vmax.f32 %v5063, -1.0
      %v5673 = vmax.f32 %v5065, -1.0
      %v5674 = vmax.f32 %v5068, -1.0
      %v5675 = vmax.f32 %v5070, -1.0
      %v5676 = vmax.f32 %v5073, -1.0
      %v5677 = vmax.f32 %v5075, -1.0
      %v5678 = vmax.f32 %v5078, -1.0
      %v5679 = vmax.f32 %v5080, -1.0
      %v5680 = vmax.f32 %v5083, -1.0
      %v5681 = vmax.f32 %v5085, -1.0
      %v5682 = vmax.f32 %v5088, -1.0
      %v5683 = vmax.f32 %v5090, -1.0
      %v5684 = vmax.f32 %v5093, -1.0
      %v5685 = vmax.f32 %v5095, -1.0
      %v5686 = vmax.f32 %v5098, -1.0
      %v5687 = vmax.f32 %v5100, -1.0
      %v5688 = vmax.f32 %v5103, -1.0
      %v5689 = vmax.f32 %v5105, -1.0
      %v5690 = vmax.f32 %v5108, -1.0
      %v5691 = vmax.f32 %v5110, -1.0
      %v5692 = vmax.f32 %v5113, -1.0
      %v5693 = vmax.f32 %v5115, -1.0
      %v5694 = vmax.f32 %v5118, -1.0
      %v5695 = vmax.f32 %v5120, -1.0
      %v5696 = vmax.f32 %v5123, -1.0
      %v5697 = vmax.f32 %v5125, -1.0
      %v5698 = vmax.f32 %v5128, -1.0
      %v5699 = vmax.f32 %v5130, -1.0
      %v5700 = vmax.f32 %v5133, -1.0
      %v5701 = vmax.f32 %v5135, -1.0
      %v5702 = vmax.f32 %v5138, -1.0
      %v5703 = vmax.f32 %v5140, -1.0
      %v5704 = vmax.f32 %v5143, -1.0
      %v5705 = vmax.f32 %v5145, -1.0
      %v5706 = vmax.f32 %v5148, -1.0
      %v5707 = vmax.f32 %v5150, -1.0
      %v5708 = vmax.f32 %v5153, -1.0
      %v5709 = vmax.f32 %v5155, -1.0
      %v5710 = vmax.f32 %v5158, -1.0
      %v5711 = vmax.f32 %v5160, -1.0
      %v5712 = vmax.f32 %v5163, -1.0
      %v5713 = vmax.f32 %v5165, -1.0
      %v5714 = vmax.f32 %v5168, -1.0
      %v5715 = vmax.f32 %v5170, -1.0
      %v5716 = vmax.f32 %v5173, -1.0
      %v5717 = vmax.f32 %v5175, -1.0
      %v5718 = vmax.f32 %v5178, -1.0
      %v5719 = vmax.f32 %v5180, -1.0
      %v5720 = vmax.f32 %v5183, -1.0
      %v5721 = vmax.f32 %v5185, -1.0
      %v5722 = vmax.f32 %v5188, -1.0
      %v5723 = vmax.f32 %v5190, -1.0
      %v5724 = vmax.f32 %v5193, -1.0
      %v5725 = vmax.f32 %v5195, -1.0
      %v5726 = vmax.f32 %v5198, -1.0
      %v5727 = vmax.f32 %v5200, -1.0
      %v5728 = vmax.f32 %v5203, -1.0
      %v5729 = vmax.f32 %v5205, -1.0
      %v5730 = vmax.f32 %v5208, -1.0
      %v5731 = vmax.f32 %v5210, -1.0
      %v5732 = vmax.f32 %v5213, -1.0
      %v5733 = vmax.f32 %v5215, -1.0
      %v5734 = vmax.f32 %v5218, -1.0
      %v5735 = vmax.f32 %v5220, -1.0
      %v5736 = vmax.f32 %v5223, -1.0
      %v5737 = vmax.f32 %v5225, -1.0
      %v5738 = vmax.f32 %v5228, -1.0
      %v5739 = vmax.f32 %v5230, -1.0
      %v5740 = vmax.f32 %v5233, -1.0
      %v5741 = vmax.f32 %v5235, -1.0
      %v5742 = vmax.f32 %v5238, -1.0
      %v5743 = vmax.f32 %v5240, -1.0
      %v5744 = vmax.f32 %v5243, -1.0
      %v5745 = vmax.f32 %v5245, -1.0
      %v5746 = vmax.f32 %v5248, -1.0
      %v5747 = vmax.f32 %v5250, -1.0
      %v5748 = vmax.f32 %v5253, -1.0
      %v5749 = vmax.f32 %v5255, -1.0
      %v5750 = vmax.f32 %v5258, -1.0
      %v5751 = vmax.f32 %v5260, -1.0
      %v5752 = vmax.f32 %v5263, -1.0
      %v5753 = vmax.f32 %v5265, -1.0
      %v5754 = vmax.f32 %v5268, -1.0
      %v5755 = vmax.f32 %v5270, -1.0
      %v5756 = vmax.f32 %v5273, -1.0
      %v5757 = vmax.f32 %v5275, -1.0
      %v5758 = vmax.f32 %v5278, -1.0
      %v5759 = vmax.f32 %v5280, -1.0
      %v5760 = vmax.f32 %v5283, -1.0
      %v5761 = vmax.f32 %v5285, -1.0
      %v5762 = vmax.f32 %v5288, -1.0
      %v5763 = vmax.f32 %v5290, -1.0
      %v5764 = vmax.f32 %v5293, -1.0
      %v5765 = vmax.f32 %v5295, -1.0
      %v5766 = vmax.f32 %v5298, -1.0
      %v5767 = vmax.f32 %v5300, -1.0
      %v5768 = vmax.f32 %v5303, -1.0
      %v5769 = vmax.f32 %v5305, -1.0
      %v5770 = vmax.f32 %v5308, -1.0
      %v5771 = vmax.f32 %v5310, -1.0
      %v5772 = vmax.f32 %v5313, -1.0
      %v5773 = vmax.f32 %v5315, -1.0
      %v5774 = vmax.f32 %v5318, -1.0
      %v5775 = vmax.f32 %v5320, -1.0
      %v5776 = vmax.f32 %v5323, -1.0
      %v5777 = vmax.f32 %v5325, -1.0
      %v5778 = vmax.f32 %v5328, -1.0
      %v5779 = vmax.f32 %v5330, -1.0
      %v5780 = vmax.f32 %v5333, -1.0
      %v5781 = vmax.f32 %v5335, -1.0
      %v5782 = vmax.f32 %v5338, -1.0
      %v5783 = vmax.f32 %v5340, -1.0
      %v5784 = vmax.f32 %v5343, -1.0
      %v5785 = vmax.f32 %v5345, -1.0
      %v5786 = vmax.f32 %v5348, -1.0
      %v5787 = vmax.f32 %v5350, -1.0
      %v5788 = vmax.f32 %v5353, -1.0
      %v5789 = vmax.f32 %v5355, -1.0
      %v5790 = vmax.f32 %v5358, -1.0
      %v5791 = vmax.f32 %v5360, -1.0
      %v5792 = vmax.f32 %v5363, -1.0
      %v5793 = vmax.f32 %v5365, -1.0
      %v5794 = vmax.f32 %v5368, -1.0
      %v5795 = vmax.f32 %v5370, -1.0
      %v5796 = vmax.f32 %v5373, -1.0
      %v5797 = vmax.f32 %v5375, -1.0
      %v5798 = vmax.f32 %v5378, -1.0
      %v5799 = vmax.f32 %v5380, -1.0
      %v5800 = vmax.f32 %v5383, -1.0
      %v5801 = vmax.f32 %v5385, -1.0
      %v5802 = vmax.f32 %v5388, -1.0
      %v5803 = vmax.f32 %v5390, -1.0
      %v5804 = vmax.f32 %v5393, -1.0
      %v5805 = vmax.f32 %v5395, -1.0
      %v5806 = vmax.f32 %v5398, -1.0
      %v5807 = vmax.f32 %v5400, -1.0
      %v5808 = vmax.f32 %v5403, -1.0
      %v5809 = vmax.f32 %v5405, -1.0
      %v5810 = vmax.f32 %v5408, -1.0
      %v5811 = vmax.f32 %v5410, -1.0
      %v5812 = vmax.f32 %v5413, -1.0
      %v5813 = vmax.f32 %v5415, -1.0
      %v5814 = vmax.f32 %v5418, -1.0
      %v5815 = vmax.f32 %v5420, -1.0
      %v5816 = vmax.f32 %v5423, -1.0
      %v5817 = vmax.f32 %v5425, -1.0
      %v5818 = vmax.f32 %v5428, -1.0
      %v5819 = vmax.f32 %v5430, -1.0
      %v5820 = vmax.f32 %v5433, -1.0
      %v5821 = vmax.f32 %v5435, -1.0
      %v5822 = vmax.f32 %v5438, -1.0
      %v5823 = vmax.f32 %v5440, -1.0
      %v5824 = vmax.f32 %v5443, -1.0
      %v5825 = vmax.f32 %v5445, -1.0
      %v5826 = vmax.f32 %v5448, -1.0
      %v5827 = vmax.f32 %v5450, -1.0
      %v5828 = vmax.f32 %v5453, -1.0
      %v5829 = vmax.f32 %v5455, -1.0
      %v5830 = vmax.f32 %v5458, -1.0
      %v5831 = vmax.f32 %v5460, -1.0
      %v5832 = vmax.f32 %v5463, -1.0
      %v5833 = vmax.f32 %v5465, -1.0
      %v5834 = vmax.f32 %v5468, -1.0
      %v5835 = vmax.f32 %v5470, -1.0
      %v5836 = vmax.f32 %v5473, -1.0
      %v5837 = vmax.f32 %v5475, -1.0
      %v5838 = vmax.f32 %v5478, -1.0
      %v5839 = vmax.f32 %v5480, -1.0
      %v5840 = vmax.f32 %v5483, -1.0
      %v5841 = vmax.f32 %v5485, -1.0
      %v5842 = vmax.f32 %v5488, -1.0
      %v5843 = vmax.f32 %v5490, -1.0
      %v5844 = vmax.f32 %v5493, -1.0
      %v5845 = vmax.f32 %v5495, -1.0
      %v5846 = vmax.f32 %v5498, -1.0
      %v5847 = vmax.f32 %v5500, -1.0
      %v5848 = vmax.f32 %v5503, -1.0
      %v5849 = vmax.f32 %v5505, -1.0
      %v5850 = vmax.f32 %v5508, -1.0
      %v5851 = vmax.f32 %v5510, -1.0
      %v5852 = vmax.f32 %v5513, -1.0
      %v5853 = vmax.f32 %v5515, -1.0
      %v5854 = vmax.f32 %v5518, -1.0
      %v5855 = vmax.f32 %v5520, -1.0
      %v5856 = vmax.f32 %v5523, -1.0
      %v5857 = vmax.f32 %v5525, -1.0
      %v5858 = vmax.f32 %v5528, -1.0
      %v5859 = vmax.f32 %v5530, -1.0
      %v5860 = vmax.f32 %v5533, -1.0
      %v5861 = vmax.f32 %v5535, -1.0
      %v5862 = vmax.f32 %v5538, -1.0
      %v5863 = vmax.f32 %v5540, -1.0
      %v5864 = vmax.f32 %v5543, -1.0
      %v5865 = vmax.f32 %v5545, -1.0
      %v5866 = vmax.f32 %v5548, -1.0
      %v5867 = vmax.f32 %v5550, -1.0
      %v5868 = vmax.f32 %v5553, -1.0
      %v5869 = vmax.f32 %v5555, -1.0
      %v5870 = vmax.f32 %v5558, -1.0
      %v5871 = vmax.f32 %v5560, -1.0
      %v5872 = vmax.f32 %v5563, -1.0
      %v5873 = vmax.f32 %v5565, -1.0
      %v5874 = vmax.f32 %v5568, -1.0
      %v5875 = vmax.f32 %v5570, -1.0
      %v5876 = vmax.f32 %v5573, -1.0
      %v5877 = vmax.f32 %v5575, -1.0
      %v5878 = vmax.f32 %v5578, -1.0
      %v5879 = vmax.f32 %v5580, -1.0
      %v5880 = vmax.f32 %v5583, -1.0
      %v5881 = vmax.f32 %v5585, -1.0
      %v5882 = vmax.f32 %v5588, -1.0
      %v5883 = vmax.f32 %v5590, -1.0
      %v5884 = vmax.f32 %v5593, -1.0
      %v5885 = vmax.f32 %v5595, -1.0
      %v5886 = vmax.f32 %v5598, -1.0
      %v5887 = vmax.f32 %v5600, -1.0
      %v5888 = vmax.f32 %v5603, -1.0
      %v5889 = vmax.f32 %v5605, -1.0
      %v5890 = vmax.f32 %v5608, -1.0
      %v5891 = vmax.f32 %v5610, -1.0
      %v5892 = vmax.f32 %v5613, -1.0
      %v5893 = vmax.f32 %v5615, -1.0
      %v5894 = vmax.f32 %v5618, -1.0
      %v5895 = vmax.f32 %v5620, -1.0
      %v5896 = vmax.f32 %v5623, -1.0
      %v5897 = vmax.f32 %v5625, -1.0
      %v5898 = vmax.f32 %v5628, -1.0
      %v5899 = vmax.f32 %v5630, -1.0
      %v5900 = vmax.f32 %v5633, -1.0
      %v5901 = vmax.f32 %v5635, -1.0
      %v5902 = vmax.f32 %v5638, -1.0
      %v5903 = vmax.f32 %v5640, -1.0
      %v5904 = vmax.f32 %v5643, -1.0
      %v5905 = vmax.f32 %v5645, -1.0
      %v5906 = vmax.f32 %v5648, -1.0
      %v5907 = vmax.f32 %v5650, -1.0
      %v5908 = vmin.f32 %v5652, 1.0
      %v5909 = vmin.f32 %v5653, 1.0
      %v5910 = vmin.f32 %v5654, 1.0
      %v5911 = vmin.f32 %v5655, 1.0
      %v5912 = vmin.f32 %v5656, 1.0
      %v5913 = vmin.f32 %v5657, 1.0
      %v5914 = vmin.f32 %v5658, 1.0
      %v5915 = vmin.f32 %v5659, 1.0
      %v5916 = vmin.f32 %v5660, 1.0
      %v5917 = vmin.f32 %v5661, 1.0
      %v5918 = vmin.f32 %v5662, 1.0
      %v5919 = vmin.f32 %v5663, 1.0
      %v5920 = vmin.f32 %v5664, 1.0
      %v5921 = vmin.f32 %v5665, 1.0
      %v5922 = vmin.f32 %v5666, 1.0
      %v5923 = vmin.f32 %v5667, 1.0
      %v5924 = vmin.f32 %v5668, 1.0
      %v5925 = vmin.f32 %v5669, 1.0
      %v5926 = vmin.f32 %v5670, 1.0
      %v5927 = vmin.f32 %v5671, 1.0
      %v5928 = vmin.f32 %v5672, 1.0
      %v5929 = vmin.f32 %v5673, 1.0
      %v5930 = vmin.f32 %v5674, 1.0
      %v5931 = vmin.f32 %v5675, 1.0
      %v5932 = vmin.f32 %v5676, 1.0
      %v5933 = vmin.f32 %v5677, 1.0
      %v5934 = vmin.f32 %v5678, 1.0
      %v5935 = vmin.f32 %v5679, 1.0
      %v5936 = vmin.f32 %v5680, 1.0
      %v5937 = vmin.f32 %v5681, 1.0
      %v5938 = vmin.f32 %v5682, 1.0
      %v5939 = vmin.f32 %v5683, 1.0
      %v5940 = vmin.f32 %v5684, 1.0
      %v5941 = vmin.f32 %v5685, 1.0
      %v5942 = vmin.f32 %v5686, 1.0
      %v5943 = vmin.f32 %v5687, 1.0
      %v5944 = vmin.f32 %v5688, 1.0
      %v5945 = vmin.f32 %v5689, 1.0
      %v5946 = vmin.f32 %v5690, 1.0
      %v5947 = vmin.f32 %v5691, 1.0
      %v5948 = vmin.f32 %v5692, 1.0
      %v5949 = vmin.f32 %v5693, 1.0
      %v5950 = vmin.f32 %v5694, 1.0
      %v5951 = vmin.f32 %v5695, 1.0
      %v5952 = vmin.f32 %v5696, 1.0
      %v5953 = vmin.f32 %v5697, 1.0
      %v5954 = vmin.f32 %v5698, 1.0
      %v5955 = vmin.f32 %v5699, 1.0
      %v5956 = vmin.f32 %v5700, 1.0
      %v5957 = vmin.f32 %v5701, 1.0
      %v5958 = vmin.f32 %v5702, 1.0
      %v5959 = vmin.f32 %v5703, 1.0
      %v5960 = vmin.f32 %v5704, 1.0
      %v5961 = vmin.f32 %v5705, 1.0
      %v5962 = vmin.f32 %v5706, 1.0
      %v5963 = vmin.f32 %v5707, 1.0
      %v5964 = vmin.f32 %v5708, 1.0
      %v5965 = vmin.f32 %v5709, 1.0
      %v5966 = vmin.f32 %v5710, 1.0
      %v5967 = vmin.f32 %v5711, 1.0
      %v5968 = vmin.f32 %v5712, 1.0
      %v5969 = vmin.f32 %v5713, 1.0
      %v5970 = vmin.f32 %v5714, 1.0
      %v5971 = vmin.f32 %v5715, 1.0
      %v5972 = vmin.f32 %v5716, 1.0
      %v5973 = vmin.f32 %v5717, 1.0
      %v5974 = vmin.f32 %v5718, 1.0
      %v5975 = vmin.f32 %v5719, 1.0
      %v5976 = vmin.f32 %v5720, 1.0
      %v5977 = vmin.f32 %v5721, 1.0
      %v5978 = vmin.f32 %v5722, 1.0
      %v5979 = vmin.f32 %v5723, 1.0
      %v5980 = vmin.f32 %v5724, 1.0
      %v5981 = vmin.f32 %v5725, 1.0
      %v5982 = vmin.f32 %v5726, 1.0
      %v5983 = vmin.f32 %v5727, 1.0
      %v5984 = vmin.f32 %v5728, 1.0
      %v5985 = vmin.f32 %v5729, 1.0
      %v5986 = vmin.f32 %v5730, 1.0
      %v5987 = vmin.f32 %v5731, 1.0
      %v5988 = vmin.f32 %v5732, 1.0
      %v5989 = vmin.f32 %v5733, 1.0
      %v5990 = vmin.f32 %v5734, 1.0
      %v5991 = vmin.f32 %v5735, 1.0
      %v5992 = vmin.f32 %v5736, 1.0
      %v5993 = vmin.f32 %v5737, 1.0
      %v5994 = vmin.f32 %v5738, 1.0
      %v5995 = vmin.f32 %v5739, 1.0
      %v5996 = vmin.f32 %v5740, 1.0
      %v5997 = vmin.f32 %v5741, 1.0
      %v5998 = vmin.f32 %v5742, 1.0
      %v5999 = vmin.f32 %v5743, 1.0
      %v6000 = vmin.f32 %v5744, 1.0
      %v6001 = vmin.f32 %v5745, 1.0
      %v6002 = vmin.f32 %v5746, 1.0
      %v6003 = vmin.f32 %v5747, 1.0
      %v6004 = vmin.f32 %v5748, 1.0
      %v6005 = vmin.f32 %v5749, 1.0
      %v6006 = vmin.f32 %v5750, 1.0
      %v6007 = vmin.f32 %v5751, 1.0
      %v6008 = vmin.f32 %v5752, 1.0
      %v6009 = vmin.f32 %v5753, 1.0
      %v6010 = vmin.f32 %v5754, 1.0
      %v6011 = vmin.f32 %v5755, 1.0
      %v6012 = vmin.f32 %v5756, 1.0
      %v6013 = vmin.f32 %v5757, 1.0
      %v6014 = vmin.f32 %v5758, 1.0
      %v6015 = vmin.f32 %v5759, 1.0
      %v6016 = vmin.f32 %v5760, 1.0
      %v6017 = vmin.f32 %v5761, 1.0
      %v6018 = vmin.f32 %v5762, 1.0
      %v6019 = vmin.f32 %v5763, 1.0
      %v6020 = vmin.f32 %v5764, 1.0
      %v6021 = vmin.f32 %v5765, 1.0
      %v6022 = vmin.f32 %v5766, 1.0
      %v6023 = vmin.f32 %v5767, 1.0
      %v6024 = vmin.f32 %v5768, 1.0
      %v6025 = vmin.f32 %v5769, 1.0
      %v6026 = vmin.f32 %v5770, 1.0
      %v6027 = vmin.f32 %v5771, 1.0
      %v6028 = vmin.f32 %v5772, 1.0
      %v6029 = vmin.f32 %v5773, 1.0
      %v6030 = vmin.f32 %v5774, 1.0
      %v6031 = vmin.f32 %v5775, 1.0
      %v6032 = vmin.f32 %v5776, 1.0
      %v6033 = vmin.f32 %v5777, 1.0
      %v6034 = vmin.f32 %v5778, 1.0
      %v6035 = vmin.f32 %v5779, 1.0
      %v6036 = vmin.f32 %v5780, 1.0
      %v6037 = vmin.f32 %v5781, 1.0
      %v6038 = vmin.f32 %v5782, 1.0
      %v6039 = vmin.f32 %v5783, 1.0
      %v6040 = vmin.f32 %v5784, 1.0
      %v6041 = vmin.f32 %v5785, 1.0
      %v6042 = vmin.f32 %v5786, 1.0
      %v6043 = vmin.f32 %v5787, 1.0
      %v6044 = vmin.f32 %v5788, 1.0
      %v6045 = vmin.f32 %v5789, 1.0
      %v6046 = vmin.f32 %v5790, 1.0
      %v6047 = vmin.f32 %v5791, 1.0
      %v6048 = vmin.f32 %v5792, 1.0
      %v6049 = vmin.f32 %v5793, 1.0
      %v6050 = vmin.f32 %v5794, 1.0
      %v6051 = vmin.f32 %v5795, 1.0
      %v6052 = vmin.f32 %v5796, 1.0
      %v6053 = vmin.f32 %v5797, 1.0
      %v6054 = vmin.f32 %v5798, 1.0
      %v6055 = vmin.f32 %v5799, 1.0
      %v6056 = vmin.f32 %v5800, 1.0
      %v6057 = vmin.f32 %v5801, 1.0
      %v6058 = vmin.f32 %v5802, 1.0
      %v6059 = vmin.f32 %v5803, 1.0
      %v6060 = vmin.f32 %v5804, 1.0
      %v6061 = vmin.f32 %v5805, 1.0
      %v6062 = vmin.f32 %v5806, 1.0
      %v6063 = vmin.f32 %v5807, 1.0
      %v6064 = vmin.f32 %v5808, 1.0
      %v6065 = vmin.f32 %v5809, 1.0
      %v6066 = vmin.f32 %v5810, 1.0
      %v6067 = vmin.f32 %v5811, 1.0
      %v6068 = vmin.f32 %v5812, 1.0
      %v6069 = vmin.f32 %v5813, 1.0
      %v6070 = vmin.f32 %v5814, 1.0
      %v6071 = vmin.f32 %v5815, 1.0
      %v6072 = vmin.f32 %v5816, 1.0
      %v6073 = vmin.f32 %v5817, 1.0
      %v6074 = vmin.f32 %v5818, 1.0
      %v6075 = vmin.f32 %v5819, 1.0
      %v6076 = vmin.f32 %v5820, 1.0
      %v6077 = vmin.f32 %v5821, 1.0
      %v6078 = vmin.f32 %v5822, 1.0
      %v6079 = vmin.f32 %v5823, 1.0
      %v6080 = vmin.f32 %v5824, 1.0
      %v6081 = vmin.f32 %v5825, 1.0
      %v6082 = vmin.f32 %v5826, 1.0
      %v6083 = vmin.f32 %v5827, 1.0
      %v6084 = vmin.f32 %v5828, 1.0
      %v6085 = vmin.f32 %v5829, 1.0
      %v6086 = vmin.f32 %v5830, 1.0
      %v6087 = vmin.f32 %v5831, 1.0
      %v6088 = vmin.f32 %v5832, 1.0
      %v6089 = vmin.f32 %v5833, 1.0
      %v6090 = vmin.f32 %v5834, 1.0
      %v6091 = vmin.f32 %v5835, 1.0
      %v6092 = vmin.f32 %v5836, 1.0
      %v6093 = vmin.f32 %v5837, 1.0
      %v6094 = vmin.f32 %v5838, 1.0
      %v6095 = vmin.f32 %v5839, 1.0
      %v6096 = vmin.f32 %v5840, 1.0
      %v6097 = vmin.f32 %v5841, 1.0
      %v6098 = vmin.f32 %v5842, 1.0
      %v6099 = vmin.f32 %v5843, 1.0
      %v6100 = vmin.f32 %v5844, 1.0
      %v6101 = vmin.f32 %v5845, 1.0
      %v6102 = vmin.f32 %v5846, 1.0
      %v6103 = vmin.f32 %v5847, 1.0
      %v6104 = vmin.f32 %v5848, 1.0
      %v6105 = vmin.f32 %v5849, 1.0
      %v6106 = vmin.f32 %v5850, 1.0
      %v6107 = vmin.f32 %v5851, 1.0
      %v6108 = vmin.f32 %v5852, 1.0
      %v6109 = vmin.f32 %v5853, 1.0
      %v6110 = vmin.f32 %v5854, 1.0
      %v6111 = vmin.f32 %v5855, 1.0
      %v6112 = vmin.f32 %v5856, 1.0
      %v6113 = vmin.f32 %v5857, 1.0
      %v6114 = vmin.f32 %v5858, 1.0
      %v6115 = vmin.f32 %v5859, 1.0
      %v6116 = vmin.f32 %v5860, 1.0
      %v6117 = vmin.f32 %v5861, 1.0
      %v6118 = vmin.f32 %v5862, 1.0
      %v6119 = vmin.f32 %v5863, 1.0
      %v6120 = vmin.f32 %v5864, 1.0
      %v6121 = vmin.f32 %v5865, 1.0
      %v6122 = vmin.f32 %v5866, 1.0
      %v6123 = vmin.f32 %v5867, 1.0
      %v6124 = vmin.f32 %v5868, 1.0
      %v6125 = vmin.f32 %v5869, 1.0
      %v6126 = vmin.f32 %v5870, 1.0
      %v6127 = vmin.f32 %v5871, 1.0
      %v6128 = vmin.f32 %v5872, 1.0
      %v6129 = vmin.f32 %v5873, 1.0
      %v6130 = vmin.f32 %v5874, 1.0
      %v6131 = vmin.f32 %v5875, 1.0
      %v6132 = vmin.f32 %v5876, 1.0
      %v6133 = vmin.f32 %v5877, 1.0
      %v6134 = vmin.f32 %v5878, 1.0
      %v6135 = vmin.f32 %v5879, 1.0
      %v6136 = vmin.f32 %v5880, 1.0
      %v6137 = vmin.f32 %v5881, 1.0
      %v6138 = vmin.f32 %v5882, 1.0
      %v6139 = vmin.f32 %v5883, 1.0
      %v6140 = vmin.f32 %v5884, 1.0
      %v6141 = vmin.f32 %v5885, 1.0
      %v6142 = vmin.f32 %v5886, 1.0
      %v6143 = vmin.f32 %v5887, 1.0
      %v6144 = vmin.f32 %v5888, 1.0
      %v6145 = vmin.f32 %v5889, 1.0
      %v6146 = vmin.f32 %v5890, 1.0
      %v6147 = vmin.f32 %v5891, 1.0
      %v6148 = vmin.f32 %v5892, 1.0
      %v6149 = vmin.f32 %v5893, 1.0
      %v6150 = vmin.f32 %v5894, 1.0
      %v6151 = vmin.f32 %v5895, 1.0
      %v6152 = vmin.f32 %v5896, 1.0
      %v6153 = vmin.f32 %v5897, 1.0
      %v6154 = vmin.f32 %v5898, 1.0
      %v6155 = vmin.f32 %v5899, 1.0
      %v6156 = vmin.f32 %v5900, 1.0
      %v6157 = vmin.f32 %v5901, 1.0
      %v6158 = vmin.f32 %v5902, 1.0
      %v6159 = vmin.f32 %v5903, 1.0
      %v6160 = vmin.f32 %v5904, 1.0
      %v6161 = vmin.f32 %v5905, 1.0
      %v6162 = vmin.f32 %v5906, 1.0
      %v6163 = vmin.f32 %v5907, 1.0
      %vm6164 = vcmask 64512
      %6165 = vst.msk [vmem:[%s280] sm:$0xff] %vm6164, %v5908
      %6166 = vst.msk [vmem:[%s280 + $0x8] sm:$0xff] %vm6164, %v5909
      %6167 = vst.msk [vmem:[%s280 + $0x10] sm:$0xff] %vm6164, %v5910
      %6168 = vst.msk [vmem:[%s280 + $0x18] sm:$0xff] %vm6164, %v5911
      %6169 = vst.msk [vmem:[%s280 + $0x20] sm:$0xff] %vm6164, %v5912
      %6170 = vst.msk [vmem:[%s280 + $0x28] sm:$0xff] %vm6164, %v5913
      %6171 = vst.msk [vmem:[%s280 + $0x30] sm:$0xff] %vm6164, %v5914
      %6172 = vst.msk [vmem:[%s280 + $0x38] sm:$0xff] %vm6164, %v5915
      %6173 = vst.msk [vmem:[%s280 + $0x40] sm:$0xff] %vm6164, %v5916
      %6174 = vst.msk [vmem:[%s280 + $0x48] sm:$0xff] %vm6164, %v5917
      %6175 = vst.msk [vmem:[%s280 + $0x50] sm:$0xff] %vm6164, %v5918
      %6176 = vst.msk [vmem:[%s280 + $0x58] sm:$0xff] %vm6164, %v5919
      %6177 = vst.msk [vmem:[%s280 + $0x60] sm:$0xff] %vm6164, %v5920
      %6178 = vst.msk [vmem:[%s280 + $0x68] sm:$0xff] %vm6164, %v5921
      %6179 = vst.msk [vmem:[%s280 + $0x70] sm:$0xff] %vm6164, %v5922
      %6180 = vst.msk [vmem:[%s280 + $0x78] sm:$0xff] %vm6164, %v5923
      %6181 = vst.msk [vmem:[%s280 + $0x80] sm:$0xff] %vm6164, %v5924
      %6182 = vst.msk [vmem:[%s280 + $0x88] sm:$0xff] %vm6164, %v5925
      %6183 = vst.msk [vmem:[%s280 + $0x90] sm:$0xff] %vm6164, %v5926
      %6184 = vst.msk [vmem:[%s280 + $0x98] sm:$0xff] %vm6164, %v5927
      %6185 = vst.msk [vmem:[%s280 + $0xa0] sm:$0xff] %vm6164, %v5928
      %6186 = vst.msk [vmem:[%s280 + $0xa8] sm:$0xff] %vm6164, %v5929
      %6187 = vst.msk [vmem:[%s280 + $0xb0] sm:$0xff] %vm6164, %v5930
      %6188 = vst.msk [vmem:[%s280 + $0xb8] sm:$0xff] %vm6164, %v5931
      %6189 = vst.msk [vmem:[%s280 + $0xc0] sm:$0xff] %vm6164, %v5932
      %6190 = vst.msk [vmem:[%s280 + $0xc8] sm:$0xff] %vm6164, %v5933
      %6191 = vst.msk [vmem:[%s280 + $0xd0] sm:$0xff] %vm6164, %v5934
      %6192 = vst.msk [vmem:[%s280 + $0xd8] sm:$0xff] %vm6164, %v5935
      %6193 = vst.msk [vmem:[%s280 + $0xe0] sm:$0xff] %vm6164, %v5936
      %6194 = vst.msk [vmem:[%s280 + $0xe8] sm:$0xff] %vm6164, %v5937
      %6195 = vst.msk [vmem:[%s280 + $0xf0] sm:$0xff] %vm6164, %v5938
      %6196 = vst.msk [vmem:[%s280 + $0xf8] sm:$0xff] %vm6164, %v5939
      %6197 = vst.msk [vmem:[%s280 + $0x100] sm:$0xff] %vm6164, %v5940
      %6198 = vst.msk [vmem:[%s280 + $0x108] sm:$0xff] %vm6164, %v5941
      %6199 = vst.msk [vmem:[%s280 + $0x110] sm:$0xff] %vm6164, %v5942
      %6200 = vst.msk [vmem:[%s280 + $0x118] sm:$0xff] %vm6164, %v5943
      %6201 = vst.msk [vmem:[%s280 + $0x120] sm:$0xff] %vm6164, %v5944
      %6202 = vst.msk [vmem:[%s280 + $0x128] sm:$0xff] %vm6164, %v5945
      %6203 = vst.msk [vmem:[%s280 + $0x130] sm:$0xff] %vm6164, %v5946
      %6204 = vst.msk [vmem:[%s280 + $0x138] sm:$0xff] %vm6164, %v5947
      %6205 = vst.msk [vmem:[%s280 + $0x140] sm:$0xff] %vm6164, %v5948
      %6206 = vst.msk [vmem:[%s280 + $0x148] sm:$0xff] %vm6164, %v5949
      %6207 = vst.msk [vmem:[%s280 + $0x150] sm:$0xff] %vm6164, %v5950
      %6208 = vst.msk [vmem:[%s280 + $0x158] sm:$0xff] %vm6164, %v5951
      %6209 = vst.msk [vmem:[%s280 + $0x160] sm:$0xff] %vm6164, %v5952
      %6210 = vst.msk [vmem:[%s280 + $0x168] sm:$0xff] %vm6164, %v5953
      %6211 = vst.msk [vmem:[%s280 + $0x170] sm:$0xff] %vm6164, %v5954
      %6212 = vst.msk [vmem:[%s280 + $0x178] sm:$0xff] %vm6164, %v5955
      %6213 = vst.msk [vmem:[%s280 + $0x180] sm:$0xff] %vm6164, %v5956
      %6214 = vst.msk [vmem:[%s280 + $0x188] sm:$0xff] %vm6164, %v5957
      %6215 = vst.msk [vmem:[%s280 + $0x190] sm:$0xff] %vm6164, %v5958
      %6216 = vst.msk [vmem:[%s280 + $0x198] sm:$0xff] %vm6164, %v5959
      %6217 = vst.msk [vmem:[%s280 + $0x1a0] sm:$0xff] %vm6164, %v5960
      %6218 = vst.msk [vmem:[%s280 + $0x1a8] sm:$0xff] %vm6164, %v5961
      %6219 = vst.msk [vmem:[%s280 + $0x1b0] sm:$0xff] %vm6164, %v5962
      %6220 = vst.msk [vmem:[%s280 + $0x1b8] sm:$0xff] %vm6164, %v5963
      %6221 = vst.msk [vmem:[%s280 + $0x1c0] sm:$0xff] %vm6164, %v5964
      %6222 = vst.msk [vmem:[%s280 + $0x1c8] sm:$0xff] %vm6164, %v5965
      %6223 = vst.msk [vmem:[%s280 + $0x1d0] sm:$0xff] %vm6164, %v5966
      %6224 = vst.msk [vmem:[%s280 + $0x1d8] sm:$0xff] %vm6164, %v5967
      %6225 = vst.msk [vmem:[%s280 + $0x1e0] sm:$0xff] %vm6164, %v5968
      %6226 = vst.msk [vmem:[%s280 + $0x1e8] sm:$0xff] %vm6164, %v5969
      %6227 = vst.msk [vmem:[%s280 + $0x1f0] sm:$0xff] %vm6164, %v5970
      %6228 = vst.msk [vmem:[%s280 + $0x1f8] sm:$0xff] %vm6164, %v5971
      %6229 = vst.msk [vmem:[%s280 + $0x200] sm:$0xff] %vm6164, %v5972
      %6230 = vst.msk [vmem:[%s280 + $0x208] sm:$0xff] %vm6164, %v5973
      %6231 = vst.msk [vmem:[%s280 + $0x210] sm:$0xff] %vm6164, %v5974
      %6232 = vst.msk [vmem:[%s280 + $0x218] sm:$0xff] %vm6164, %v5975
      %6233 = vst.msk [vmem:[%s280 + $0x220] sm:$0xff] %vm6164, %v5976
      %6234 = vst.msk [vmem:[%s280 + $0x228] sm:$0xff] %vm6164, %v5977
      %6235 = vst.msk [vmem:[%s280 + $0x230] sm:$0xff] %vm6164, %v5978
      %6236 = vst.msk [vmem:[%s280 + $0x238] sm:$0xff] %vm6164, %v5979
      %6237 = vst.msk [vmem:[%s280 + $0x240] sm:$0xff] %vm6164, %v5980
      %6238 = vst.msk [vmem:[%s280 + $0x248] sm:$0xff] %vm6164, %v5981
      %6239 = vst.msk [vmem:[%s280 + $0x250] sm:$0xff] %vm6164, %v5982
      %6240 = vst.msk [vmem:[%s280 + $0x258] sm:$0xff] %vm6164, %v5983
      %6241 = vst.msk [vmem:[%s280 + $0x260] sm:$0xff] %vm6164, %v5984
      %6242 = vst.msk [vmem:[%s280 + $0x268] sm:$0xff] %vm6164, %v5985
      %6243 = vst.msk [vmem:[%s280 + $0x270] sm:$0xff] %vm6164, %v5986
      %6244 = vst.msk [vmem:[%s280 + $0x278] sm:$0xff] %vm6164, %v5987
      %6245 = vst.msk [vmem:[%s280 + $0x280] sm:$0xff] %vm6164, %v5988
      %6246 = vst.msk [vmem:[%s280 + $0x288] sm:$0xff] %vm6164, %v5989
      %6247 = vst.msk [vmem:[%s280 + $0x290] sm:$0xff] %vm6164, %v5990
      %6248 = vst.msk [vmem:[%s280 + $0x298] sm:$0xff] %vm6164, %v5991
      %6249 = vst.msk [vmem:[%s280 + $0x2a0] sm:$0xff] %vm6164, %v5992
      %6250 = vst.msk [vmem:[%s280 + $0x2a8] sm:$0xff] %vm6164, %v5993
      %6251 = vst.msk [vmem:[%s280 + $0x2b0] sm:$0xff] %vm6164, %v5994
      %6252 = vst.msk [vmem:[%s280 + $0x2b8] sm:$0xff] %vm6164, %v5995
      %6253 = vst.msk [vmem:[%s280 + $0x2c0] sm:$0xff] %vm6164, %v5996
      %6254 = vst.msk [vmem:[%s280 + $0x2c8] sm:$0xff] %vm6164, %v5997
      %6255 = vst.msk [vmem:[%s280 + $0x2d0] sm:$0xff] %vm6164, %v5998
      %6256 = vst.msk [vmem:[%s280 + $0x2d8] sm:$0xff] %vm6164, %v5999
      %6257 = vst.msk [vmem:[%s280 + $0x2e0] sm:$0xff] %vm6164, %v6000
      %6258 = vst.msk [vmem:[%s280 + $0x2e8] sm:$0xff] %vm6164, %v6001
      %6259 = vst.msk [vmem:[%s280 + $0x2f0] sm:$0xff] %vm6164, %v6002
      %6260 = vst.msk [vmem:[%s280 + $0x2f8] sm:$0xff] %vm6164, %v6003
      %6261 = vst.msk [vmem:[%s280 + $0x300] sm:$0xff] %vm6164, %v6004
      %6262 = vst.msk [vmem:[%s280 + $0x308] sm:$0xff] %vm6164, %v6005
      %6263 = vst.msk [vmem:[%s280 + $0x310] sm:$0xff] %vm6164, %v6006
      %6264 = vst.msk [vmem:[%s280 + $0x318] sm:$0xff] %vm6164, %v6007
      %6265 = vst.msk [vmem:[%s280 + $0x320] sm:$0xff] %vm6164, %v6008
      %6266 = vst.msk [vmem:[%s280 + $0x328] sm:$0xff] %vm6164, %v6009
      %6267 = vst.msk [vmem:[%s280 + $0x330] sm:$0xff] %vm6164, %v6010
      %6268 = vst.msk [vmem:[%s280 + $0x338] sm:$0xff] %vm6164, %v6011
      %6269 = vst.msk [vmem:[%s280 + $0x340] sm:$0xff] %vm6164, %v6012
      %6270 = vst.msk [vmem:[%s280 + $0x348] sm:$0xff] %vm6164, %v6013
      %6271 = vst.msk [vmem:[%s280 + $0x350] sm:$0xff] %vm6164, %v6014
      %6272 = vst.msk [vmem:[%s280 + $0x358] sm:$0xff] %vm6164, %v6015
      %6273 = vst.msk [vmem:[%s280 + $0x360] sm:$0xff] %vm6164, %v6016
      %6274 = vst.msk [vmem:[%s280 + $0x368] sm:$0xff] %vm6164, %v6017
      %6275 = vst.msk [vmem:[%s280 + $0x370] sm:$0xff] %vm6164, %v6018
      %6276 = vst.msk [vmem:[%s280 + $0x378] sm:$0xff] %vm6164, %v6019
      %6277 = vst.msk [vmem:[%s280 + $0x380] sm:$0xff] %vm6164, %v6020
      %6278 = vst.msk [vmem:[%s280 + $0x388] sm:$0xff] %vm6164, %v6021
      %6279 = vst.msk [vmem:[%s280 + $0x390] sm:$0xff] %vm6164, %v6022
      %6280 = vst.msk [vmem:[%s280 + $0x398] sm:$0xff] %vm6164, %v6023
      %6281 = vst.msk [vmem:[%s280 + $0x3a0] sm:$0xff] %vm6164, %v6024
      %6282 = vst.msk [vmem:[%s280 + $0x3a8] sm:$0xff] %vm6164, %v6025
      %6283 = vst.msk [vmem:[%s280 + $0x3b0] sm:$0xff] %vm6164, %v6026
      %6284 = vst.msk [vmem:[%s280 + $0x3b8] sm:$0xff] %vm6164, %v6027
      %6285 = vst.msk [vmem:[%s280 + $0x3c0] sm:$0xff] %vm6164, %v6028
      %6286 = vst.msk [vmem:[%s280 + $0x3c8] sm:$0xff] %vm6164, %v6029
      %6287 = vst.msk [vmem:[%s280 + $0x3d0] sm:$0xff] %vm6164, %v6030
      %6288 = vst.msk [vmem:[%s280 + $0x3d8] sm:$0xff] %vm6164, %v6031
      %6289 = vst.msk [vmem:[%s280 + $0x3e0] sm:$0xff] %vm6164, %v6032
      %6290 = vst.msk [vmem:[%s280 + $0x3e8] sm:$0xff] %vm6164, %v6033
      %6291 = vst.msk [vmem:[%s280 + $0x3f0] sm:$0xff] %vm6164, %v6034
      %6292 = vst.msk [vmem:[%s280 + $0x3f8] sm:$0xff] %vm6164, %v6035
      %6293 = vst.msk [vmem:[%s280 + $0x400] sm:$0xff] %vm6164, %v6036
      %6294 = vst.msk [vmem:[%s280 + $0x408] sm:$0xff] %vm6164, %v6037
      %6295 = vst.msk [vmem:[%s280 + $0x410] sm:$0xff] %vm6164, %v6038
      %6296 = vst.msk [vmem:[%s280 + $0x418] sm:$0xff] %vm6164, %v6039
      %6297 = vst.msk [vmem:[%s280 + $0x420] sm:$0xff] %vm6164, %v6040
      %6298 = vst.msk [vmem:[%s280 + $0x428] sm:$0xff] %vm6164, %v6041
      %6299 = vst.msk [vmem:[%s280 + $0x430] sm:$0xff] %vm6164, %v6042
      %6300 = vst.msk [vmem:[%s280 + $0x438] sm:$0xff] %vm6164, %v6043
      %6301 = vst.msk [vmem:[%s280 + $0x440] sm:$0xff] %vm6164, %v6044
      %6302 = vst.msk [vmem:[%s280 + $0x448] sm:$0xff] %vm6164, %v6045
      %6303 = vst.msk [vmem:[%s280 + $0x450] sm:$0xff] %vm6164, %v6046
      %6304 = vst.msk [vmem:[%s280 + $0x458] sm:$0xff] %vm6164, %v6047
      %6305 = vst.msk [vmem:[%s280 + $0x460] sm:$0xff] %vm6164, %v6048
      %6306 = vst.msk [vmem:[%s280 + $0x468] sm:$0xff] %vm6164, %v6049
      %6307 = vst.msk [vmem:[%s280 + $0x470] sm:$0xff] %vm6164, %v6050
      %6308 = vst.msk [vmem:[%s280 + $0x478] sm:$0xff] %vm6164, %v6051
      %6309 = vst.msk [vmem:[%s280 + $0x480] sm:$0xff] %vm6164, %v6052
      %6310 = vst.msk [vmem:[%s280 + $0x488] sm:$0xff] %vm6164, %v6053
      %6311 = vst.msk [vmem:[%s280 + $0x490] sm:$0xff] %vm6164, %v6054
      %6312 = vst.msk [vmem:[%s280 + $0x498] sm:$0xff] %vm6164, %v6055
      %6313 = vst.msk [vmem:[%s280 + $0x4a0] sm:$0xff] %vm6164, %v6056
      %6314 = vst.msk [vmem:[%s280 + $0x4a8] sm:$0xff] %vm6164, %v6057
      %6315 = vst.msk [vmem:[%s280 + $0x4b0] sm:$0xff] %vm6164, %v6058
      %6316 = vst.msk [vmem:[%s280 + $0x4b8] sm:$0xff] %vm6164, %v6059
      %6317 = vst.msk [vmem:[%s280 + $0x4c0] sm:$0xff] %vm6164, %v6060
      %6318 = vst.msk [vmem:[%s280 + $0x4c8] sm:$0xff] %vm6164, %v6061
      %6319 = vst.msk [vmem:[%s280 + $0x4d0] sm:$0xff] %vm6164, %v6062
      %6320 = vst.msk [vmem:[%s280 + $0x4d8] sm:$0xff] %vm6164, %v6063
      %6321 = vst.msk [vmem:[%s280 + $0x4e0] sm:$0xff] %vm6164, %v6064
      %6322 = vst.msk [vmem:[%s280 + $0x4e8] sm:$0xff] %vm6164, %v6065
      %6323 = vst.msk [vmem:[%s280 + $0x4f0] sm:$0xff] %vm6164, %v6066
      %6324 = vst.msk [vmem:[%s280 + $0x4f8] sm:$0xff] %vm6164, %v6067
      %6325 = vst.msk [vmem:[%s280 + $0x500] sm:$0xff] %vm6164, %v6068
      %6326 = vst.msk [vmem:[%s280 + $0x508] sm:$0xff] %vm6164, %v6069
      %6327 = vst.msk [vmem:[%s280 + $0x510] sm:$0xff] %vm6164, %v6070
      %6328 = vst.msk [vmem:[%s280 + $0x518] sm:$0xff] %vm6164, %v6071
      %6329 = vst.msk [vmem:[%s280 + $0x520] sm:$0xff] %vm6164, %v6072
      %6330 = vst.msk [vmem:[%s280 + $0x528] sm:$0xff] %vm6164, %v6073
      %6331 = vst.msk [vmem:[%s280 + $0x530] sm:$0xff] %vm6164, %v6074
      %6332 = vst.msk [vmem:[%s280 + $0x538] sm:$0xff] %vm6164, %v6075
      %6333 = vst.msk [vmem:[%s280 + $0x540] sm:$0xff] %vm6164, %v6076
      %6334 = vst.msk [vmem:[%s280 + $0x548] sm:$0xff] %vm6164, %v6077
      %6335 = vst.msk [vmem:[%s280 + $0x550] sm:$0xff] %vm6164, %v6078
      %6336 = vst.msk [vmem:[%s280 + $0x558] sm:$0xff] %vm6164, %v6079
      %6337 = vst.msk [vmem:[%s280 + $0x560] sm:$0xff] %vm6164, %v6080
      %6338 = vst.msk [vmem:[%s280 + $0x568] sm:$0xff] %vm6164, %v6081
      %6339 = vst.msk [vmem:[%s280 + $0x570] sm:$0xff] %vm6164, %v6082
      %6340 = vst.msk [vmem:[%s280 + $0x578] sm:$0xff] %vm6164, %v6083
      %6341 = vst.msk [vmem:[%s280 + $0x580] sm:$0xff] %vm6164, %v6084
      %6342 = vst.msk [vmem:[%s280 + $0x588] sm:$0xff] %vm6164, %v6085
      %6343 = vst.msk [vmem:[%s280 + $0x590] sm:$0xff] %vm6164, %v6086
      %6344 = vst.msk [vmem:[%s280 + $0x598] sm:$0xff] %vm6164, %v6087
      %6345 = vst.msk [vmem:[%s280 + $0x5a0] sm:$0xff] %vm6164, %v6088
      %6346 = vst.msk [vmem:[%s280 + $0x5a8] sm:$0xff] %vm6164, %v6089
      %6347 = vst.msk [vmem:[%s280 + $0x5b0] sm:$0xff] %vm6164, %v6090
      %6348 = vst.msk [vmem:[%s280 + $0x5b8] sm:$0xff] %vm6164, %v6091
      %6349 = vst.msk [vmem:[%s280 + $0x5c0] sm:$0xff] %vm6164, %v6092
      %6350 = vst.msk [vmem:[%s280 + $0x5c8] sm:$0xff] %vm6164, %v6093
      %6351 = vst.msk [vmem:[%s280 + $0x5d0] sm:$0xff] %vm6164, %v6094
      %6352 = vst.msk [vmem:[%s280 + $0x5d8] sm:$0xff] %vm6164, %v6095
      %6353 = vst.msk [vmem:[%s280 + $0x5e0] sm:$0xff] %vm6164, %v6096
      %6354 = vst.msk [vmem:[%s280 + $0x5e8] sm:$0xff] %vm6164, %v6097
      %6355 = vst.msk [vmem:[%s280 + $0x5f0] sm:$0xff] %vm6164, %v6098
      %6356 = vst.msk [vmem:[%s280 + $0x5f8] sm:$0xff] %vm6164, %v6099
      %6357 = vst.msk [vmem:[%s280 + $0x600] sm:$0xff] %vm6164, %v6100
      %6358 = vst.msk [vmem:[%s280 + $0x608] sm:$0xff] %vm6164, %v6101
      %6359 = vst.msk [vmem:[%s280 + $0x610] sm:$0xff] %vm6164, %v6102
      %6360 = vst.msk [vmem:[%s280 + $0x618] sm:$0xff] %vm6164, %v6103
      %6361 = vst.msk [vmem:[%s280 + $0x620] sm:$0xff] %vm6164, %v6104
      %6362 = vst.msk [vmem:[%s280 + $0x628] sm:$0xff] %vm6164, %v6105
      %6363 = vst.msk [vmem:[%s280 + $0x630] sm:$0xff] %vm6164, %v6106
      %6364 = vst.msk [vmem:[%s280 + $0x638] sm:$0xff] %vm6164, %v6107
      %6365 = vst.msk [vmem:[%s280 + $0x640] sm:$0xff] %vm6164, %v6108
      %6366 = vst.msk [vmem:[%s280 + $0x648] sm:$0xff] %vm6164, %v6109
      %6367 = vst.msk [vmem:[%s280 + $0x650] sm:$0xff] %vm6164, %v6110
      %6368 = vst.msk [vmem:[%s280 + $0x658] sm:$0xff] %vm6164, %v6111
      %6369 = vst.msk [vmem:[%s280 + $0x660] sm:$0xff] %vm6164, %v6112
      %6370 = vst.msk [vmem:[%s280 + $0x668] sm:$0xff] %vm6164, %v6113
      %6371 = vst.msk [vmem:[%s280 + $0x670] sm:$0xff] %vm6164, %v6114
      %6372 = vst.msk [vmem:[%s280 + $0x678] sm:$0xff] %vm6164, %v6115
      %6373 = vst.msk [vmem:[%s280 + $0x680] sm:$0xff] %vm6164, %v6116
      %6374 = vst.msk [vmem:[%s280 + $0x688] sm:$0xff] %vm6164, %v6117
      %6375 = vst.msk [vmem:[%s280 + $0x690] sm:$0xff] %vm6164, %v6118
      %6376 = vst.msk [vmem:[%s280 + $0x698] sm:$0xff] %vm6164, %v6119
      %6377 = vst.msk [vmem:[%s280 + $0x6a0] sm:$0xff] %vm6164, %v6120
      %6378 = vst.msk [vmem:[%s280 + $0x6a8] sm:$0xff] %vm6164, %v6121
      %6379 = vst.msk [vmem:[%s280 + $0x6b0] sm:$0xff] %vm6164, %v6122
      %6380 = vst.msk [vmem:[%s280 + $0x6b8] sm:$0xff] %vm6164, %v6123
      %6381 = vst.msk [vmem:[%s280 + $0x6c0] sm:$0xff] %vm6164, %v6124
      %6382 = vst.msk [vmem:[%s280 + $0x6c8] sm:$0xff] %vm6164, %v6125
      %6383 = vst.msk [vmem:[%s280 + $0x6d0] sm:$0xff] %vm6164, %v6126
      %6384 = vst.msk [vmem:[%s280 + $0x6d8] sm:$0xff] %vm6164, %v6127
      %6385 = vst.msk [vmem:[%s280 + $0x6e0] sm:$0xff] %vm6164, %v6128
      %6386 = vst.msk [vmem:[%s280 + $0x6e8] sm:$0xff] %vm6164, %v6129
      %6387 = vst.msk [vmem:[%s280 + $0x6f0] sm:$0xff] %vm6164, %v6130
      %6388 = vst.msk [vmem:[%s280 + $0x6f8] sm:$0xff] %vm6164, %v6131
      %6389 = vst.msk [vmem:[%s280 + $0x700] sm:$0xff] %vm6164, %v6132
      %6390 = vst.msk [vmem:[%s280 + $0x708] sm:$0xff] %vm6164, %v6133
      %6391 = vst.msk [vmem:[%s280 + $0x710] sm:$0xff] %vm6164, %v6134
      %6392 = vst.msk [vmem:[%s280 + $0x718] sm:$0xff] %vm6164, %v6135
      %6393 = vst.msk [vmem:[%s280 + $0x720] sm:$0xff] %vm6164, %v6136
      %6394 = vst.msk [vmem:[%s280 + $0x728] sm:$0xff] %vm6164, %v6137
      %6395 = vst.msk [vmem:[%s280 + $0x730] sm:$0xff] %vm6164, %v6138
      %6396 = vst.msk [vmem:[%s280 + $0x738] sm:$0xff] %vm6164, %v6139
      %6397 = vst.msk [vmem:[%s280 + $0x740] sm:$0xff] %vm6164, %v6140
      %6398 = vst.msk [vmem:[%s280 + $0x748] sm:$0xff] %vm6164, %v6141
      %6399 = vst.msk [vmem:[%s280 + $0x750] sm:$0xff] %vm6164, %v6142
      %6400 = vst.msk [vmem:[%s280 + $0x758] sm:$0xff] %vm6164, %v6143
      %6401 = vst.msk [vmem:[%s280 + $0x760] sm:$0xff] %vm6164, %v6144
      %6402 = vst.msk [vmem:[%s280 + $0x768] sm:$0xff] %vm6164, %v6145
      %6403 = vst.msk [vmem:[%s280 + $0x770] sm:$0xff] %vm6164, %v6146
      %6404 = vst.msk [vmem:[%s280 + $0x778] sm:$0xff] %vm6164, %v6147
      %6405 = vst.msk [vmem:[%s280 + $0x780] sm:$0xff] %vm6164, %v6148
      %6406 = vst.msk [vmem:[%s280 + $0x788] sm:$0xff] %vm6164, %v6149
      %6407 = vst.msk [vmem:[%s280 + $0x790] sm:$0xff] %vm6164, %v6150
      %6408 = vst.msk [vmem:[%s280 + $0x798] sm:$0xff] %vm6164, %v6151
      %6409 = vst.msk [vmem:[%s280 + $0x7a0] sm:$0xff] %vm6164, %v6152
      %6410 = vst.msk [vmem:[%s280 + $0x7a8] sm:$0xff] %vm6164, %v6153
      %6411 = vst.msk [vmem:[%s280 + $0x7b0] sm:$0xff] %vm6164, %v6154
      %6412 = vst.msk [vmem:[%s280 + $0x7b8] sm:$0xff] %vm6164, %v6155
      %6413 = vst.msk [vmem:[%s280 + $0x7c0] sm:$0xff] %vm6164, %v6156
      %6414 = vst.msk [vmem:[%s280 + $0x7c8] sm:$0xff] %vm6164, %v6157
      %6415 = vst.msk [vmem:[%s280 + $0x7d0] sm:$0xff] %vm6164, %v6158
      %6416 = vst.msk [vmem:[%s280 + $0x7d8] sm:$0xff] %vm6164, %v6159
      %6417 = vst.msk [vmem:[%s280 + $0x7e0] sm:$0xff] %vm6164, %v6160
      %6418 = vst.msk [vmem:[%s280 + $0x7e8] sm:$0xff] %vm6164, %v6161
      %6419 = vst.msk [vmem:[%s280 + $0x7f0] sm:$0xff] %vm6164, %v6162
      %6420 = vst.msk [vmem:[%s280 + $0x7f8] sm:$0xff] %vm6164, %v6163
      %s6421 = smul.u32 256, %s18
      %p6422 = scmp.lt.s32.totalorder %s6421, 511
      %s6423 = scalar_select %p6422, %s6421, 511
      %s6424 = smul.addr %s6423, 8
      %s6425 = scalar_lea.vmem %s7, %s6424
      // Predicated region
      $region49: #{pixel_pred.1} parent=47 // pred_check
        %p6426 = pneg %p188
      $region50: #{pixel_pred.1} parent=47 // pred_check_branch
        %6428 = sbr.rel (%p6426) target = $region52
      $region51: #{pixel_pred.1} parent=47 // pred_region
        %s6429 = smul.u32 256, %s18
      $region52: #{pixel_pred.1} parent=47 // pred_fallthru
        _
    $region48: #{pixel_pred.1} parent=5 // pred_fallthru
      _
    %p6430 = scmp.le.s32.totalorder 2, %s13
    // Predicated region
    $region53: #{pixel_pred.1} parent=5 // pred_check
      %p6431 = pneg %p6430
    $region54: #{pixel_pred.1} parent=5 // pred_check_branch
      %6433 = sbr.rel (%p6431) target = $region56
    $region55: #{pixel_pred.1} parent=5 // pred_region
      %s6434 = ssub.s32 %s13, 2
      // Predicated region
      $region57: #{pixel_pred.1} parent=55 // pred_check
        %p6435 = pneg %p194
      $region58: #{pixel_pred.1} parent=55 // pred_check_branch
        %6437 = sbr.rel (%p6435) target = $region60
      $region59: #{pixel_pred.1} parent=55 // pred_region
        %s6438 = smul.u32 256, %s19
        %p6439 = scmp.lt.s32.totalorder %s6438, 511
        %s6440 = scalar_select %p6439, %s6438, 511
        %s6441 = smul.addr %s6440, 8
        %s6442 = scalar_lea.vmem %s7, %s6441
      $region60: #{pixel_pred.1} parent=55 // pred_fallthru
        _
    $region56: #{pixel_pred.1} parent=5 // pred_fallthru
      _
  $region6: #{pixel_pred.1} parent=0 // loop_footer
    %s17 = sadd.s32 1, %s13
  $region7: #{pixel_pred.1} parent=0 // loop_footer_branch
    %12 = sbr.rel target = $region3
  $region8: #{pixel_pred.1} parent=0 // loop_exit
    _

</llo_original>
